<compile_context>
chip_gen: v7x
topology: tpu7x:2x2x1
jax: 0.10.0
libtpu: 0.0.40
codegen_flags: <defaults>
</compile_context>

<pallas_src>
import functools

import jax
import jax.numpy as jnp
from jax import lax
from jax.experimental import pallas as pl
from jax.experimental.pallas import tpu as pltpu


# ----------------------------- in-kernel helpers -----------------------------

def _layernorm(x, g, b, eps):
    x = x.astype(jnp.float32)
    m = jnp.mean(x, axis=-1, keepdims=True)
    v = jnp.mean((x - m) ** 2, axis=-1, keepdims=True)
    return (x - m) * jax.lax.rsqrt(v + eps) * g + b


# ------------------------------ fused ViT kernel ------------------------------

def _vit_kernel(
    patches_ref, patch_w_ref, base_ref,
    ln1_g_ref, ln1_b_ref, qkv_w_ref, qkv_b_ref, proj_w_ref, proj_b_ref,
    ln2_g_ref, ln2_b_ref, fc1_w_ref, fc1_b_ref, fc2_w_ref, fc2_b_ref,
    norm_g_ref, norm_b_ref, hln_g_ref, hln_b_ref, head_w_ref, head_b_ref,
    out_ref, h_ref,
    *, num_heads, n_tok, head_dim, scale, eps):
    d = pl.program_id(1)
    E = h_ref.shape[1]

    # --- token init (patch embedding + cls + pos), first depth step only ---
    @pl.when(d == 0)
    def _init():
        # patches are zero-padded into token layout (row 0 = cls slot, tail rows = pad),
        # so a single aligned matmul + precomputed base (cls + pos + conv bias) builds h.
        tok = jnp.dot(patches_ref[0].astype(jnp.bfloat16), patch_w_ref[...],
                      preferred_element_type=jnp.float32)
        h_ref[...] = base_ref[...] + tok

    h = h_ref[...]                                                    # (N_pad, E) f32

    # --- attention branch (pre-LN) ---
    hn = _layernorm(h, ln1_g_ref[0], ln1_b_ref[0], eps)
    qkv = jnp.dot(hn.astype(jnp.bfloat16), qkv_w_ref[0],
                  preferred_element_type=jnp.float32) + qkv_b_ref[0]  # (N_pad, 3E)
    pw = proj_w_ref[0]                                                # (E, E) bf16
    proj = jnp.zeros_like(h)
    for hh in range(num_heads):
        lo = hh * head_dim
        hi = lo + head_dim
        q = qkv[:, lo:hi].astype(jnp.bfloat16)                        # (N_pad, Dh)
        k = qkv[:n_tok, E + lo:E + hi].astype(jnp.bfloat16)           # (N, Dh)
        v = qkv[:n_tok, 2 * E + lo:2 * E + hi].astype(jnp.bfloat16)   # (N, Dh)
        # q @ k^T without an explicit transpose (contract last axes on the MXU).
        s = lax.dot_general(q, k, (((1,), (1,)), ((), ())),
                            preferred_element_type=jnp.float32) * scale
        s = s - jnp.max(s, axis=-1, keepdims=True)
        p = jnp.exp(s)
        p = p * pl.reciprocal(jnp.sum(p, axis=-1, keepdims=True), approx=True)
        o_h = jnp.dot(p.astype(jnp.bfloat16), v,
                      preferred_element_type=jnp.float32)             # (N_pad, Dh)
        # Fold the output projection into the head loop: attn @ Wp == sum_h o_h @ Wp[h].
        proj = proj + jnp.dot(o_h.astype(jnp.bfloat16), pw[lo:hi, :],
                              preferred_element_type=jnp.float32)
    h = h + proj + proj_b_ref[0]                                      # residual in-kernel

    # --- MLP branch (pre-LN) ---
    hn2 = _layernorm(h, ln2_g_ref[0], ln2_b_ref[0], eps)
    f1 = jnp.dot(hn2.astype(jnp.bfloat16), fc1_w_ref[0],
                 preferred_element_type=jnp.float32) + fc1_b_ref[0]
    # TODO(synk): torch.nn.GELU default is exact erf; tanh approximation used for TPU lowering.
    f1 = jax.nn.gelu(f1, approximate=True)
    f2 = jnp.dot(f1.astype(jnp.bfloat16), fc2_w_ref[0],
                 preferred_element_type=jnp.float32) + fc2_b_ref[0]
    h = h + f2                                                        # residual in-kernel
    h_ref[...] = h

    # --- final ViT norm + classification head, last depth step only ---
    @pl.when(d == pl.num_programs(1) - 1)
    def _head():
        hf = _layernorm(h, norm_g_ref[...], norm_b_ref[...], eps)
        pooled = jnp.mean(hf[:n_tok, :], axis=0, keepdims=True)       # (1, E), real tokens only
        pooled = _layernorm(pooled, hln_g_ref[...], hln_b_ref[...], eps)
        logits = jnp.dot(pooled.astype(jnp.bfloat16), head_w_ref[...],
                         preferred_element_type=jnp.float32) + head_b_ref[...]
        out_ref[0] = logits.astype(out_ref.dtype)


# --------------------------------- parameters ---------------------------------

def init_params(key, *, in_channels, image_size, patch_size, embed_dim,
                depth, num_heads, ff_dim, num_classes):
    num_patches = (image_size // patch_size) ** 2
    keys = iter(jax.random.split(key, 16))

    def nrm(shape, dtype=jnp.float32, scale=0.02):
        return (scale * jax.random.normal(next(keys), shape, jnp.float32)).astype(dtype)

    E, F, D = embed_dim, ff_dim, depth
    params = {
        # Conv2d(in, E, k=ps, s=ps) flattened as (C*ps*ps, E) in (c, kh, kw) order
        "patch_w": nrm((in_channels * patch_size * patch_size, E), jnp.bfloat16),
        "patch_b": jnp.zeros((E,), jnp.float32),
        "cls_token": nrm((1, E)),
        "pos_emb": nrm((num_patches + 1, E)),
        # per-layer weights stacked on a leading depth axis (streamed per grid step)
        "ln1_g": jnp.ones((D, 1, E), jnp.float32),
        "ln1_b": jnp.zeros((D, 1, E), jnp.float32),
        "qkv_w": nrm((D, E, 3 * E), jnp.bfloat16),
        "qkv_b": jnp.zeros((D, 1, 3 * E), jnp.float32),
        "proj_w": nrm((D, E, E), jnp.bfloat16),
        "proj_b": jnp.zeros((D, 1, E), jnp.float32),
        "ln2_g": jnp.ones((D, 1, E), jnp.float32),
        "ln2_b": jnp.zeros((D, 1, E), jnp.float32),
        "fc1_w": nrm((D, E, F), jnp.bfloat16),
        "fc1_b": jnp.zeros((D, 1, F), jnp.float32),
        "fc2_w": nrm((D, F, E), jnp.bfloat16),
        "fc2_b": jnp.zeros((D, 1, E), jnp.float32),
        # final norm + classification head
        "norm_g": jnp.ones((1, E), jnp.float32),
        "norm_b": jnp.zeros((1, E), jnp.float32),
        "head_ln_g": jnp.ones((1, E), jnp.float32),
        "head_ln_b": jnp.zeros((1, E), jnp.float32),
        "head_w": nrm((E, num_classes), jnp.bfloat16),
        "head_b": jnp.zeros((1, num_classes), jnp.float32),
    }
    return params


# ----------------------------------- forward -----------------------------------

def forward(params, x, *, patch_size, num_heads):
    """x: (B, C, H, W) float32 (NCHW, like PyTorch). Returns logits (B, num_classes)."""
    B, C, H, W = x.shape
    ps = patch_size
    nH, nW = H // ps, W // ps
    P = nH * nW
    E = params["patch_w"].shape[1]
    N = P + 1
    N_pad = ((N + 7) // 8) * 8            # round tokens up to a sublane multiple
    depth = params["qkv_w"].shape[0]
    head_dim = E // num_heads
    Fdim = params["fc1_w"].shape[-1]
    num_classes = params["head_w"].shape[1]
    Cpp = C * ps * ps

    # --- unfold conv(k=s=ps) patches, zero-padded into token layout (row 0 = cls slot) ---
    patches = (
        x.reshape(B, C, nH, ps, nW, ps)
         .transpose(0, 2, 4, 1, 3, 5)
         .reshape(B, P, Cpp)
    )
    patches = jnp.pad(patches, ((0, 0), (1, N_pad - N), (0, 0)))      # (B, N_pad, Cpp)

    # base token matrix: cls+pos[0] in row 0, pos[1:]+conv_bias in patch rows, zero pad rows
    base = jnp.zeros((N_pad, E), jnp.float32)
    base = base.at[0:1].set(params["cls_token"] + params["pos_emb"][0:1])
    base = base.at[1:N].set(params["pos_emb"][1:N] + params["patch_b"][None, :])

    kernel = functools.partial(
        _vit_kernel, num_heads=num_heads, n_tok=N, head_dim=head_dim,
        scale=float(head_dim) ** -0.5, eps=1e-5)

    per_b = lambda b, d: (b, 0, 0)        # batch-indexed blocks
    per_d = lambda b, d: (d, 0, 0)        # per-layer (depth-indexed) blocks
    cst2 = lambda b, d: (0, 0)            # whole-array 2-D blocks (fetched once)

    out = pl.pallas_call(
        kernel,
        grid=(B, depth),
        in_specs=[
            pl.BlockSpec((1, N_pad, Cpp), per_b),          # patches (padded)
            pl.BlockSpec((Cpp, E), cst2),                  # patch_w
            pl.BlockSpec((N_pad, E), cst2),                # base (cls + pos + conv bias)
            pl.BlockSpec((1, 1, E), per_d),                # ln1_g
            pl.BlockSpec((1, 1, E), per_d),                # ln1_b
            pl.BlockSpec((1, E, 3 * E), per_d),            # qkv_w
            pl.BlockSpec((1, 1, 3 * E), per_d),            # qkv_b
            pl.BlockSpec((1, E, E), per_d),                # proj_w
            pl.BlockSpec((1, 1, E), per_d),                # proj_b
            pl.BlockSpec((1, 1, E), per_d),                # ln2_g
            pl.BlockSpec((1, 1, E), per_d),                # ln2_b
            pl.BlockSpec((1, E, Fdim), per_d),             # fc1_w
            pl.BlockSpec((1, 1, Fdim), per_d),             # fc1_b
            pl.BlockSpec((1, Fdim, E), per_d),             # fc2_w
            pl.BlockSpec((1, 1, E), per_d),                # fc2_b
            pl.BlockSpec((1, E), cst2),                    # norm_g
            pl.BlockSpec((1, E), cst2),                    # norm_b
            pl.BlockSpec((1, E), cst2),                    # head_ln_g
            pl.BlockSpec((1, E), cst2),                    # head_ln_b
            pl.BlockSpec((E, num_classes), cst2),          # head_w
            pl.BlockSpec((1, num_classes), cst2),          # head_b
        ],
        out_specs=pl.BlockSpec((1, 1, num_classes), per_b),
        out_shape=jax.ShapeDtypeStruct((B, 1, num_classes), jnp.float32),
        scratch_shapes=[pltpu.VMEM((N_pad, E), jnp.float32)],          # residual stream
        compiler_params=pltpu.CompilerParams(
            dimension_semantics=("parallel", "arbitrary")),
    )(
        patches, params["patch_w"], base,
        params["ln1_g"], params["ln1_b"], params["qkv_w"], params["qkv_b"],
        params["proj_w"], params["proj_b"], params["ln2_g"], params["ln2_b"],
        params["fc1_w"], params["fc1_b"], params["fc2_w"], params["fc2_b"],
        params["norm_g"], params["norm_b"], params["head_ln_g"], params["head_ln_b"],
        params["head_w"], params["head_b"],
    )
    return out[:, 0, :]


# ------------------------------------- main -------------------------------------

if __name__ == "__main__":
    # Small shapes consistent with the module (scaled-down ViT).
    cfg = dict(
        in_channels=3,
        image_size=16,
        patch_size=4,
        embed_dim=64,
        depth=2,
        num_heads=4,
        ff_dim=256,       # 4 * embed_dim
        num_classes=2,
    )
    key = jax.random.PRNGKey(0)
    pkey, xkey = jax.random.split(key)
    params = init_params(pkey, **cfg)
    x = jax.random.normal(
        xkey, (2, cfg["in_channels"], cfg["image_size"], cfg["image_size"]), jnp.float32
    )

    fwd = jax.jit(functools.partial(
        forward, patch_size=cfg["patch_size"], num_heads=cfg["num_heads"]))
    logits = fwd(params, x)
    jax.block_until_ready(logits)
    assert logits.shape == (2, cfg["num_classes"]), logits.shape
    assert logits.dtype == jnp.float32
    print("KERNEL_OK")
</pallas_src>

<mosaic_0001>
module attributes {stable_mosaic.version = 11 : i64} {
  func.func @_vit_kernel(%arg0: i32, %arg1: i32, %arg2: memref<1x24x48xf32, #tpu.memory_space<vmem>>, %arg3: memref<48x64xbf16, #tpu.memory_space<vmem>>, %arg4: memref<24x64xf32, #tpu.memory_space<vmem>>, %arg5: memref<1x1x64xf32, #tpu.memory_space<vmem>>, %arg6: memref<1x1x64xf32, #tpu.memory_space<vmem>>, %arg7: memref<1x64x192xbf16, #tpu.memory_space<vmem>>, %arg8: memref<1x1x192xf32, #tpu.memory_space<vmem>>, %arg9: memref<1x64x64xbf16, #tpu.memory_space<vmem>>, %arg10: memref<1x1x64xf32, #tpu.memory_space<vmem>>, %arg11: memref<1x1x64xf32, #tpu.memory_space<vmem>>, %arg12: memref<1x1x64xf32, #tpu.memory_space<vmem>>, %arg13: memref<1x64x256xbf16, #tpu.memory_space<vmem>>, %arg14: memref<1x1x256xf32, #tpu.memory_space<vmem>>, %arg15: memref<1x256x64xbf16, #tpu.memory_space<vmem>>, %arg16: memref<1x1x64xf32, #tpu.memory_space<vmem>>, %arg17: memref<1x64xf32, #tpu.memory_space<vmem>>, %arg18: memref<1x64xf32, #tpu.memory_space<vmem>>, %arg19: memref<1x64xf32, #tpu.memory_space<vmem>>, %arg20: memref<1x64xf32, #tpu.memory_space<vmem>>, %arg21: memref<64x2xbf16, #tpu.memory_space<vmem>>, %arg22: memref<1x2xf32, #tpu.memory_space<vmem>>, %arg23: memref<1x1x2xf32, #tpu.memory_space<vmem>>, %arg24: memref<24x64xf32, #tpu.memory_space<vmem>>) attributes {dimension_semantics = [#tpu.dimension_semantics<parallel>, #tpu.dimension_semantics<arbitrary>], iteration_bounds = array<i64: 2, 2>, scalar_prefetch = 0 : i64, scratch_operands = 1 : i64, tpu.core_type = #tpu.core_type<tc>, window_params = [{transform_indices = @transform_0, window_bounds = array<i64: 1, 24, 48>}, {pipeline_mode = #tpu.pipeline_mode<synchronous>, transform_indices = @transform_1, window_bounds = array<i64: 48, 64>}, {pipeline_mode = #tpu.pipeline_mode<synchronous>, transform_indices = @transform_2, window_bounds = array<i64: 24, 64>}, {transform_indices = @transform_3, window_bounds = array<i64: 1, 1, 64>}, {transform_indices = @transform_4, window_bounds = array<i64: 1, 1, 64>}, {transform_indices = @transform_5, window_bounds = array<i64: 1, 64, 192>}, {transform_indices = @transform_6, window_bounds = array<i64: 1, 1, 192>}, {transform_indices = @transform_7, window_bounds = array<i64: 1, 64, 64>}, {transform_indices = @transform_8, window_bounds = array<i64: 1, 1, 64>}, {transform_indices = @transform_9, window_bounds = array<i64: 1, 1, 64>}, {transform_indices = @transform_10, window_bounds = array<i64: 1, 1, 64>}, {transform_indices = @transform_11, window_bounds = array<i64: 1, 64, 256>}, {transform_indices = @transform_12, window_bounds = array<i64: 1, 1, 256>}, {transform_indices = @transform_13, window_bounds = array<i64: 1, 256, 64>}, {transform_indices = @transform_14, window_bounds = array<i64: 1, 1, 64>}, {pipeline_mode = #tpu.pipeline_mode<synchronous>, transform_indices = @transform_15, window_bounds = array<i64: 1, 64>}, {pipeline_mode = #tpu.pipeline_mode<synchronous>, transform_indices = @transform_16, window_bounds = array<i64: 1, 64>}, {pipeline_mode = #tpu.pipeline_mode<synchronous>, transform_indices = @transform_17, window_bounds = array<i64: 1, 64>}, {pipeline_mode = #tpu.pipeline_mode<synchronous>, transform_indices = @transform_18, window_bounds = array<i64: 1, 64>}, {pipeline_mode = #tpu.pipeline_mode<synchronous>, transform_indices = @transform_19, window_bounds = array<i64: 64, 2>}, {pipeline_mode = #tpu.pipeline_mode<synchronous>, transform_indices = @transform_20, window_bounds = array<i64: 1, 2>}, {transform_indices = @transform_21, window_bounds = array<i64: 1, 1, 2>}]} {
    %c0_i32 = arith.constant 0 : i32
    %0 = arith.cmpi eq, %arg1, %c0_i32 : i32
    %1 = arith.extui %0 : i1 to i32
    %c0_i32_0 = arith.constant 0 : i32
    %2 = arith.cmpi ne, %1, %c0_i32_0 : i32
    scf.if %2 {
      %c0_82 = arith.constant 0 : index
      %c0_83 = arith.constant 0 : index
      %c0_84 = arith.constant 0 : index
      %206 = vector.load %arg2[%c0_82, %c0_83, %c0_84] : memref<1x24x48xf32, #tpu.memory_space<vmem>>, vector<1x24x48xf32>
      %207 = vector.shape_cast %206 : vector<1x24x48xf32> to vector<24x48xf32>
      %208 = arith.truncf %207 : vector<24x48xf32> to vector<24x48xbf16>
      %c0_85 = arith.constant 0 : index
      %c0_86 = arith.constant 0 : index
      %209 = vector.load %arg3[%c0_85, %c0_86] : memref<48x64xbf16, #tpu.memory_space<vmem>>, vector<48x64xbf16>
      %cst_87 = arith.constant dense<0.000000e+00> : vector<24x64xf32>
      %210 = tpu.matmul %208, %209, %cst_87 {dimension_numbers = #tpu.dot_dimension_numbers<[1], [0], [0], [1], [0, 0, 1, 1], [], []>} : vector<24x48xbf16>, vector<48x64xbf16>, vector<24x64xf32> -> vector<24x64xf32>
      %c0_88 = arith.constant 0 : index
      %c0_89 = arith.constant 0 : index
      %211 = vector.load %arg4[%c0_88, %c0_89] : memref<24x64xf32, #tpu.memory_space<vmem>>, vector<24x64xf32>
      %212 = arith.addf %211, %210 : vector<24x64xf32>
      %c0_90 = arith.constant 0 : index
      %c0_91 = arith.constant 0 : index
      %213 = vector.load %arg24[%c0_90, %c0_91] : memref<24x64xf32, #tpu.memory_space<vmem>>, vector<24x64xf32>
      tpu.vector_store %arg24[%c0_90, %c0_91], %212 {strides = array<i32>} : memref<24x64xf32, #tpu.memory_space<vmem>>, vector<24x64xf32>,
    } else {
    }
    %c0 = arith.constant 0 : index
    %c0_1 = arith.constant 0 : index
    %3 = vector.load %arg24[%c0, %c0_1] : memref<24x64xf32, #tpu.memory_space<vmem>>, vector<24x64xf32>
    %c0_2 = arith.constant 0 : index
    %c0_3 = arith.constant 0 : index
    %c0_4 = arith.constant 0 : index
    %4 = vector.load %arg5[%c0_2, %c0_3, %c0_4] : memref<1x1x64xf32, #tpu.memory_space<vmem>>, vector<1x1x64xf32>
    %5 = vector.shape_cast %4 : vector<1x1x64xf32> to vector<1x64xf32>
    %c0_5 = arith.constant 0 : index
    %c0_6 = arith.constant 0 : index
    %c0_7 = arith.constant 0 : index
    %6 = vector.load %arg6[%c0_5, %c0_6, %c0_7] : memref<1x1x64xf32, #tpu.memory_space<vmem>>, vector<1x1x64xf32>
    %7 = vector.shape_cast %6 : vector<1x1x64xf32> to vector<1x64xf32>
    %cst = arith.constant dense<0.000000e+00> : vector<24xf32>
    %8 = vector.multi_reduction <add>, %3, %cst [1] : vector<24x64xf32> to vector<24xf32>
    %9 = vector.shape_cast %8 : vector<24xf32> to vector<24x1xf32>
    %cst_8 = arith.constant 6.400000e+01 : f32
    %10 = vector.broadcast %cst_8 : f32 to vector<24x1xf32>
    %11 = arith.divf %9, %10 : vector<24x1xf32>
    %12 = vector.broadcast %11 : vector<24x1xf32> to vector<24x64xf32>
    %13 = arith.subf %3, %12 : vector<24x64xf32>
    %14 = arith.mulf %13, %13 : vector<24x64xf32>
    %cst_9 = arith.constant dense<0.000000e+00> : vector<24xf32>
    %15 = vector.multi_reduction <add>, %14, %cst_9 [1] : vector<24x64xf32> to vector<24xf32>
    %16 = vector.shape_cast %15 : vector<24xf32> to vector<24x1xf32>
    %cst_10 = arith.constant 6.400000e+01 : f32
    %17 = vector.broadcast %cst_10 : f32 to vector<24x1xf32>
    %18 = arith.divf %16, %17 : vector<24x1xf32>
    %19 = vector.broadcast %11 : vector<24x1xf32> to vector<24x64xf32>
    %20 = arith.subf %3, %19 : vector<24x64xf32>
    %cst_11 = arith.constant 9.99999974E-6 : f32
    %21 = vector.broadcast %cst_11 : f32 to vector<24x1xf32>
    %22 = arith.addf %18, %21 : vector<24x1xf32>
    %23 = math.rsqrt %22 : vector<24x1xf32>
    %24 = vector.broadcast %23 : vector<24x1xf32> to vector<24x64xf32>
    %25 = arith.mulf %20, %24 : vector<24x64xf32>
    %26 = vector.broadcast %5 : vector<1x64xf32> to vector<24x64xf32>
    %27 = arith.mulf %25, %26 : vector<24x64xf32>
    %28 = vector.broadcast %7 : vector<1x64xf32> to vector<24x64xf32>
    %29 = arith.addf %27, %28 : vector<24x64xf32>
    %30 = arith.truncf %29 : vector<24x64xf32> to vector<24x64xbf16>
    %c0_12 = arith.constant 0 : index
    %c0_13 = arith.constant 0 : index
    %c0_14 = arith.constant 0 : index
    %31 = vector.load %arg7[%c0_12, %c0_13, %c0_14] : memref<1x64x192xbf16, #tpu.memory_space<vmem>>, vector<1x64x192xbf16>
    %32 = vector.shape_cast %31 : vector<1x64x192xbf16> to vector<64x192xbf16>
    %cst_15 = arith.constant dense<0.000000e+00> : vector<24x192xf32>
    %33 = tpu.matmul %30, %32, %cst_15 {dimension_numbers = #tpu.dot_dimension_numbers<[1], [0], [0], [1], [0, 0, 1, 1], [], []>} : vector<24x64xbf16>, vector<64x192xbf16>, vector<24x192xf32> -> vector<24x192xf32>
    %c0_16 = arith.constant 0 : index
    %c0_17 = arith.constant 0 : index
    %c0_18 = arith.constant 0 : index
    %34 = vector.load %arg8[%c0_16, %c0_17, %c0_18] : memref<1x1x192xf32, #tpu.memory_space<vmem>>, vector<1x1x192xf32>
    %35 = vector.shape_cast %34 : vector<1x1x192xf32> to vector<1x192xf32>
    %36 = vector.broadcast %35 : vector<1x192xf32> to vector<24x192xf32>
    %37 = arith.addf %33, %36 : vector<24x192xf32>
    %c0_19 = arith.constant 0 : index
    %c0_20 = arith.constant 0 : index
    %c0_21 = arith.constant 0 : index
    %38 = vector.load %arg9[%c0_19, %c0_20, %c0_21] : memref<1x64x64xbf16, #tpu.memory_space<vmem>>, vector<1x64x64xbf16>
    %39 = vector.shape_cast %38 : vector<1x64x64xbf16> to vector<64x64xbf16>
    %cst_22 = arith.constant 0.000000e+00 : f32
    %40 = vector.broadcast %cst_22 : f32 to vector<24x64xf32>
    %41 = vector.extract_strided_slice %37 {offsets = [0, 0], sizes = [24, 16], strides = [1, 1]} : vector<24x192xf32> to vector<24x16xf32>
    %42 = arith.truncf %41 : vector<24x16xf32> to vector<24x16xbf16>
    %43 = vector.extract_strided_slice %37 {offsets = [0, 64], sizes = [17, 16], strides = [1, 1]} : vector<24x192xf32> to vector<17x16xf32>
    %44 = arith.truncf %43 : vector<17x16xf32> to vector<17x16xbf16>
    %45 = vector.extract_strided_slice %37 {offsets = [0, 128], sizes = [17, 16], strides = [1, 1]} : vector<24x192xf32> to vector<17x16xf32>
    %46 = arith.truncf %45 : vector<17x16xf32> to vector<17x16xbf16>
    %cst_23 = arith.constant dense<0.000000e+00> : vector<24x17xf32>
    %47 = tpu.matmul %42, %44, %cst_23 {dimension_numbers = #tpu.dot_dimension_numbers<[1], [1], [0], [0], [0, 0, 1, 0], [], []>} : vector<24x16xbf16>, vector<17x16xbf16>, vector<24x17xf32> -> vector<24x17xf32>
    %cst_24 = arith.constant 2.500000e-01 : f32
    %48 = vector.broadcast %cst_24 : f32 to vector<24x17xf32>
    %49 = arith.mulf %47, %48 : vector<24x17xf32>
    %cst_25 = arith.constant dense<0xFF800000> : vector<24xf32>
    %50 = vector.multi_reduction <maximumf>, %49, %cst_25 [1] : vector<24x17xf32> to vector<24xf32>
    %51 = vector.shape_cast %50 : vector<24xf32> to vector<24x1xf32>
    %52 = vector.broadcast %51 : vector<24x1xf32> to vector<24x17xf32>
    %53 = arith.subf %49, %52 : vector<24x17xf32>
    %54 = math.exp %53 : vector<24x17xf32>
    %cst_26 = arith.constant dense<0.000000e+00> : vector<24xf32>
    %55 = vector.multi_reduction <add>, %54, %cst_26 [1] : vector<24x17xf32> to vector<24xf32>
    %56 = vector.shape_cast %55 : vector<24xf32> to vector<24x1xf32>
    %57 = tpu.reciprocal %56 {approx = true} : vector<24x1xf32> -> vector<24x1xf32>
    %58 = vector.broadcast %57 : vector<24x1xf32> to vector<24x17xf32>
    %59 = arith.mulf %54, %58 : vector<24x17xf32>
    %60 = arith.truncf %59 : vector<24x17xf32> to vector<24x17xbf16>
    %cst_27 = arith.constant dense<0.000000e+00> : vector<24x16xf32>
    %61 = tpu.matmul %60, %46, %cst_27 {dimension_numbers = #tpu.dot_dimension_numbers<[1], [0], [0], [1], [0, 0, 1, 1], [], []>} : vector<24x17xbf16>, vector<17x16xbf16>, vector<24x16xf32> -> vector<24x16xf32>
    %62 = arith.truncf %61 : vector<24x16xf32> to vector<24x16xbf16>
    %63 = vector.extract_strided_slice %39 {offsets = [0, 0], sizes = [16, 64], strides = [1, 1]} : vector<64x64xbf16> to vector<16x64xbf16>
    %cst_28 = arith.constant dense<0.000000e+00> : vector<24x64xf32>
    %64 = tpu.matmul %62, %63, %cst_28 {dimension_numbers = #tpu.dot_dimension_numbers<[1], [0], [0], [1], [0, 0, 1, 1], [], []>} : vector<24x16xbf16>, vector<16x64xbf16>, vector<24x64xf32> -> vector<24x64xf32>
    %65 = arith.addf %40, %64 : vector<24x64xf32>
    %66 = vector.extract_strided_slice %37 {offsets = [0, 16], sizes = [24, 16], strides = [1, 1]} : vector<24x192xf32> to vector<24x16xf32>
    %67 = arith.truncf %66 : vector<24x16xf32> to vector<24x16xbf16>
    %68 = vector.extract_strided_slice %37 {offsets = [0, 80], sizes = [17, 16], strides = [1, 1]} : vector<24x192xf32> to vector<17x16xf32>
    %69 = arith.truncf %68 : vector<17x16xf32> to vector<17x16xbf16>
    %70 = vector.extract_strided_slice %37 {offsets = [0, 144], sizes = [17, 16], strides = [1, 1]} : vector<24x192xf32> to vector<17x16xf32>
    %71 = arith.truncf %70 : vector<17x16xf32> to vector<17x16xbf16>
    %cst_29 = arith.constant dense<0.000000e+00> : vector<24x17xf32>
    %72 = tpu.matmul %67, %69, %cst_29 {dimension_numbers = #tpu.dot_dimension_numbers<[1], [1], [0], [0], [0, 0, 1, 0], [], []>} : vector<24x16xbf16>, vector<17x16xbf16>, vector<24x17xf32> -> vector<24x17xf32>
    %cst_30 = arith.constant 2.500000e-01 : f32
    %73 = vector.broadcast %cst_30 : f32 to vector<24x17xf32>
    %74 = arith.mulf %72, %73 : vector<24x17xf32>
    %cst_31 = arith.constant dense<0xFF800000> : vector<24xf32>
    %75 = vector.multi_reduction <maximumf>, %74, %cst_31 [1] : vector<24x17xf32> to vector<24xf32>
    %76 = vector.shape_cast %75 : vector<24xf32> to vector<24x1xf32>
    %77 = vector.broadcast %76 : vector<24x1xf32> to vector<24x17xf32>
    %78 = arith.subf %74, %77 : vector<24x17xf32>
    %79 = math.exp %78 : vector<24x17xf32>
    %cst_32 = arith.constant dense<0.000000e+00> : vector<24xf32>
    %80 = vector.multi_reduction <add>, %79, %cst_32 [1] : vector<24x17xf32> to vector<24xf32>
    %81 = vector.shape_cast %80 : vector<24xf32> to vector<24x1xf32>
    %82 = tpu.reciprocal %81 {approx = true} : vector<24x1xf32> -> vector<24x1xf32>
    %83 = vector.broadcast %82 : vector<24x1xf32> to vector<24x17xf32>
    %84 = arith.mulf %79, %83 : vector<24x17xf32>
    %85 = arith.truncf %84 : vector<24x17xf32> to vector<24x17xbf16>
    %cst_33 = arith.constant dense<0.000000e+00> : vector<24x16xf32>
    %86 = tpu.matmul %85, %71, %cst_33 {dimension_numbers = #tpu.dot_dimension_numbers<[1], [0], [0], [1], [0, 0, 1, 1], [], []>} : vector<24x17xbf16>, vector<17x16xbf16>, vector<24x16xf32> -> vector<24x16xf32>
    %87 = arith.truncf %86 : vector<24x16xf32> to vector<24x16xbf16>
    %88 = vector.extract_strided_slice %39 {offsets = [16, 0], sizes = [16, 64], strides = [1, 1]} : vector<64x64xbf16> to vector<16x64xbf16>
    %cst_34 = arith.constant dense<0.000000e+00> : vector<24x64xf32>
    %89 = tpu.matmul %87, %88, %cst_34 {dimension_numbers = #tpu.dot_dimension_numbers<[1], [0], [0], [1], [0, 0, 1, 1], [], []>} : vector<24x16xbf16>, vector<16x64xbf16>, vector<24x64xf32> -> vector<24x64xf32>
    %90 = arith.addf %65, %89 : vector<24x64xf32>
    %91 = vector.extract_strided_slice %37 {offsets = [0, 32], sizes = [24, 16], strides = [1, 1]} : vector<24x192xf32> to vector<24x16xf32>
    %92 = arith.truncf %91 : vector<24x16xf32> to vector<24x16xbf16>
    %93 = vector.extract_strided_slice %37 {offsets = [0, 96], sizes = [17, 16], strides = [1, 1]} : vector<24x192xf32> to vector<17x16xf32>
    %94 = arith.truncf %93 : vector<17x16xf32> to vector<17x16xbf16>
    %95 = vector.extract_strided_slice %37 {offsets = [0, 160], sizes = [17, 16], strides = [1, 1]} : vector<24x192xf32> to vector<17x16xf32>
    %96 = arith.truncf %95 : vector<17x16xf32> to vector<17x16xbf16>
    %cst_35 = arith.constant dense<0.000000e+00> : vector<24x17xf32>
    %97 = tpu.matmul %92, %94, %cst_35 {dimension_numbers = #tpu.dot_dimension_numbers<[1], [1], [0], [0], [0, 0, 1, 0], [], []>} : vector<24x16xbf16>, vector<17x16xbf16>, vector<24x17xf32> -> vector<24x17xf32>
    %cst_36 = arith.constant 2.500000e-01 : f32
    %98 = vector.broadcast %cst_36 : f32 to vector<24x17xf32>
    %99 = arith.mulf %97, %98 : vector<24x17xf32>
    %cst_37 = arith.constant dense<0xFF800000> : vector<24xf32>
    %100 = vector.multi_reduction <maximumf>, %99, %cst_37 [1] : vector<24x17xf32> to vector<24xf32>
    %101 = vector.shape_cast %100 : vector<24xf32> to vector<24x1xf32>
    %102 = vector.broadcast %101 : vector<24x1xf32> to vector<24x17xf32>
    %103 = arith.subf %99, %102 : vector<24x17xf32>
    %104 = math.exp %103 : vector<24x17xf32>
    %cst_38 = arith.constant dense<0.000000e+00> : vector<24xf32>
    %105 = vector.multi_reduction <add>, %104, %cst_38 [1] : vector<24x17xf32> to vector<24xf32>
    %106 = vector.shape_cast %105 : vector<24xf32> to vector<24x1xf32>
    %107 = tpu.reciprocal %106 {approx = true} : vector<24x1xf32> -> vector<24x1xf32>
    %108 = vector.broadcast %107 : vector<24x1xf32> to vector<24x17xf32>
    %109 = arith.mulf %104, %108 : vector<24x17xf32>
    %110 = arith.truncf %109 : vector<24x17xf32> to vector<24x17xbf16>
    %cst_39 = arith.constant dense<0.000000e+00> : vector<24x16xf32>
    %111 = tpu.matmul %110, %96, %cst_39 {dimension_numbers = #tpu.dot_dimension_numbers<[1], [0], [0], [1], [0, 0, 1, 1], [], []>} : vector<24x17xbf16>, vector<17x16xbf16>, vector<24x16xf32> -> vector<24x16xf32>
    %112 = arith.truncf %111 : vector<24x16xf32> to vector<24x16xbf16>
    %113 = vector.extract_strided_slice %39 {offsets = [32, 0], sizes = [16, 64], strides = [1, 1]} : vector<64x64xbf16> to vector<16x64xbf16>
    %cst_40 = arith.constant dense<0.000000e+00> : vector<24x64xf32>
    %114 = tpu.matmul %112, %113, %cst_40 {dimension_numbers = #tpu.dot_dimension_numbers<[1], [0], [0], [1], [0, 0, 1, 1], [], []>} : vector<24x16xbf16>, vector<16x64xbf16>, vector<24x64xf32> -> vector<24x64xf32>
    %115 = arith.addf %90, %114 : vector<24x64xf32>
    %116 = vector.extract_strided_slice %37 {offsets = [0, 48], sizes = [24, 16], strides = [1, 1]} : vector<24x192xf32> to vector<24x16xf32>
    %117 = arith.truncf %116 : vector<24x16xf32> to vector<24x16xbf16>
    %118 = vector.extract_strided_slice %37 {offsets = [0, 112], sizes = [17, 16], strides = [1, 1]} : vector<24x192xf32> to vector<17x16xf32>
    %119 = arith.truncf %118 : vector<17x16xf32> to vector<17x16xbf16>
    %120 = vector.extract_strided_slice %37 {offsets = [0, 176], sizes = [17, 16], strides = [1, 1]} : vector<24x192xf32> to vector<17x16xf32>
    %121 = arith.truncf %120 : vector<17x16xf32> to vector<17x16xbf16>
    %cst_41 = arith.constant dense<0.000000e+00> : vector<24x17xf32>
    %122 = tpu.matmul %117, %119, %cst_41 {dimension_numbers = #tpu.dot_dimension_numbers<[1], [1], [0], [0], [0, 0, 1, 0], [], []>} : vector<24x16xbf16>, vector<17x16xbf16>, vector<24x17xf32> -> vector<24x17xf32>
    %cst_42 = arith.constant 2.500000e-01 : f32
    %123 = vector.broadcast %cst_42 : f32 to vector<24x17xf32>
    %124 = arith.mulf %122, %123 : vector<24x17xf32>
    %cst_43 = arith.constant dense<0xFF800000> : vector<24xf32>
    %125 = vector.multi_reduction <maximumf>, %124, %cst_43 [1] : vector<24x17xf32> to vector<24xf32>
    %126 = vector.shape_cast %125 : vector<24xf32> to vector<24x1xf32>
    %127 = vector.broadcast %126 : vector<24x1xf32> to vector<24x17xf32>
    %128 = arith.subf %124, %127 : vector<24x17xf32>
    %129 = math.exp %128 : vector<24x17xf32>
    %cst_44 = arith.constant dense<0.000000e+00> : vector<24xf32>
    %130 = vector.multi_reduction <add>, %129, %cst_44 [1] : vector<24x17xf32> to vector<24xf32>
    %131 = vector.shape_cast %130 : vector<24xf32> to vector<24x1xf32>
    %132 = tpu.reciprocal %131 {approx = true} : vector<24x1xf32> -> vector<24x1xf32>
    %133 = vector.broadcast %132 : vector<24x1xf32> to vector<24x17xf32>
    %134 = arith.mulf %129, %133 : vector<24x17xf32>
    %135 = arith.truncf %134 : vector<24x17xf32> to vector<24x17xbf16>
    %cst_45 = arith.constant dense<0.000000e+00> : vector<24x16xf32>
    %136 = tpu.matmul %135, %121, %cst_45 {dimension_numbers = #tpu.dot_dimension_numbers<[1], [0], [0], [1], [0, 0, 1, 1], [], []>} : vector<24x17xbf16>, vector<17x16xbf16>, vector<24x16xf32> -> vector<24x16xf32>
    %137 = arith.truncf %136 : vector<24x16xf32> to vector<24x16xbf16>
    %138 = vector.extract_strided_slice %39 {offsets = [48, 0], sizes = [16, 64], strides = [1, 1]} : vector<64x64xbf16> to vector<16x64xbf16>
    %cst_46 = arith.constant dense<0.000000e+00> : vector<24x64xf32>
    %139 = tpu.matmul %137, %138, %cst_46 {dimension_numbers = #tpu.dot_dimension_numbers<[1], [0], [0], [1], [0, 0, 1, 1], [], []>} : vector<24x16xbf16>, vector<16x64xbf16>, vector<24x64xf32> -> vector<24x64xf32>
    %140 = arith.addf %115, %139 : vector<24x64xf32>
    %141 = arith.addf %3, %140 : vector<24x64xf32>
    %c0_47 = arith.constant 0 : index
    %c0_48 = arith.constant 0 : index
    %c0_49 = arith.constant 0 : index
    %142 = vector.load %arg10[%c0_47, %c0_48, %c0_49] : memref<1x1x64xf32, #tpu.memory_space<vmem>>, vector<1x1x64xf32>
    %143 = vector.shape_cast %142 : vector<1x1x64xf32> to vector<1x64xf32>
    %144 = vector.broadcast %143 : vector<1x64xf32> to vector<24x64xf32>
    %145 = arith.addf %141, %144 : vector<24x64xf32>
    %c0_50 = arith.constant 0 : index
    %c0_51 = arith.constant 0 : index
    %c0_52 = arith.constant 0 : index
    %146 = vector.load %arg11[%c0_50, %c0_51, %c0_52] : memref<1x1x64xf32, #tpu.memory_space<vmem>>, vector<1x1x64xf32>
    %147 = vector.shape_cast %146 : vector<1x1x64xf32> to vector<1x64xf32>
    %c0_53 = arith.constant 0 : index
    %c0_54 = arith.constant 0 : index
    %c0_55 = arith.constant 0 : index
    %148 = vector.load %arg12[%c0_53, %c0_54, %c0_55] : memref<1x1x64xf32, #tpu.memory_space<vmem>>, vector<1x1x64xf32>
    %149 = vector.shape_cast %148 : vector<1x1x64xf32> to vector<1x64xf32>
    %cst_56 = arith.constant dense<0.000000e+00> : vector<24xf32>
    %150 = vector.multi_reduction <add>, %145, %cst_56 [1] : vector<24x64xf32> to vector<24xf32>
    %151 = vector.shape_cast %150 : vector<24xf32> to vector<24x1xf32>
    %cst_57 = arith.constant 6.400000e+01 : f32
    %152 = vector.broadcast %cst_57 : f32 to vector<24x1xf32>
    %153 = arith.divf %151, %152 : vector<24x1xf32>
    %154 = vector.broadcast %153 : vector<24x1xf32> to vector<24x64xf32>
    %155 = arith.subf %145, %154 : vector<24x64xf32>
    %156 = arith.mulf %155, %155 : vector<24x64xf32>
    %cst_58 = arith.constant dense<0.000000e+00> : vector<24xf32>
    %157 = vector.multi_reduction <add>, %156, %cst_58 [1] : vector<24x64xf32> to vector<24xf32>
    %158 = vector.shape_cast %157 : vector<24xf32> to vector<24x1xf32>
    %cst_59 = arith.constant 6.400000e+01 : f32
    %159 = vector.broadcast %cst_59 : f32 to vector<24x1xf32>
    %160 = arith.divf %158, %159 : vector<24x1xf32>
    %161 = vector.broadcast %153 : vector<24x1xf32> to vector<24x64xf32>
    %162 = arith.subf %145, %161 : vector<24x64xf32>
    %cst_60 = arith.constant 9.99999974E-6 : f32
    %163 = vector.broadcast %cst_60 : f32 to vector<24x1xf32>
    %164 = arith.addf %160, %163 : vector<24x1xf32>
    %165 = math.rsqrt %164 : vector<24x1xf32>
    %166 = vector.broadcast %165 : vector<24x1xf32> to vector<24x64xf32>
    %167 = arith.mulf %162, %166 : vector<24x64xf32>
    %168 = vector.broadcast %147 : vector<1x64xf32> to vector<24x64xf32>
    %169 = arith.mulf %167, %168 : vector<24x64xf32>
    %170 = vector.broadcast %149 : vector<1x64xf32> to vector<24x64xf32>
    %171 = arith.addf %169, %170 : vector<24x64xf32>
    %172 = arith.truncf %171 : vector<24x64xf32> to vector<24x64xbf16>
    %c0_61 = arith.constant 0 : index
    %c0_62 = arith.constant 0 : index
    %c0_63 = arith.constant 0 : index
    %173 = vector.load %arg13[%c0_61, %c0_62, %c0_63] : memref<1x64x256xbf16, #tpu.memory_space<vmem>>, vector<1x64x256xbf16>
    %174 = vector.shape_cast %173 : vector<1x64x256xbf16> to vector<64x256xbf16>
    %cst_64 = arith.constant dense<0.000000e+00> : vector<24x256xf32>
    %175 = tpu.matmul %172, %174, %cst_64 {dimension_numbers = #tpu.dot_dimension_numbers<[1], [0], [0], [1], [0, 0, 1, 1], [], []>} : vector<24x64xbf16>, vector<64x256xbf16>, vector<24x256xf32> -> vector<24x256xf32>
    %c0_65 = arith.constant 0 : index
    %c0_66 = arith.constant 0 : index
    %c0_67 = arith.constant 0 : index
    %176 = vector.load %arg14[%c0_65, %c0_66, %c0_67] : memref<1x1x256xf32, #tpu.memory_space<vmem>>, vector<1x1x256xf32>
    %177 = vector.shape_cast %176 : vector<1x1x256xf32> to vector<1x256xf32>
    %178 = vector.broadcast %177 : vector<1x256xf32> to vector<24x256xf32>
    %179 = arith.addf %175, %178 : vector<24x256xf32>
    %180 = arith.mulf %179, %179 : vector<24x256xf32>
    %181 = arith.mulf %179, %180 : vector<24x256xf32>
    %cst_68 = arith.constant 4.471500e-02 : f32
    %182 = vector.broadcast %cst_68 : f32 to vector<24x256xf32>
    %183 = arith.mulf %182, %181 : vector<24x256xf32>
    %184 = arith.addf %179, %183 : vector<24x256xf32>
    %cst_69 = arith.constant 0.797884583 : f32
    %185 = vector.broadcast %cst_69 : f32 to vector<24x256xf32>
    %186 = arith.mulf %185, %184 : vector<24x256xf32>
    %187 = math.tanh %186 : vector<24x256xf32>
    %cst_70 = arith.constant 1.000000e+00 : f32
    %188 = vector.broadcast %cst_70 : f32 to vector<24x256xf32>
    %189 = arith.addf %188, %187 : vector<24x256xf32>
    %cst_71 = arith.constant 5.000000e-01 : f32
    %190 = vector.broadcast %cst_71 : f32 to vector<24x256xf32>
    %191 = arith.mulf %190, %189 : vector<24x256xf32>
    %192 = arith.mulf %179, %191 : vector<24x256xf32>
    %193 = arith.truncf %192 : vector<24x256xf32> to vector<24x256xbf16>
    %c0_72 = arith.constant 0 : index
    %c0_73 = arith.constant 0 : index
    %c0_74 = arith.constant 0 : index
    %194 = vector.load %arg15[%c0_72, %c0_73, %c0_74] : memref<1x256x64xbf16, #tpu.memory_space<vmem>>, vector<1x256x64xbf16>
    %195 = vector.shape_cast %194 : vector<1x256x64xbf16> to vector<256x64xbf16>
    %cst_75 = arith.constant dense<0.000000e+00> : vector<24x64xf32>
    %196 = tpu.matmul %193, %195, %cst_75 {dimension_numbers = #tpu.dot_dimension_numbers<[1], [0], [0], [1], [0, 0, 1, 1], [], []>} : vector<24x256xbf16>, vector<256x64xbf16>, vector<24x64xf32> -> vector<24x64xf32>
    %c0_76 = arith.constant 0 : index
    %c0_77 = arith.constant 0 : index
    %c0_78 = arith.constant 0 : index
    %197 = vector.load %arg16[%c0_76, %c0_77, %c0_78] : memref<1x1x64xf32, #tpu.memory_space<vmem>>, vector<1x1x64xf32>
    %198 = vector.shape_cast %197 : vector<1x1x64xf32> to vector<1x64xf32>
    %199 = vector.broadcast %198 : vector<1x64xf32> to vector<24x64xf32>
    %200 = arith.addf %196, %199 : vector<24x64xf32>
    %201 = arith.addf %145, %200 : vector<24x64xf32>
    %c0_79 = arith.constant 0 : index
    %c0_80 = arith.constant 0 : index
    %202 = vector.load %arg24[%c0_79, %c0_80] : memref<24x64xf32, #tpu.memory_space<vmem>>, vector<24x64xf32>
    tpu.vector_store %arg24[%c0_79, %c0_80], %201 {strides = array<i32>} : memref<24x64xf32, #tpu.memory_space<vmem>>, vector<24x64xf32>,
    %c1_i32 = arith.constant 1 : i32
    %203 = arith.cmpi eq, %arg1, %c1_i32 : i32
    %204 = arith.extui %203 : i1 to i32
    %c0_i32_81 = arith.constant 0 : i32
    %205 = arith.cmpi ne, %204, %c0_i32_81 : i32
    scf.if %205 {
      %c0_82 = arith.constant 0 : index
      %c0_83 = arith.constant 0 : index
      %206 = vector.load %arg17[%c0_82, %c0_83] : memref<1x64xf32, #tpu.memory_space<vmem>>, vector<1x64xf32>
      %c0_84 = arith.constant 0 : index
      %c0_85 = arith.constant 0 : index
      %207 = vector.load %arg18[%c0_84, %c0_85] : memref<1x64xf32, #tpu.memory_space<vmem>>, vector<1x64xf32>
      %cst_86 = arith.constant dense<0.000000e+00> : vector<24xf32>
      %208 = vector.multi_reduction <add>, %201, %cst_86 [1] : vector<24x64xf32> to vector<24xf32>
      %209 = vector.shape_cast %208 : vector<24xf32> to vector<24x1xf32>
      %cst_87 = arith.constant 6.400000e+01 : f32
      %210 = vector.broadcast %cst_87 : f32 to vector<24x1xf32>
      %211 = arith.divf %209, %210 : vector<24x1xf32>
      %212 = vector.broadcast %211 : vector<24x1xf32> to vector<24x64xf32>
      %213 = arith.subf %201, %212 : vector<24x64xf32>
      %214 = arith.mulf %213, %213 : vector<24x64xf32>
      %cst_88 = arith.constant dense<0.000000e+00> : vector<24xf32>
      %215 = vector.multi_reduction <add>, %214, %cst_88 [1] : vector<24x64xf32> to vector<24xf32>
      %216 = vector.shape_cast %215 : vector<24xf32> to vector<24x1xf32>
      %cst_89 = arith.constant 6.400000e+01 : f32
      %217 = vector.broadcast %cst_89 : f32 to vector<24x1xf32>
      %218 = arith.divf %216, %217 : vector<24x1xf32>
      %219 = vector.broadcast %211 : vector<24x1xf32> to vector<24x64xf32>
      %220 = arith.subf %201, %219 : vector<24x64xf32>
      %cst_90 = arith.constant 9.99999974E-6 : f32
      %221 = vector.broadcast %cst_90 : f32 to vector<24x1xf32>
      %222 = arith.addf %218, %221 : vector<24x1xf32>
      %223 = math.rsqrt %222 : vector<24x1xf32>
      %224 = vector.broadcast %223 : vector<24x1xf32> to vector<24x64xf32>
      %225 = arith.mulf %220, %224 : vector<24x64xf32>
      %226 = vector.broadcast %206 : vector<1x64xf32> to vector<24x64xf32>
      %227 = arith.mulf %225, %226 : vector<24x64xf32>
      %228 = vector.broadcast %207 : vector<1x64xf32> to vector<24x64xf32>
      %229 = arith.addf %227, %228 : vector<24x64xf32>
      %230 = vector.extract_strided_slice %229 {offsets = [0, 0], sizes = [17, 64], strides = [1, 1]} : vector<24x64xf32> to vector<17x64xf32>
      %cst_91 = arith.constant dense<0.000000e+00> : vector<64xf32>
      %231 = vector.multi_reduction <add>, %230, %cst_91 [0] : vector<17x64xf32> to vector<64xf32>
      %232 = vector.shape_cast %231 : vector<64xf32> to vector<1x64xf32>
      %cst_92 = arith.constant 1.700000e+01 : f32
      %233 = vector.broadcast %cst_92 : f32 to vector<1x64xf32>
      %234 = arith.divf %232, %233 : vector<1x64xf32>
      %c0_93 = arith.constant 0 : index
      %c0_94 = arith.constant 0 : index
      %235 = vector.load %arg19[%c0_93, %c0_94] : memref<1x64xf32, #tpu.memory_space<vmem>>, vector<1x64xf32>
      %c0_95 = arith.constant 0 : index
      %c0_96 = arith.constant 0 : index
      %236 = vector.load %arg20[%c0_95, %c0_96] : memref<1x64xf32, #tpu.memory_space<vmem>>, vector<1x64xf32>
      %cst_97 = arith.constant dense<0.000000e+00> : vector<1xf32>
      %237 = vector.multi_reduction <add>, %234, %cst_97 [1] : vector<1x64xf32> to vector<1xf32>
      %238 = vector.shape_cast %237 : vector<1xf32> to vector<1x1xf32>
      %cst_98 = arith.constant 6.400000e+01 : f32
      %239 = vector.broadcast %cst_98 : f32 to vector<1x1xf32>
      %240 = arith.divf %238, %239 : vector<1x1xf32>
      %241 = vector.broadcast %240 : vector<1x1xf32> to vector<1x64xf32>
      %242 = arith.subf %234, %241 : vector<1x64xf32>
      %243 = arith.mulf %242, %242 : vector<1x64xf32>
      %cst_99 = arith.constant dense<0.000000e+00> : vector<1xf32>
      %244 = vector.multi_reduction <add>, %243, %cst_99 [1] : vector<1x64xf32> to vector<1xf32>
      %245 = vector.shape_cast %244 : vector<1xf32> to vector<1x1xf32>
      %cst_100 = arith.constant 6.400000e+01 : f32
      %246 = vector.broadcast %cst_100 : f32 to vector<1x1xf32>
      %247 = arith.divf %245, %246 : vector<1x1xf32>
      %248 = vector.broadcast %240 : vector<1x1xf32> to vector<1x64xf32>
      %249 = arith.subf %234, %248 : vector<1x64xf32>
      %cst_101 = arith.constant 9.99999974E-6 : f32
      %250 = vector.broadcast %cst_101 : f32 to vector<1x1xf32>
      %251 = arith.addf %247, %250 : vector<1x1xf32>
      %252 = math.rsqrt %251 : vector<1x1xf32>
      %253 = vector.broadcast %252 : vector<1x1xf32> to vector<1x64xf32>
      %254 = arith.mulf %249, %253 : vector<1x64xf32>
      %255 = arith.mulf %254, %235 : vector<1x64xf32>
      %256 = arith.addf %255, %236 : vector<1x64xf32>
      %257 = arith.truncf %256 : vector<1x64xf32> to vector<1x64xbf16>
      %c0_102 = arith.constant 0 : index
      %c0_103 = arith.constant 0 : index
      %258 = vector.load %arg21[%c0_102, %c0_103] : memref<64x2xbf16, #tpu.memory_space<vmem>>, vector<64x2xbf16>
      %cst_104 = arith.constant dense<0.000000e+00> : vector<1x2xf32>
      %259 = tpu.matmul %257, %258, %cst_104 {dimension_numbers = #tpu.dot_dimension_numbers<[1], [0], [0], [1], [0, 0, 1, 1], [], []>} : vector<1x64xbf16>, vector<64x2xbf16>, vector<1x2xf32> -> vector<1x2xf32>
      %c0_105 = arith.constant 0 : index
      %c0_106 = arith.constant 0 : index
      %260 = vector.load %arg22[%c0_105, %c0_106] : memref<1x2xf32, #tpu.memory_space<vmem>>, vector<1x2xf32>
      %261 = arith.addf %259, %260 : vector<1x2xf32>
      %c0_107 = arith.constant 0 : index
      %c0_108 = arith.constant 0 : index
      %c0_109 = arith.constant 0 : index
      %262 = vector.load %arg23[%c0_107, %c0_108, %c0_109] : memref<1x1x2xf32, #tpu.memory_space<vmem>>, vector<1x1x2xf32>
      %263 = vector.shape_cast %262 : vector<1x1x2xf32> to vector<1x2xf32>
      %264 = vector.shape_cast %261 : vector<1x2xf32> to vector<1x1x2xf32>
      tpu.vector_store %arg23[%c0_107, %c0_108, %c0_109], %264 {strides = array<i32>} : memref<1x1x2xf32, #tpu.memory_space<vmem>>, vector<1x1x2xf32>,
    } else {
    }
    return
  }
  func.func @transform_0(%arg0: i32, %arg1: i32) -> (i32, i32, i32) {
    %c0_i32 = arith.constant 0 : i32
    %c0_i32_0 = arith.constant 0 : i32
    %c0_i32_1 = arith.constant 0 : i32
    return %arg0, %c0_i32, %c0_i32_0 : i32, i32, i32
  }
  func.func @transform_1(%arg0: i32, %arg1: i32) -> (i32, i32) {
    %c0_i32 = arith.constant 0 : i32
    %c0_i32_0 = arith.constant 0 : i32
    %c0_i32_1 = arith.constant 0 : i32
    return %c0_i32, %c0_i32_0 : i32, i32
  }
  func.func @transform_2(%arg0: i32, %arg1: i32) -> (i32, i32) {
    %c0_i32 = arith.constant 0 : i32
    %c0_i32_0 = arith.constant 0 : i32
    %c0_i32_1 = arith.constant 0 : i32
    return %c0_i32, %c0_i32_0 : i32, i32
  }
  func.func @transform_3(%arg0: i32, %arg1: i32) -> (i32, i32, i32) {
    %c0_i32 = arith.constant 0 : i32
    %c0_i32_0 = arith.constant 0 : i32
    %c0_i32_1 = arith.constant 0 : i32
    return %arg1, %c0_i32, %c0_i32_0 : i32, i32, i32
  }
  func.func @transform_4(%arg0: i32, %arg1: i32) -> (i32, i32, i32) {
    %c0_i32 = arith.constant 0 : i32
    %c0_i32_0 = arith.constant 0 : i32
    %c0_i32_1 = arith.constant 0 : i32
    return %arg1, %c0_i32, %c0_i32_0 : i32, i32, i32
  }
  func.func @transform_5(%arg0: i32, %arg1: i32) -> (i32, i32, i32) {
    %c0_i32 = arith.constant 0 : i32
    %c0_i32_0 = arith.constant 0 : i32
    %c0_i32_1 = arith.constant 0 : i32
    return %arg1, %c0_i32, %c0_i32_0 : i32, i32, i32
  }
  func.func @transform_6(%arg0: i32, %arg1: i32) -> (i32, i32, i32) {
    %c0_i32 = arith.constant 0 : i32
    %c0_i32_0 = arith.constant 0 : i32
    %c0_i32_1 = arith.constant 0 : i32
    return %arg1, %c0_i32, %c0_i32_0 : i32, i32, i32
  }
  func.func @transform_7(%arg0: i32, %arg1: i32) -> (i32, i32, i32) {
    %c0_i32 = arith.constant 0 : i32
    %c0_i32_0 = arith.constant 0 : i32
    %c0_i32_1 = arith.constant 0 : i32
    return %arg1, %c0_i32, %c0_i32_0 : i32, i32, i32
  }
  func.func @transform_8(%arg0: i32, %arg1: i32) -> (i32, i32, i32) {
    %c0_i32 = arith.constant 0 : i32
    %c0_i32_0 = arith.constant 0 : i32
    %c0_i32_1 = arith.constant 0 : i32
    return %arg1, %c0_i32, %c0_i32_0 : i32, i32, i32
  }
  func.func @transform_9(%arg0: i32, %arg1: i32) -> (i32, i32, i32) {
    %c0_i32 = arith.constant 0 : i32
    %c0_i32_0 = arith.constant 0 : i32
    %c0_i32_1 = arith.constant 0 : i32
    return %arg1, %c0_i32, %c0_i32_0 : i32, i32, i32
  }
  func.func @transform_10(%arg0: i32, %arg1: i32) -> (i32, i32, i32) {
    %c0_i32 = arith.constant 0 : i32
    %c0_i32_0 = arith.constant 0 : i32
    %c0_i32_1 = arith.constant 0 : i32
    return %arg1, %c0_i32, %c0_i32_0 : i32, i32, i32
  }
  func.func @transform_11(%arg0: i32, %arg1: i32) -> (i32, i32, i32) {
    %c0_i32 = arith.constant 0 : i32
    %c0_i32_0 = arith.constant 0 : i32
    %c0_i32_1 = arith.constant 0 : i32
    return %arg1, %c0_i32, %c0_i32_0 : i32, i32, i32
  }
  func.func @transform_12(%arg0: i32, %arg1: i32) -> (i32, i32, i32) {
    %c0_i32 = arith.constant 0 : i32
    %c0_i32_0 = arith.constant 0 : i32
    %c0_i32_1 = arith.constant 0 : i32
    return %arg1, %c0_i32, %c0_i32_0 : i32, i32, i32
  }
  func.func @transform_13(%arg0: i32, %arg1: i32) -> (i32, i32, i32) {
    %c0_i32 = arith.constant 0 : i32
    %c0_i32_0 = arith.constant 0 : i32
    %c0_i32_1 = arith.constant 0 : i32
    return %arg1, %c0_i32, %c0_i32_0 : i32, i32, i32
  }
  func.func @transform_14(%arg0: i32, %arg1: i32) -> (i32, i32, i32) {
    %c0_i32 = arith.constant 0 : i32
    %c0_i32_0 = arith.constant 0 : i32
    %c0_i32_1 = arith.constant 0 : i32
    return %arg1, %c0_i32, %c0_i32_0 : i32, i32, i32
  }
  func.func @transform_15(%arg0: i32, %arg1: i32) -> (i32, i32) {
    %c0_i32 = arith.constant 0 : i32
    %c0_i32_0 = arith.constant 0 : i32
    %c0_i32_1 = arith.constant 0 : i32
    return %c0_i32, %c0_i32_0 : i32, i32
  }
  func.func @transform_16(%arg0: i32, %arg1: i32) -> (i32, i32) {
    %c0_i32 = arith.constant 0 : i32
    %c0_i32_0 = arith.constant 0 : i32
    %c0_i32_1 = arith.constant 0 : i32
    return %c0_i32, %c0_i32_0 : i32, i32
  }
  func.func @transform_17(%arg0: i32, %arg1: i32) -> (i32, i32) {
    %c0_i32 = arith.constant 0 : i32
    %c0_i32_0 = arith.constant 0 : i32
    %c0_i32_1 = arith.constant 0 : i32
    return %c0_i32, %c0_i32_0 : i32, i32
  }
  func.func @transform_18(%arg0: i32, %arg1: i32) -> (i32, i32) {
    %c0_i32 = arith.constant 0 : i32
    %c0_i32_0 = arith.constant 0 : i32
    %c0_i32_1 = arith.constant 0 : i32
    return %c0_i32, %c0_i32_0 : i32, i32
  }
  func.func @transform_19(%arg0: i32, %arg1: i32) -> (i32, i32) {
    %c0_i32 = arith.constant 0 : i32
    %c0_i32_0 = arith.constant 0 : i32
    %c0_i32_1 = arith.constant 0 : i32
    return %c0_i32, %c0_i32_0 : i32, i32
  }
  func.func @transform_20(%arg0: i32, %arg1: i32) -> (i32, i32) {
    %c0_i32 = arith.constant 0 : i32
    %c0_i32_0 = arith.constant 0 : i32
    %c0_i32_1 = arith.constant 0 : i32
    return %c0_i32, %c0_i32_0 : i32, i32
  }
  func.func @transform_21(%arg0: i32, %arg1: i32) -> (i32, i32, i32) {
    %c0_i32 = arith.constant 0 : i32
    %c0_i32_0 = arith.constant 0 : i32
    %c0_i32_1 = arith.constant 0 : i32
    return %arg0, %c0_i32, %c0_i32_0 : i32, i32, i32
  }
}

</mosaic_0001>

<llo_original>
// kernel: forward.1
$region0: #{forward.1}
  #allocation0 [shape = 'u32[]', space=smem, size = 0x4, offset = 0x4, fixed_abs, tag = 'smem constant byte address 0x4 - core index']
  #allocation1 [shape = 'u32[144,128]{1,0:T(1,128)}', space=vmem, size = 0x12000, scoped, tag = 'internal scratch']
  #allocation2 [shape = 'f32[24,64]{1,0:T(8,128)}', space=vmem, size = 0x3000, scoped, tag = 'scratch operand']
  %s0 = inlined_call_operand.vmem [shape: f32[2,24,48], index: 0, kind: input, shape index: {}]
  %s1 = inlined_call_operand.vmem [shape: bf16[48,64], index: 1, kind: input, shape index: {}]
  %s2 = inlined_call_operand.vmem [shape: f32[24,64], index: 2, kind: input, shape index: {}]
  %s3 = inlined_call_operand.vmem [shape: f32[2,1,64], index: 3, kind: input, shape index: {}]
  %s4 = inlined_call_operand.vmem [shape: f32[2,1,64], index: 4, kind: input, shape index: {}]
  %s5 = inlined_call_operand.vmem [shape: bf16[2,64,192], index: 5, kind: input, shape index: {}]
  %s6 = inlined_call_operand.vmem [shape: f32[2,1,192], index: 6, kind: input, shape index: {}]
  %s7 = inlined_call_operand.vmem [shape: bf16[2,64,64], index: 7, kind: input, shape index: {}]
  %s8 = inlined_call_operand.vmem [shape: f32[2,1,64], index: 8, kind: input, shape index: {}]
  %s9 = inlined_call_operand.vmem [shape: f32[2,1,64], index: 9, kind: input, shape index: {}]
  %s10 = inlined_call_operand.vmem [shape: f32[2,1,64], index: 10, kind: input, shape index: {}]
  %s11 = inlined_call_operand.vmem [shape: bf16[2,64,256], index: 11, kind: input, shape index: {}]
  %s12 = inlined_call_operand.vmem [shape: f32[2,1,256], index: 12, kind: input, shape index: {}]
  %s13 = inlined_call_operand.vmem [shape: bf16[2,256,64], index: 13, kind: input, shape index: {}]
  %s14 = inlined_call_operand.vmem [shape: f32[2,1,64], index: 14, kind: input, shape index: {}]
  %s15 = inlined_call_operand.vmem [shape: f32[1,64], index: 15, kind: input, shape index: {}]
  %s16 = inlined_call_operand.vmem [shape: f32[1,64], index: 16, kind: input, shape index: {}]
  %s17 = inlined_call_operand.vmem [shape: f32[1,64], index: 17, kind: input, shape index: {}]
  %s18 = inlined_call_operand.vmem [shape: f32[1,64], index: 18, kind: input, shape index: {}]
  %s19 = inlined_call_operand.vmem [shape: bf16[64,2], index: 19, kind: input, shape index: {}]
  %s20 = inlined_call_operand.vmem [shape: f32[1,2], index: 20, kind: input, shape index: {}]
  %s21 = inlined_call_operand.hbm [shape: f32[2,1,2], index: 21, kind: output, shape index: {}]
  %s22 = sld [smem:[#allocation0]]
  $region125: #{forward.1} parent=0
    _
  %s24 = ssub.s32 1, %s22
  %s25 = scalar_select 0, %s24, %s22
  $region1: #{forward.1} parent=0
    #allocation3 [shape = 'u8[1024]{0}', space=vmem, size = 0x400, scoped, tag = 'output window, operand 0']
    #allocation4 [shape = 's32[2]{0}', space=sflag, size = 0x8, scoped, tag = 'scoped memory for forward.1']
    %26 = vsyncpa [#allocation4], 0
    %s27 = scalar_lea.sflag [#allocation4], 1
    %28 = vsyncpa %s27, 0
    loop: start=0, step=1, limit=6
    $region2: #{forward.1} parent=1 // loop_pre_header
      _
    $region3: #{forward.1} parent=1 // loop_header
      %s30 = sphi 0, %s34
      %p31 = scmp.ge.s32.totalorder %s30, 6
      %s37 = sphi 0, %s49
      %s38 = sphi 0, %s45
      %s39 = sphi 0, %s37
      %s40 = sphi 0, %s38
      %s41 = sphi 0, %s39
      %s42 = sphi 0, %s40
      %s52 = sphi 0, %s54
      %s55 = sphi 0, %s52
      %s56 = sphi 0, %s55
      %s72 = sphi 0, %s56
      %s76 = sphi 0, %s76
      %s78 = sphi 0, %s76
      %s79 = sphi 0, %s78
      %s93 = sphi 0, %s79
      %s97 = sphi 0, %s97
      %s99 = sphi 0, %s97
      %s100 = sphi 0, %s99
      %s114 = sphi 0, %s100
      %s120 = sphi 0, %s122
      %s123 = sphi 0, %s120
      %s124 = sphi 0, %s123
      %s140 = sphi 0, %s124
      %s146 = sphi 0, %s148
      %s149 = sphi 0, %s146
      %s150 = sphi 0, %s149
      %s166 = sphi 0, %s150
      %s172 = sphi 0, %s174
      %s175 = sphi 0, %s172
      %s176 = sphi 0, %s175
      %s192 = sphi 0, %s176
      %s198 = sphi 0, %s200
      %s201 = sphi 0, %s198
      %s202 = sphi 0, %s201
      %s218 = sphi 0, %s202
      %s224 = sphi 0, %s226
      %s227 = sphi 0, %s224
      %s228 = sphi 0, %s227
      %s244 = sphi 0, %s228
      %s250 = sphi 0, %s252
      %s253 = sphi 0, %s250
      %s254 = sphi 0, %s253
      %s270 = sphi 0, %s254
      %s276 = sphi 0, %s278
      %s279 = sphi 0, %s276
      %s280 = sphi 0, %s279
      %s296 = sphi 0, %s280
      %s302 = sphi 0, %s304
      %s305 = sphi 0, %s302
      %s306 = sphi 0, %s305
      %s322 = sphi 0, %s306
      %s328 = sphi 0, %s330
      %s331 = sphi 0, %s328
      %s332 = sphi 0, %s331
      %s348 = sphi 0, %s332
      %s354 = sphi 0, %s356
      %s357 = sphi 0, %s354
      %s358 = sphi 0, %s357
      %s374 = sphi 0, %s358
      %s380 = sphi 0, %s382
      %s383 = sphi 0, %s380
      %s384 = sphi 0, %s383
      %s400 = sphi 0, %s384
      %s406 = sphi 0, %s408
      %s409 = sphi 0, %s406
      %s410 = sphi 0, %s409
      %s426 = sphi 0, %s410
      %s430 = sphi 0, %s430
      %s432 = sphi 0, %s430
      %s433 = sphi 0, %s432
      %s447 = sphi 0, %s433
      %s451 = sphi 0, %s451
      %s453 = sphi 0, %s451
      %s454 = sphi 0, %s453
      %s468 = sphi 0, %s454
      %s472 = sphi 0, %s472
      %s474 = sphi 0, %s472
      %s475 = sphi 0, %s474
      %s489 = sphi 0, %s475
      %s493 = sphi 0, %s493
      %s495 = sphi 0, %s493
      %s496 = sphi 0, %s495
      %s510 = sphi 0, %s496
      %s514 = sphi 0, %s514
      %s516 = sphi 0, %s514
      %s517 = sphi 0, %s516
      %s531 = sphi 0, %s517
      %s535 = sphi 0, %s535
      %s537 = sphi 0, %s535
      %s538 = sphi 0, %s537
      %s552 = sphi 0, %s538
      %s558 = sphi 0, %s560
      %s561 = sphi 0, %s558
      %s562 = sphi 0, %s561
      %s578 = sphi 0, %s562
    $region4: #{forward.1} parent=1 // loop_header_branch
      %33 = sbr.rel (%p31) target = $region8
    $region5: #{forward.1} parent=1 // loop_body
      %s35 = ssub.s32 %s30, 1
      %s36 = ssub.s32 %s30, 2
      %s43 = sadd.s32 1, %s38
      %p44 = scmp.ge.s32.totalorder %s43, 2
      %s45 = scalar_select %p44, 0, %s43
      %s46 = sadd.s32 1, %s37
      %s47 = scalar_select %p44, %s46, %s37
      %p48 = scmp.ge.s32.totalorder %s47, 2
      %s49 = scalar_select %p48, 0, %s47
      %s50 = ssub.s32 %s37, %s49
      %p51 = scmp.eq.s32.totalorder %s50, 0
      %s53 = sadd.s32 %s52, 1
      %s54 = scalar_select %p51, %s52, %s53
      %p57 = pneg %p51
      %p58 = scmp.eq.s32.totalorder %s30, 3
      %p59 = por %p57, %p58
      %p60 = scmp.ne.s32.totalorder %s52, %s55
      %p61 = scmp.eq.s32.totalorder %s30, 0
      %p62 = por %p60, %p61
      %p63 = scmp.ne.s32.totalorder %s52, %s55
      %p64 = scmp.eq.s32.totalorder %s35, 3
      %p65 = por %p63, %p64
      %p66 = scmp.ne.s32.totalorder %s55, %s56
      %p67 = scmp.eq.s32.totalorder %s35, 0
      %p68 = por %p66, %p67
      %p69 = scmp.ne.s32.totalorder %s55, %s56
      %p70 = scmp.eq.s32.totalorder %s36, 3
      %p71 = por %p69, %p70
      %p73 = scmp.ne.s32.totalorder %s56, %s72
      %p74 = scmp.eq.s32.totalorder %s36, 0
      %p75 = por %p73, %p74
      %s77 = sadd.s32 %s76, 1
      %p80 = scmp.eq.s32.totalorder %s30, 3
      %p81 = scmp.ne.s32.totalorder %s76, %s78
      %p82 = scmp.eq.s32.totalorder %s30, 0
      %p83 = por %p81, %p82
      %p84 = scmp.ne.s32.totalorder %s76, %s78
      %p85 = scmp.eq.s32.totalorder %s35, 3
      %p86 = por %p84, %p85
      %p87 = scmp.ne.s32.totalorder %s78, %s79
      %p88 = scmp.eq.s32.totalorder %s35, 0
      %p89 = por %p87, %p88
      %p90 = scmp.ne.s32.totalorder %s78, %s79
      %p91 = scmp.eq.s32.totalorder %s36, 3
      %p92 = por %p90, %p91
      %p94 = scmp.ne.s32.totalorder %s79, %s93
      %p95 = scmp.eq.s32.totalorder %s36, 0
      %p96 = por %p94, %p95
      %s98 = sadd.s32 %s97, 1
      %p101 = scmp.eq.s32.totalorder %s30, 3
      %p102 = scmp.ne.s32.totalorder %s97, %s99
      %p103 = scmp.eq.s32.totalorder %s30, 0
      %p104 = por %p102, %p103
      %p105 = scmp.ne.s32.totalorder %s97, %s99
      %p106 = scmp.eq.s32.totalorder %s35, 3
      %p107 = por %p105, %p106
      %p108 = scmp.ne.s32.totalorder %s99, %s100
      %p109 = scmp.eq.s32.totalorder %s35, 0
      %p110 = por %p108, %p109
      %p111 = scmp.ne.s32.totalorder %s99, %s100
      %p112 = scmp.eq.s32.totalorder %s36, 3
      %p113 = por %p111, %p112
      %p115 = scmp.ne.s32.totalorder %s100, %s114
      %p116 = scmp.eq.s32.totalorder %s36, 0
      %p117 = por %p115, %p116
      %s118 = ssub.s32 %s38, %s45
      %p119 = scmp.eq.s32.totalorder %s118, 0
      %s121 = sadd.s32 %s120, 1
      %s122 = scalar_select %p119, %s120, %s121
      %p125 = pneg %p119
      %p126 = scmp.eq.s32.totalorder %s30, 3
      %p127 = por %p125, %p126
      %p128 = scmp.ne.s32.totalorder %s120, %s123
      %p129 = scmp.eq.s32.totalorder %s30, 0
      %p130 = por %p128, %p129
      %p131 = scmp.ne.s32.totalorder %s120, %s123
      %p132 = scmp.eq.s32.totalorder %s35, 3
      %p133 = por %p131, %p132
      %p134 = scmp.ne.s32.totalorder %s123, %s124
      %p135 = scmp.eq.s32.totalorder %s35, 0
      %p136 = por %p134, %p135
      %p137 = scmp.ne.s32.totalorder %s123, %s124
      %p138 = scmp.eq.s32.totalorder %s36, 3
      %p139 = por %p137, %p138
      %p141 = scmp.ne.s32.totalorder %s124, %s140
      %p142 = scmp.eq.s32.totalorder %s36, 0
      %p143 = por %p141, %p142
      %s144 = ssub.s32 %s38, %s45
      %p145 = scmp.eq.s32.totalorder %s144, 0
      %s147 = sadd.s32 %s146, 1
      %s148 = scalar_select %p145, %s146, %s147
      %p151 = pneg %p145
      %p152 = scmp.eq.s32.totalorder %s30, 3
      %p153 = por %p151, %p152
      %p154 = scmp.ne.s32.totalorder %s146, %s149
      %p155 = scmp.eq.s32.totalorder %s30, 0
      %p156 = por %p154, %p155
      %p157 = scmp.ne.s32.totalorder %s146, %s149
      %p158 = scmp.eq.s32.totalorder %s35, 3
      %p159 = por %p157, %p158
      %p160 = scmp.ne.s32.totalorder %s149, %s150
      %p161 = scmp.eq.s32.totalorder %s35, 0
      %p162 = por %p160, %p161
      %p163 = scmp.ne.s32.totalorder %s149, %s150
      %p164 = scmp.eq.s32.totalorder %s36, 3
      %p165 = por %p163, %p164
      %p167 = scmp.ne.s32.totalorder %s150, %s166
      %p168 = scmp.eq.s32.totalorder %s36, 0
      %p169 = por %p167, %p168
      %s170 = ssub.s32 %s38, %s45
      %p171 = scmp.eq.s32.totalorder %s170, 0
      %s173 = sadd.s32 %s172, 1
      %s174 = scalar_select %p171, %s172, %s173
      %p177 = pneg %p171
      %p178 = scmp.eq.s32.totalorder %s30, 3
      %p179 = por %p177, %p178
      %p180 = scmp.ne.s32.totalorder %s172, %s175
      %p181 = scmp.eq.s32.totalorder %s30, 0
      %p182 = por %p180, %p181
      %p183 = scmp.ne.s32.totalorder %s172, %s175
      %p184 = scmp.eq.s32.totalorder %s35, 3
      %p185 = por %p183, %p184
      %p186 = scmp.ne.s32.totalorder %s175, %s176
      %p187 = scmp.eq.s32.totalorder %s35, 0
      %p188 = por %p186, %p187
      %p189 = scmp.ne.s32.totalorder %s175, %s176
      %p190 = scmp.eq.s32.totalorder %s36, 3
      %p191 = por %p189, %p190
      %p193 = scmp.ne.s32.totalorder %s176, %s192
      %p194 = scmp.eq.s32.totalorder %s36, 0
      %p195 = por %p193, %p194
      %s196 = ssub.s32 %s38, %s45
      %p197 = scmp.eq.s32.totalorder %s196, 0
      %s199 = sadd.s32 %s198, 1
      %s200 = scalar_select %p197, %s198, %s199
      %p203 = pneg %p197
      %p204 = scmp.eq.s32.totalorder %s30, 3
      %p205 = por %p203, %p204
      %p206 = scmp.ne.s32.totalorder %s198, %s201
      %p207 = scmp.eq.s32.totalorder %s30, 0
      %p208 = por %p206, %p207
      %p209 = scmp.ne.s32.totalorder %s198, %s201
      %p210 = scmp.eq.s32.totalorder %s35, 3
      %p211 = por %p209, %p210
      %p212 = scmp.ne.s32.totalorder %s201, %s202
      %p213 = scmp.eq.s32.totalorder %s35, 0
      %p214 = por %p212, %p213
      %p215 = scmp.ne.s32.totalorder %s201, %s202
      %p216 = scmp.eq.s32.totalorder %s36, 3
      %p217 = por %p215, %p216
      %p219 = scmp.ne.s32.totalorder %s202, %s218
      %p220 = scmp.eq.s32.totalorder %s36, 0
      %p221 = por %p219, %p220
      %s222 = ssub.s32 %s38, %s45
      %p223 = scmp.eq.s32.totalorder %s222, 0
      %s225 = sadd.s32 %s224, 1
      %s226 = scalar_select %p223, %s224, %s225
      %p229 = pneg %p223
      %p230 = scmp.eq.s32.totalorder %s30, 3
      %p231 = por %p229, %p230
      %p232 = scmp.ne.s32.totalorder %s224, %s227
      %p233 = scmp.eq.s32.totalorder %s30, 0
      %p234 = por %p232, %p233
      %p235 = scmp.ne.s32.totalorder %s224, %s227
      %p236 = scmp.eq.s32.totalorder %s35, 3
      %p237 = por %p235, %p236
      %p238 = scmp.ne.s32.totalorder %s227, %s228
      %p239 = scmp.eq.s32.totalorder %s35, 0
      %p240 = por %p238, %p239
      %p241 = scmp.ne.s32.totalorder %s227, %s228
      %p242 = scmp.eq.s32.totalorder %s36, 3
      %p243 = por %p241, %p242
      %p245 = scmp.ne.s32.totalorder %s228, %s244
      %p246 = scmp.eq.s32.totalorder %s36, 0
      %p247 = por %p245, %p246
      %s248 = ssub.s32 %s38, %s45
      %p249 = scmp.eq.s32.totalorder %s248, 0
      %s251 = sadd.s32 %s250, 1
      %s252 = scalar_select %p249, %s250, %s251
      %p255 = pneg %p249
      %p256 = scmp.eq.s32.totalorder %s30, 3
      %p257 = por %p255, %p256
      %p258 = scmp.ne.s32.totalorder %s250, %s253
      %p259 = scmp.eq.s32.totalorder %s30, 0
      %p260 = por %p258, %p259
      %p261 = scmp.ne.s32.totalorder %s250, %s253
      %p262 = scmp.eq.s32.totalorder %s35, 3
      %p263 = por %p261, %p262
      %p264 = scmp.ne.s32.totalorder %s253, %s254
      %p265 = scmp.eq.s32.totalorder %s35, 0
      %p266 = por %p264, %p265
      %p267 = scmp.ne.s32.totalorder %s253, %s254
      %p268 = scmp.eq.s32.totalorder %s36, 3
      %p269 = por %p267, %p268
      %p271 = scmp.ne.s32.totalorder %s254, %s270
      %p272 = scmp.eq.s32.totalorder %s36, 0
      %p273 = por %p271, %p272
      %s274 = ssub.s32 %s38, %s45
      %p275 = scmp.eq.s32.totalorder %s274, 0
      %s277 = sadd.s32 %s276, 1
      %s278 = scalar_select %p275, %s276, %s277
      %p281 = pneg %p275
      %p282 = scmp.eq.s32.totalorder %s30, 3
      %p283 = por %p281, %p282
      %p284 = scmp.ne.s32.totalorder %s276, %s279
      %p285 = scmp.eq.s32.totalorder %s30, 0
      %p286 = por %p284, %p285
      %p287 = scmp.ne.s32.totalorder %s276, %s279
      %p288 = scmp.eq.s32.totalorder %s35, 3
      %p289 = por %p287, %p288
      %p290 = scmp.ne.s32.totalorder %s279, %s280
      %p291 = scmp.eq.s32.totalorder %s35, 0
      %p292 = por %p290, %p291
      %p293 = scmp.ne.s32.totalorder %s279, %s280
      %p294 = scmp.eq.s32.totalorder %s36, 3
      %p295 = por %p293, %p294
      %p297 = scmp.ne.s32.totalorder %s280, %s296
      %p298 = scmp.eq.s32.totalorder %s36, 0
      %p299 = por %p297, %p298
      %s300 = ssub.s32 %s38, %s45
      %p301 = scmp.eq.s32.totalorder %s300, 0
      %s303 = sadd.s32 %s302, 1
      %s304 = scalar_select %p301, %s302, %s303
      %p307 = pneg %p301
      %p308 = scmp.eq.s32.totalorder %s30, 3
      %p309 = por %p307, %p308
      %p310 = scmp.ne.s32.totalorder %s302, %s305
      %p311 = scmp.eq.s32.totalorder %s30, 0
      %p312 = por %p310, %p311
      %p313 = scmp.ne.s32.totalorder %s302, %s305
      %p314 = scmp.eq.s32.totalorder %s35, 3
      %p315 = por %p313, %p314
      %p316 = scmp.ne.s32.totalorder %s305, %s306
      %p317 = scmp.eq.s32.totalorder %s35, 0
      %p318 = por %p316, %p317
      %p319 = scmp.ne.s32.totalorder %s305, %s306
      %p320 = scmp.eq.s32.totalorder %s36, 3
      %p321 = por %p319, %p320
      %p323 = scmp.ne.s32.totalorder %s306, %s322
      %p324 = scmp.eq.s32.totalorder %s36, 0
      %p325 = por %p323, %p324
      %s326 = ssub.s32 %s38, %s45
      %p327 = scmp.eq.s32.totalorder %s326, 0
      %s329 = sadd.s32 %s328, 1
      %s330 = scalar_select %p327, %s328, %s329
      %p333 = pneg %p327
      %p334 = scmp.eq.s32.totalorder %s30, 3
      %p335 = por %p333, %p334
      %p336 = scmp.ne.s32.totalorder %s328, %s331
      %p337 = scmp.eq.s32.totalorder %s30, 0
      %p338 = por %p336, %p337
      %p339 = scmp.ne.s32.totalorder %s328, %s331
      %p340 = scmp.eq.s32.totalorder %s35, 3
      %p341 = por %p339, %p340
      %p342 = scmp.ne.s32.totalorder %s331, %s332
      %p343 = scmp.eq.s32.totalorder %s35, 0
      %p344 = por %p342, %p343
      %p345 = scmp.ne.s32.totalorder %s331, %s332
      %p346 = scmp.eq.s32.totalorder %s36, 3
      %p347 = por %p345, %p346
      %p349 = scmp.ne.s32.totalorder %s332, %s348
      %p350 = scmp.eq.s32.totalorder %s36, 0
      %p351 = por %p349, %p350
      %s352 = ssub.s32 %s38, %s45
      %p353 = scmp.eq.s32.totalorder %s352, 0
      %s355 = sadd.s32 %s354, 1
      %s356 = scalar_select %p353, %s354, %s355
      %p359 = pneg %p353
      %p360 = scmp.eq.s32.totalorder %s30, 3
      %p361 = por %p359, %p360
      %p362 = scmp.ne.s32.totalorder %s354, %s357
      %p363 = scmp.eq.s32.totalorder %s30, 0
      %p364 = por %p362, %p363
      %p365 = scmp.ne.s32.totalorder %s354, %s357
      %p366 = scmp.eq.s32.totalorder %s35, 3
      %p367 = por %p365, %p366
      %p368 = scmp.ne.s32.totalorder %s357, %s358
      %p369 = scmp.eq.s32.totalorder %s35, 0
      %p370 = por %p368, %p369
      %p371 = scmp.ne.s32.totalorder %s357, %s358
      %p372 = scmp.eq.s32.totalorder %s36, 3
      %p373 = por %p371, %p372
      %p375 = scmp.ne.s32.totalorder %s358, %s374
      %p376 = scmp.eq.s32.totalorder %s36, 0
      %p377 = por %p375, %p376
      %s378 = ssub.s32 %s38, %s45
      %p379 = scmp.eq.s32.totalorder %s378, 0
      %s381 = sadd.s32 %s380, 1
      %s382 = scalar_select %p379, %s380, %s381
      %p385 = pneg %p379
      %p386 = scmp.eq.s32.totalorder %s30, 3
      %p387 = por %p385, %p386
      %p388 = scmp.ne.s32.totalorder %s380, %s383
      %p389 = scmp.eq.s32.totalorder %s30, 0
      %p390 = por %p388, %p389
      %p391 = scmp.ne.s32.totalorder %s380, %s383
      %p392 = scmp.eq.s32.totalorder %s35, 3
      %p393 = por %p391, %p392
      %p394 = scmp.ne.s32.totalorder %s383, %s384
      %p395 = scmp.eq.s32.totalorder %s35, 0
      %p396 = por %p394, %p395
      %p397 = scmp.ne.s32.totalorder %s383, %s384
      %p398 = scmp.eq.s32.totalorder %s36, 3
      %p399 = por %p397, %p398
      %p401 = scmp.ne.s32.totalorder %s384, %s400
      %p402 = scmp.eq.s32.totalorder %s36, 0
      %p403 = por %p401, %p402
      %s404 = ssub.s32 %s38, %s45
      %p405 = scmp.eq.s32.totalorder %s404, 0
      %s407 = sadd.s32 %s406, 1
      %s408 = scalar_select %p405, %s406, %s407
      %p411 = pneg %p405
      %p412 = scmp.eq.s32.totalorder %s30, 3
      %p413 = por %p411, %p412
      %p414 = scmp.ne.s32.totalorder %s406, %s409
      %p415 = scmp.eq.s32.totalorder %s30, 0
      %p416 = por %p414, %p415
      %p417 = scmp.ne.s32.totalorder %s406, %s409
      %p418 = scmp.eq.s32.totalorder %s35, 3
      %p419 = por %p417, %p418
      %p420 = scmp.ne.s32.totalorder %s409, %s410
      %p421 = scmp.eq.s32.totalorder %s35, 0
      %p422 = por %p420, %p421
      %p423 = scmp.ne.s32.totalorder %s409, %s410
      %p424 = scmp.eq.s32.totalorder %s36, 3
      %p425 = por %p423, %p424
      %p427 = scmp.ne.s32.totalorder %s410, %s426
      %p428 = scmp.eq.s32.totalorder %s36, 0
      %p429 = por %p427, %p428
      %s431 = sadd.s32 %s430, 1
      %p434 = scmp.eq.s32.totalorder %s30, 3
      %p435 = scmp.ne.s32.totalorder %s430, %s432
      %p436 = scmp.eq.s32.totalorder %s30, 0
      %p437 = por %p435, %p436
      %p438 = scmp.ne.s32.totalorder %s430, %s432
      %p439 = scmp.eq.s32.totalorder %s35, 3
      %p440 = por %p438, %p439
      %p441 = scmp.ne.s32.totalorder %s432, %s433
      %p442 = scmp.eq.s32.totalorder %s35, 0
      %p443 = por %p441, %p442
      %p444 = scmp.ne.s32.totalorder %s432, %s433
      %p445 = scmp.eq.s32.totalorder %s36, 3
      %p446 = por %p444, %p445
      %p448 = scmp.ne.s32.totalorder %s433, %s447
      %p449 = scmp.eq.s32.totalorder %s36, 0
      %p450 = por %p448, %p449
      %s452 = sadd.s32 %s451, 1
      %p455 = scmp.eq.s32.totalorder %s30, 3
      %p456 = scmp.ne.s32.totalorder %s451, %s453
      %p457 = scmp.eq.s32.totalorder %s30, 0
      %p458 = por %p456, %p457
      %p459 = scmp.ne.s32.totalorder %s451, %s453
      %p460 = scmp.eq.s32.totalorder %s35, 3
      %p461 = por %p459, %p460
      %p462 = scmp.ne.s32.totalorder %s453, %s454
      %p463 = scmp.eq.s32.totalorder %s35, 0
      %p464 = por %p462, %p463
      %p465 = scmp.ne.s32.totalorder %s453, %s454
      %p466 = scmp.eq.s32.totalorder %s36, 3
      %p467 = por %p465, %p466
      %p469 = scmp.ne.s32.totalorder %s454, %s468
      %p470 = scmp.eq.s32.totalorder %s36, 0
      %p471 = por %p469, %p470
      %s473 = sadd.s32 %s472, 1
      %p476 = scmp.eq.s32.totalorder %s30, 3
      %p477 = scmp.ne.s32.totalorder %s472, %s474
      %p478 = scmp.eq.s32.totalorder %s30, 0
      %p479 = por %p477, %p478
      %p480 = scmp.ne.s32.totalorder %s472, %s474
      %p481 = scmp.eq.s32.totalorder %s35, 3
      %p482 = por %p480, %p481
      %p483 = scmp.ne.s32.totalorder %s474, %s475
      %p484 = scmp.eq.s32.totalorder %s35, 0
      %p485 = por %p483, %p484
      %p486 = scmp.ne.s32.totalorder %s474, %s475
      %p487 = scmp.eq.s32.totalorder %s36, 3
      %p488 = por %p486, %p487
      %p490 = scmp.ne.s32.totalorder %s475, %s489
      %p491 = scmp.eq.s32.totalorder %s36, 0
      %p492 = por %p490, %p491
      %s494 = sadd.s32 %s493, 1
      %p497 = scmp.eq.s32.totalorder %s30, 3
      %p498 = scmp.ne.s32.totalorder %s493, %s495
      %p499 = scmp.eq.s32.totalorder %s30, 0
      %p500 = por %p498, %p499
      %p501 = scmp.ne.s32.totalorder %s493, %s495
      %p502 = scmp.eq.s32.totalorder %s35, 3
      %p503 = por %p501, %p502
      %p504 = scmp.ne.s32.totalorder %s495, %s496
      %p505 = scmp.eq.s32.totalorder %s35, 0
      %p506 = por %p504, %p505
      %p507 = scmp.ne.s32.totalorder %s495, %s496
      %p508 = scmp.eq.s32.totalorder %s36, 3
      %p509 = por %p507, %p508
      %p511 = scmp.ne.s32.totalorder %s496, %s510
      %p512 = scmp.eq.s32.totalorder %s36, 0
      %p513 = por %p511, %p512
      %s515 = sadd.s32 %s514, 1
      %p518 = scmp.eq.s32.totalorder %s30, 3
      %p519 = scmp.ne.s32.totalorder %s514, %s516
      %p520 = scmp.eq.s32.totalorder %s30, 0
      %p521 = por %p519, %p520
      %p522 = scmp.ne.s32.totalorder %s514, %s516
      %p523 = scmp.eq.s32.totalorder %s35, 3
      %p524 = por %p522, %p523
      %p525 = scmp.ne.s32.totalorder %s516, %s517
      %p526 = scmp.eq.s32.totalorder %s35, 0
      %p527 = por %p525, %p526
      %p528 = scmp.ne.s32.totalorder %s516, %s517
      %p529 = scmp.eq.s32.totalorder %s36, 3
      %p530 = por %p528, %p529
      %p532 = scmp.ne.s32.totalorder %s517, %s531
      %p533 = scmp.eq.s32.totalorder %s36, 0
      %p534 = por %p532, %p533
      %s536 = sadd.s32 %s535, 1
      %p539 = scmp.eq.s32.totalorder %s30, 3
      %p540 = scmp.ne.s32.totalorder %s535, %s537
      %p541 = scmp.eq.s32.totalorder %s30, 0
      %p542 = por %p540, %p541
      %p543 = scmp.ne.s32.totalorder %s535, %s537
      %p544 = scmp.eq.s32.totalorder %s35, 3
      %p545 = por %p543, %p544
      %p546 = scmp.ne.s32.totalorder %s537, %s538
      %p547 = scmp.eq.s32.totalorder %s35, 0
      %p548 = por %p546, %p547
      %p549 = scmp.ne.s32.totalorder %s537, %s538
      %p550 = scmp.eq.s32.totalorder %s36, 3
      %p551 = por %p549, %p550
      %p553 = scmp.ne.s32.totalorder %s538, %s552
      %p554 = scmp.eq.s32.totalorder %s36, 0
      %p555 = por %p553, %p554
      %s556 = ssub.s32 %s37, %s49
      %p557 = scmp.eq.s32.totalorder %s556, 0
      %s559 = sadd.s32 %s558, 1
      %s560 = scalar_select %p557, %s558, %s559
      %p563 = pneg %p557
      %p564 = scmp.eq.s32.totalorder %s30, 3
      %p565 = por %p563, %p564
      %p566 = scmp.ne.s32.totalorder %s558, %s561
      %p567 = scmp.eq.s32.totalorder %s30, 0
      %p568 = por %p566, %p567
      %p569 = scmp.ne.s32.totalorder %s558, %s561
      %p570 = scmp.eq.s32.totalorder %s35, 3
      %p571 = por %p569, %p570
      %p572 = scmp.ne.s32.totalorder %s561, %s562
      %p573 = scmp.eq.s32.totalorder %s35, 0
      %p574 = por %p572, %p573
      %p575 = scmp.ne.s32.totalorder %s561, %s562
      %p576 = scmp.eq.s32.totalorder %s36, 3
      %p577 = por %p575, %p576
      %p579 = scmp.ne.s32.totalorder %s562, %s578
      %p580 = scmp.eq.s32.totalorder %s36, 0
      %p581 = por %p579, %p580
      %p582 = scmp.le.s32.totalorder 1, %s30
      %p583 = scmp.lt.s32.totalorder %s30, 5
      %p584 = pnand %p582, %p583
      %p585 = pneg %p584
      // Predicated region
      $region9: #{forward.1} parent=5 // pred_check
        _
      $region10: #{forward.1} parent=5 // pred_check_branch
        %587 = sbr.rel (%p584) target = $region12
      $region11: #{forward.1} parent=5 // pred_region
        %s588 = ssub.s32 %s30, 1
        // Predicated region
        $region13: #{forward.1} parent=11 // pred_check
          %p589 = pneg %p89
        $region14: #{forward.1} parent=11 // pred_check_branch
          %591 = sbr.rel (%p589) target = $region16
        $region15: #{forward.1} parent=11 // pred_region
          _
        $region16: #{forward.1} parent=11 // pred_fallthru
          _
        // Predicated region
        $region17: #{forward.1} parent=11 // pred_check
          %p592 = pneg %p110
        $region18: #{forward.1} parent=11 // pred_check_branch
          %594 = sbr.rel (%p592) target = $region20
        $region19: #{forward.1} parent=11 // pred_region
          _
        $region20: #{forward.1} parent=11 // pred_fallthru
          _
        // Predicated region
        $region21: #{forward.1} parent=11 // pred_check
          %p595 = pneg %p443
        $region22: #{forward.1} parent=11 // pred_check_branch
          %597 = sbr.rel (%p595) target = $region24
        $region23: #{forward.1} parent=11 // pred_region
          _
        $region24: #{forward.1} parent=11 // pred_fallthru
          _
        // Predicated region
        $region25: #{forward.1} parent=11 // pred_check
          %p598 = pneg %p464
        $region26: #{forward.1} parent=11 // pred_check_branch
          %600 = sbr.rel (%p598) target = $region28
        $region27: #{forward.1} parent=11 // pred_region
          _
        $region28: #{forward.1} parent=11 // pred_fallthru
          _
        // Predicated region
        $region29: #{forward.1} parent=11 // pred_check
          %p601 = pneg %p485
        $region30: #{forward.1} parent=11 // pred_check_branch
          %603 = sbr.rel (%p601) target = $region32
        $region31: #{forward.1} parent=11 // pred_region
          _
        $region32: #{forward.1} parent=11 // pred_fallthru
          _
        // Predicated region
        $region33: #{forward.1} parent=11 // pred_check
          %p604 = pneg %p506
        $region34: #{forward.1} parent=11 // pred_check_branch
          %606 = sbr.rel (%p604) target = $region36
        $region35: #{forward.1} parent=11 // pred_region
          _
        $region36: #{forward.1} parent=11 // pred_fallthru
          _
        // Predicated region
        $region37: #{forward.1} parent=11 // pred_check
          %p607 = pneg %p527
        $region38: #{forward.1} parent=11 // pred_check_branch
          %609 = sbr.rel (%p607) target = $region40
        $region39: #{forward.1} parent=11 // pred_region
          _
        $region40: #{forward.1} parent=11 // pred_fallthru
          _
        // Predicated region
        $region41: #{forward.1} parent=11 // pred_check
          %p610 = pneg %p548
        $region42: #{forward.1} parent=11 // pred_check_branch
          %612 = sbr.rel (%p610) target = $region44
        $region43: #{forward.1} parent=11 // pred_region
          _
        $region44: #{forward.1} parent=11 // pred_fallthru
          _
      $region12: #{forward.1} parent=5 // pred_fallthru
        _
      %p613 = scmp.lt.s32.totalorder %s30, 4
      // Predicated region
      $region45: #{forward.1} parent=5 // pred_check
        %p614 = pneg %p613
      $region46: #{forward.1} parent=5 // pred_check_branch
        %616 = sbr.rel (%p614) target = $region48
      $region47: #{forward.1} parent=5 // pred_region
        // Predicated region
        $region49: #{forward.1} parent=47 // pred_check
          %p617 = pneg %p62
        $region50: #{forward.1} parent=47 // pred_check_branch
          %619 = sbr.rel (%p617) target = $region52
        $region51: #{forward.1} parent=47 // pred_region
          %p620 = scmp.lt.s32.totalorder %s37, 1
          %s621 = scalar_select %p620, %s37, 1
          %s622 = smul.addr %s621, 3
          %s623 = smul.addr %s622, 8
          %s624 = scalar_lea.vmem %s0, %s623
        $region52: #{forward.1} parent=47 // pred_fallthru
          _
        // Predicated region
        $region53: #{forward.1} parent=47 // pred_check
          %p625 = pneg %p130
        $region54: #{forward.1} parent=47 // pred_check_branch
          %627 = sbr.rel (%p625) target = $region56
        $region55: #{forward.1} parent=47 // pred_region
          %p628 = scmp.lt.s32.totalorder %s38, 1
          %s629 = scalar_select %p628, %s38, 1
          %s630 = scalar_lea.vmem %s3, %s629
        $region56: #{forward.1} parent=47 // pred_fallthru
          _
        // Predicated region
        $region57: #{forward.1} parent=47 // pred_check
          %p631 = pneg %p156
        $region58: #{forward.1} parent=47 // pred_check_branch
          %633 = sbr.rel (%p631) target = $region60
        $region59: #{forward.1} parent=47 // pred_region
          %p634 = scmp.lt.s32.totalorder %s38, 1
          %s635 = scalar_select %p634, %s38, 1
          %s636 = scalar_lea.vmem %s4, %s635
        $region60: #{forward.1} parent=47 // pred_fallthru
          _
        // Predicated region
        $region61: #{forward.1} parent=47 // pred_check
          %p637 = pneg %p182
        $region62: #{forward.1} parent=47 // pred_check_branch
          %639 = sbr.rel (%p637) target = $region64
        $region63: #{forward.1} parent=47 // pred_region
          %p640 = scmp.lt.s32.totalorder %s38, 1
          %s641 = scalar_select %p640, %s38, 1
          %s642 = smul.addr %s641, 16
          %s643 = smul.addr %s642, 4
          %s644 = scalar_lea.vmem %s5, %s643
        $region64: #{forward.1} parent=47 // pred_fallthru
          _
        // Predicated region
        $region65: #{forward.1} parent=47 // pred_check
          %p645 = pneg %p208
        $region66: #{forward.1} parent=47 // pred_check_branch
          %647 = sbr.rel (%p645) target = $region68
        $region67: #{forward.1} parent=47 // pred_region
          %p648 = scmp.lt.s32.totalorder %s38, 1
          %s649 = scalar_select %p648, %s38, 1
          %s650 = smul.addr %s649, 2
          %s651 = scalar_lea.vmem %s6, %s650
        $region68: #{forward.1} parent=47 // pred_fallthru
          _
        // Predicated region
        $region69: #{forward.1} parent=47 // pred_check
          %p652 = pneg %p234
        $region70: #{forward.1} parent=47 // pred_check_branch
          %654 = sbr.rel (%p652) target = $region72
        $region71: #{forward.1} parent=47 // pred_region
          %p655 = scmp.lt.s32.totalorder %s38, 1
          %s656 = scalar_select %p655, %s38, 1
          %s657 = smul.addr %s656, 8
          %s658 = smul.addr %s657, 4
          %s659 = scalar_lea.vmem %s7, %s658
        $region72: #{forward.1} parent=47 // pred_fallthru
          _
        // Predicated region
        $region73: #{forward.1} parent=47 // pred_check
          %p660 = pneg %p260
        $region74: #{forward.1} parent=47 // pred_check_branch
          %662 = sbr.rel (%p660) target = $region76
        $region75: #{forward.1} parent=47 // pred_region
          %p663 = scmp.lt.s32.totalorder %s38, 1
          %s664 = scalar_select %p663, %s38, 1
          %s665 = scalar_lea.vmem %s8, %s664
        $region76: #{forward.1} parent=47 // pred_fallthru
          _
        // Predicated region
        $region77: #{forward.1} parent=47 // pred_check
          %p666 = pneg %p286
        $region78: #{forward.1} parent=47 // pred_check_branch
          %668 = sbr.rel (%p666) target = $region80
        $region79: #{forward.1} parent=47 // pred_region
          %p669 = scmp.lt.s32.totalorder %s38, 1
          %s670 = scalar_select %p669, %s38, 1
          %s671 = scalar_lea.vmem %s9, %s670
        $region80: #{forward.1} parent=47 // pred_fallthru
          _
        // Predicated region
        $region81: #{forward.1} parent=47 // pred_check
          %p672 = pneg %p312
        $region82: #{forward.1} parent=47 // pred_check_branch
          %674 = sbr.rel (%p672) target = $region84
        $region83: #{forward.1} parent=47 // pred_region
          %p675 = scmp.lt.s32.totalorder %s38, 1
          %s676 = scalar_select %p675, %s38, 1
          %s677 = scalar_lea.vmem %s10, %s676
        $region84: #{forward.1} parent=47 // pred_fallthru
          _
        // Predicated region
        $region85: #{forward.1} parent=47 // pred_check
          %p678 = pneg %p338
        $region86: #{forward.1} parent=47 // pred_check_branch
          %680 = sbr.rel (%p678) target = $region88
        $region87: #{forward.1} parent=47 // pred_region
          %p681 = scmp.lt.s32.totalorder %s38, 1
          %s682 = scalar_select %p681, %s38, 1
          %s683 = smul.addr %s682, 16
          %s684 = smul.addr %s683, 4
          %s685 = scalar_lea.vmem %s11, %s684
        $region88: #{forward.1} parent=47 // pred_fallthru
          _
        // Predicated region
        $region89: #{forward.1} parent=47 // pred_check
          %p686 = pneg %p364
        $region90: #{forward.1} parent=47 // pred_check_branch
          %688 = sbr.rel (%p686) target = $region92
        $region91: #{forward.1} parent=47 // pred_region
          %p689 = scmp.lt.s32.totalorder %s38, 1
          %s690 = scalar_select %p689, %s38, 1
          %s691 = smul.addr %s690, 2
          %s692 = scalar_lea.vmem %s12, %s691
        $region92: #{forward.1} parent=47 // pred_fallthru
          _
        // Predicated region
        $region93: #{forward.1} parent=47 // pred_check
          %p693 = pneg %p390
        $region94: #{forward.1} parent=47 // pred_check_branch
          %695 = sbr.rel (%p693) target = $region96
        $region95: #{forward.1} parent=47 // pred_region
          %p696 = scmp.lt.s32.totalorder %s38, 1
          %s697 = scalar_select %p696, %s38, 1
          %s698 = smul.addr %s697, 32
          %s699 = smul.addr %s698, 4
          %s700 = scalar_lea.vmem %s13, %s699
        $region96: #{forward.1} parent=47 // pred_fallthru
          _
        // Predicated region
        $region97: #{forward.1} parent=47 // pred_check
          %p701 = pneg %p416
        $region98: #{forward.1} parent=47 // pred_check_branch
          %703 = sbr.rel (%p701) target = $region100
        $region99: #{forward.1} parent=47 // pred_region
          %p704 = scmp.lt.s32.totalorder %s38, 1
          %s705 = scalar_select %p704, %s38, 1
          %s706 = scalar_lea.vmem %s14, %s705
        $region100: #{forward.1} parent=47 // pred_fallthru
          _
      $region48: #{forward.1} parent=5 // pred_fallthru
        _
      %p707 = scmp.le.s32.totalorder 1, %s30
      %p708 = scmp.lt.s32.totalorder %s30, 5
      %p709 = pnand %p707, %p708
      %p710 = pneg %p709
      // Predicated region
      $region101: #{forward.1} parent=5 // pred_check
        _
      $region102: #{forward.1} parent=5 // pred_check_branch
        %712 = sbr.rel (%p709) target = $region104
      $region103: #{forward.1} parent=5 // pred_region
        %s713 = ssub.s32 %s30, 1
        %p714 = scmp.lt.s32.totalorder %s39, 1
        %s715 = scalar_select %p714, %s39, 1
        %s716 = smul.addr %s715, 3
        %s717 = smul.addr %s716, 8
        %s718 = scalar_lea.vmem %s0, %s717
        %p719 = pneg %p68
        %p720 = pneg %p65
        %p721 = pneg %p89
        %p722 = pneg %p86
        %p723 = pneg %p110
        %p724 = pneg %p107
        %p725 = scmp.lt.s32.totalorder %s40, 1
        %s726 = scalar_select %p725, %s40, 1
        %s727 = scalar_lea.vmem %s3, %s726
        %p728 = pneg %p136
        %p729 = pneg %p133
        %p730 = scmp.lt.s32.totalorder %s40, 1
        %s731 = scalar_select %p730, %s40, 1
        %s732 = scalar_lea.vmem %s4, %s731
        %p733 = pneg %p162
        %p734 = pneg %p159
        %p735 = scmp.lt.s32.totalorder %s40, 1
        %s736 = scalar_select %p735, %s40, 1
        %s737 = smul.addr %s736, 16
        %s738 = smul.addr %s737, 4
        %s739 = scalar_lea.vmem %s5, %s738
        %p740 = pneg %p188
        %p741 = pneg %p185
        %p742 = scmp.lt.s32.totalorder %s40, 1
        %s743 = scalar_select %p742, %s40, 1
        %s744 = smul.addr %s743, 2
        %s745 = scalar_lea.vmem %s6, %s744
        %p746 = pneg %p214
        %p747 = pneg %p211
        %p748 = scmp.lt.s32.totalorder %s40, 1
        %s749 = scalar_select %p748, %s40, 1
        %s750 = smul.addr %s749, 8
        %s751 = smul.addr %s750, 4
        %s752 = scalar_lea.vmem %s7, %s751
        %p753 = pneg %p240
        %p754 = pneg %p237
        %p755 = scmp.lt.s32.totalorder %s40, 1
        %s756 = scalar_select %p755, %s40, 1
        %s757 = scalar_lea.vmem %s8, %s756
        %p758 = pneg %p266
        %p759 = pneg %p263
        %p760 = scmp.lt.s32.totalorder %s40, 1
        %s761 = scalar_select %p760, %s40, 1
        %s762 = scalar_lea.vmem %s9, %s761
        %p763 = pneg %p292
        %p764 = pneg %p289
        %p765 = scmp.lt.s32.totalorder %s40, 1
        %s766 = scalar_select %p765, %s40, 1
        %s767 = scalar_lea.vmem %s10, %s766
        %p768 = pneg %p318
        %p769 = pneg %p315
        %p770 = scmp.lt.s32.totalorder %s40, 1
        %s771 = scalar_select %p770, %s40, 1
        %s772 = smul.addr %s771, 16
        %s773 = smul.addr %s772, 4
        %s774 = scalar_lea.vmem %s11, %s773
        %p775 = pneg %p344
        %p776 = pneg %p341
        %p777 = scmp.lt.s32.totalorder %s40, 1
        %s778 = scalar_select %p777, %s40, 1
        %s779 = smul.addr %s778, 2
        %s780 = scalar_lea.vmem %s12, %s779
        %p781 = pneg %p370
        %p782 = pneg %p367
        %p783 = scmp.lt.s32.totalorder %s40, 1
        %s784 = scalar_select %p783, %s40, 1
        %s785 = smul.addr %s784, 32
        %s786 = smul.addr %s785, 4
        %s787 = scalar_lea.vmem %s13, %s786
        %p788 = pneg %p396
        %p789 = pneg %p393
        %p790 = scmp.lt.s32.totalorder %s40, 1
        %s791 = scalar_select %p790, %s40, 1
        %s792 = scalar_lea.vmem %s14, %s791
        %p793 = pneg %p422
        %p794 = pneg %p419
        %p795 = pneg %p443
        %p796 = pneg %p440
        %p797 = pneg %p464
        %p798 = pneg %p461
        %p799 = pneg %p485
        %p800 = pneg %p482
        %p801 = pneg %p506
        %p802 = pneg %p503
        %p803 = pneg %p527
        %p804 = pneg %p524
        %p805 = pneg %p548
        %p806 = pneg %p545
        %p807 = pneg %p574
        %p808 = pneg %p571
        %s809 = sand.u32 %s561, 1
        %s810 = scalar_lea.sflag [#allocation4], %s809
        %s811 = sand.u32 %s561, 1
        %s812 = scalar_lea.vmem [#allocation3], %s811
        %p813 = scmp.lt.s32.totalorder %s39, 1
        %s814 = scalar_select %p813, %s39, 1
        %s815 = smul.addr %s814, 3
        %s816 = smul.addr %s815, 8
        %s817 = scalar_lea.vmem %s0, %s816
        %p818 = scmp.lt.s32.totalorder %s40, 1
        %s819 = scalar_select %p818, %s40, 1
        %s820 = scalar_lea.vmem %s3, %s819
        %p821 = scmp.lt.s32.totalorder %s40, 1
        %s822 = scalar_select %p821, %s40, 1
        %s823 = scalar_lea.vmem %s4, %s822
        %p824 = scmp.lt.s32.totalorder %s40, 1
        %s825 = scalar_select %p824, %s40, 1
        %s826 = smul.addr %s825, 16
        %s827 = smul.addr %s826, 4
        %s828 = scalar_lea.vmem %s5, %s827
        %p829 = scmp.lt.s32.totalorder %s40, 1
        %s830 = scalar_select %p829, %s40, 1
        %s831 = smul.addr %s830, 2
        %s832 = scalar_lea.vmem %s6, %s831
        %p833 = scmp.lt.s32.totalorder %s40, 1
        %s834 = scalar_select %p833, %s40, 1
        %s835 = smul.addr %s834, 8
        %s836 = smul.addr %s835, 4
        %s837 = scalar_lea.vmem %s7, %s836
        %p838 = scmp.lt.s32.totalorder %s40, 1
        %s839 = scalar_select %p838, %s40, 1
        %s840 = scalar_lea.vmem %s8, %s839
        %p841 = scmp.lt.s32.totalorder %s40, 1
        %s842 = scalar_select %p841, %s40, 1
        %s843 = scalar_lea.vmem %s9, %s842
        %p844 = scmp.lt.s32.totalorder %s40, 1
        %s845 = scalar_select %p844, %s40, 1
        %s846 = scalar_lea.vmem %s10, %s845
        %p847 = scmp.lt.s32.totalorder %s40, 1
        %s848 = scalar_select %p847, %s40, 1
        %s849 = smul.addr %s848, 16
        %s850 = smul.addr %s849, 4
        %s851 = scalar_lea.vmem %s11, %s850
        %p852 = scmp.lt.s32.totalorder %s40, 1
        %s853 = scalar_select %p852, %s40, 1
        %s854 = smul.addr %s853, 2
        %s855 = scalar_lea.vmem %s12, %s854
        %p856 = scmp.lt.s32.totalorder %s40, 1
        %s857 = scalar_select %p856, %s40, 1
        %s858 = smul.addr %s857, 32
        %s859 = smul.addr %s858, 4
        %s860 = scalar_lea.vmem %s13, %s859
        %p861 = scmp.lt.s32.totalorder %s40, 1
        %s862 = scalar_select %p861, %s40, 1
        %s863 = scalar_lea.vmem %s14, %s862
        %p865 = scmp.eq.s32.totalorder %s40, 0
        // Predicated region
        $region105: #{forward.1} parent=103 // pred_check
          %p866 = pneg %p865
        $region106: #{forward.1} parent=103 // pred_check_branch
          %868 = sbr.rel (%p866) target = $region108
        $region107: #{forward.1} parent=103 // pred_region
          %v869 = vld [vmem:[%s817] sm:$0xff]
          %v870 = vld [vmem:[%s817 + $0x8] sm:$0xff]
          %v871 = vld [vmem:[%s817 + $0x10] sm:$0xff]
          %v872 = vpack.c.bf16 %v870, %v869
          %v873 = vpack.c.bf16 %v871, %v871
          %v874 = vld [vmem:[%s1] sm:$0xf]
          %v875 = vld [vmem:[%s1 + $0x4] sm:$0xf]
          %v876 = vld [vmem:[%s1 + $0x8] sm:$0xf]
          %v877 = vld [vmem:[%s1 + $0xc] sm:$0xf]
          %v878 = vld [vmem:[%s1 + $0x10] sm:$0xf]
          %v879 = vld [vmem:[%s1 + $0x14] sm:$0xf]
          %v886 = vunpack.c.l.b16 %v874
          %v887 = vunpack.c.l.b16 %v875
          %v888 = vunpack.c.l.b16 %v876
          %v889 = vunpack.c.l.b16 %v877
          %v890 = vunpack.c.l.b16 %v878
          %v891 = vunpack.c.l.b16 %v879
          %v892 = vpack.c.b16 %v887, %v886
          %v893 = vpack.c.b16 %v889, %v888
          %v894 = vpack.c.b16 %v891, %v890
          %vm898 = vcmask 392192
          %v900 = vsel %vm898, %v872, 0
          %v903 = vsel %vm898, %v873, 0
          %905 = vmatprep.subr.bf16.mxu0 0
          %906 = vmatpush1.bf16.msra.mxu0 %v892
          %907 = vmatprep.subr.bf16.mxu0 0
          %908 = vmatpush1.bf16.msra.mxu0 %v893
          %909 = vmatprep.subr.bf16.mxu0 0
          %910 = vmatpush1.bf16.msra.mxu0 %v894
          %911 = vmatprep.subr.bf16.mxu0 0
          %912 = vmatpush1.bf16.msra.mxu0 0
          %913 = vmatprep.subr.bf16.mxu0 0
          %914 = vmatpush1.bf16.msra.mxu0 0
          %915 = vmatprep.subr.bf16.mxu0 0
          %916 = vmatpush1.bf16.msra.mxu0 0
          %917 = vmatprep.subr.bf16.mxu0 0
          %918 = vmatpush1.bf16.msra.mxu0 0
          %919 = vmatprep.subr.bf16.mxu0 0
          %920 = vmatpush1.bf16.msra.mxu0 0
          %921 = vmatprep.subr.bf16.mxu0 0
          %922 = vmatpush1.bf16.msra.mxu0 0
          %923 = vmatprep.subr.bf16.mxu0 0
          %924 = vmatpush1.bf16.msra.mxu0 0
          %925 = vmatprep.subr.bf16.mxu0 0
          %926 = vmatpush1.bf16.msra.mxu0 0
          %927 = vmatprep.subr.bf16.mxu0 0
          %928 = vmatpush1.bf16.msra.mxu0 0
          %929 = vmatprep.subr.bf16.mxu0 0
          %930 = vmatpush1.bf16.msra.mxu0 0
          %931 = vmatprep.subr.bf16.mxu0 0
          %932 = vmatpush1.bf16.msra.mxu0 0
          %933 = vmatprep.subr.bf16.mxu0 0
          %934 = vmatpush1.bf16.msra.mxu0 0
          %935 = vmatprep.subr.bf16.mxu0 0
          %936 = vmatpush1.bf16.msra.mxu0 0
          %937 = vmatprep.mubr.bf16.mxu0 0
          %938 = vmatmul.mubr.bf16.gmra.mrb[0].mxu0 %v900
          %v939 = vpop.f32.mrb[0].mxu0
          %v940 = vadd.f32 0.0, %v939
          %v941 = vpop.f32.mrb[0].mxu0
          %v942 = vpop.f32.mrb[0].mxu0
          %v943 = vadd.f32 0.0, %v942
          %v944 = vpop.f32.mrb[0].mxu0
          %945 = vmatprep.mubr.bf16.mxu0 0
          %946 = vmatmul.mubr.bf16.gmra.mrb[0].mxu0 %v903
          %v947 = vpop.f32.mrb[0].mxu0
          %v948 = vadd.f32 0.0, %v947
          %v949 = vpop.f32.mrb[0].mxu0
          %v950 = vpop.f32.mrb[0].mxu0
          %v951 = vpop.f32.mrb[0].mxu0
          %952 = vdwg.mxu0
          %v953 = vld [vmem:[%s2] sm:$0xff]
          %v954 = vld [vmem:[%s2 + $0x8] sm:$0xff]
          %v955 = vld [vmem:[%s2 + $0x10] sm:$0xff]
          %v956 = vadd.f32 %v953, %v940
          %v957 = vadd.f32 %v954, %v943
          %v958 = vadd.f32 %v955, %v948
          %vm959 = vcmask 523264
          %960 = vst.msk [vmem:[#allocation2] sm:$0xff] %vm959, %v956
          %961 = vst.msk [vmem:[#allocation2 + $0x8] sm:$0xff] %vm959, %v957
          %962 = vst.msk [vmem:[#allocation2 + $0x10] sm:$0xff] %vm959, %v958
        $region108: #{forward.1} parent=103 // pred_fallthru
          _
        %v963 = vld [vmem:[#allocation2] sm:$0xff]
        %v964 = vld [vmem:[#allocation2 + $0x8] sm:$0xff]
        %v965 = vld [vmem:[#allocation2 + $0x10] sm:$0xff]
        %v966 = vld [vmem:[%s820] sm:$0x1]
        %v967 = vld [vmem:[%s823] sm:$0x1]
        %vm968 = vcmask 523264
        %v969 = vsel %vm968, %v963, 0.0
        %970 = vadd.xlane.f32.xlu0 %v969
        %v971 = vpop.xlane.xlu0 %970
        %v972 = vsel %vm968, %v964, 0.0
        %973 = vadd.xlane.f32.xlu0 %v972
        %v974 = vpop.xlane.xlu0 %973
        %v975 = vsel %vm968, %v965, 0.0
        %976 = vadd.xlane.f32.xlu0 %v975
        %v977 = vpop.xlane.xlu0 %976
        %v978 = vrcp.pop 64.0
        %v979 = vmul.f32 %v971, %v978
        %v980 = vmul.f32 %v974, %v978
        %v981 = vmul.f32 %v977, %v978
        %v982 = vsub.f32 %v963, %v979
        %v983 = vsub.f32 %v964, %v980
        %v984 = vsub.f32 %v965, %v981
        %v985 = vmul.f32 %v982, %v982
        %v986 = vmul.f32 %v983, %v983
        %v987 = vmul.f32 %v984, %v984
        %v988 = vsel %vm968, %v985, 0.0
        %989 = vadd.xlane.f32.xlu0 %v988
        %v990 = vpop.xlane.xlu0 %989
        %v991 = vsel %vm968, %v986, 0.0
        %992 = vadd.xlane.f32.xlu0 %v991
        %v993 = vpop.xlane.xlu0 %992
        %v994 = vsel %vm968, %v987, 0.0
        %995 = vadd.xlane.f32.xlu0 %v994
        %v996 = vpop.xlane.xlu0 %995
        %v997 = vmul.f32 %v990, %v978
        %v998 = vmul.f32 %v993, %v978
        %v999 = vmul.f32 %v996, %v978
        %v1000 = vadd.f32 %v997, 1e-05
        %v1001 = vadd.f32 %v998, 1e-05
        %v1002 = vadd.f32 %v999, 1e-05
        %v1003 = vrsqrt.pop %v1000
        %v1004 = vrsqrt.pop %v1001
        %v1005 = vrsqrt.pop %v1002
        %v1006 = vmul.f32 %v982, %v1003
        %v1007 = vmul.f32 %v983, %v1004
        %v1008 = vmul.f32 %v984, %v1005
        %v1010 = vlaneseq
        %v1011 = vshrl.u32 %v1010, 7
        %v1012 = vsub.s32 0, %v1011
        %v1013 = vrot.slane %v966, %v1012
        %v1015 = vmul.f32 %v1006, %v1013
        %v1016 = vmul.f32 %v1007, %v1013
        %v1017 = vmul.f32 %v1008, %v1013
        %v1019 = vlaneseq
        %v1020 = vshrl.u32 %v1019, 7
        %v1021 = vsub.s32 0, %v1020
        %v1022 = vrot.slane %v967, %v1021
        %v1024 = vadd.f32 %v1015, %v1022
        %v1025 = vadd.f32 %v1016, %v1022
        %v1026 = vadd.f32 %v1017, %v1022
        %v1027 = vpack.c.bf16 %v1025, %v1024
        %v1028 = vpack.c.bf16 %v1026, %v1026
        %v1029 = vld [vmem:[%s828] sm:$0xff]
        %v1030 = vld [vmem:[%s828 + $0x8] sm:$0xff]
        %v1031 = vld [vmem:[%s828 + $0x10] sm:$0xff]
        %v1032 = vld [vmem:[%s828 + $0x18] sm:$0xff]
        %v1033 = vld [vmem:[%s828 + $0x20] sm:$0xff]
        %v1034 = vld [vmem:[%s828 + $0x28] sm:$0xff]
        %v1035 = vld [vmem:[%s828 + $0x30] sm:$0xff]
        %v1036 = vld [vmem:[%s828 + $0x38] sm:$0xff]
        %v1037 = vld [vmem:[%s832] sm:$0x3]
        %v1039 = vlaneseq
        %v1040 = vshrl.u32 %v1039, 7
        %v1041 = vsub.s32 0, %v1040
        %v1042 = vrot.slane %v1037, %v1041
        %v1043 = vlaneseq
        %v1044 = vshrl.u32 %v1043, 7
        %v1045 = vsub.s32 1, %v1044
        %v1046 = vrot.slane %v1037, %v1045
        %v1057 = vunpack.c.l.b16 %v1029
        %v1058 = vunpack.c.h.b16 %v1029
        %v1059 = vunpack.c.l.b16 %v1030
        %v1060 = vunpack.c.h.b16 %v1030
        %v1061 = vunpack.c.l.b16 %v1031
        %v1062 = vunpack.c.h.b16 %v1031
        %v1063 = vunpack.c.l.b16 %v1032
        %v1064 = vunpack.c.h.b16 %v1032
        %v1065 = vunpack.c.l.b16 %v1033
        %v1066 = vunpack.c.h.b16 %v1033
        %v1067 = vunpack.c.l.b16 %v1034
        %v1068 = vunpack.c.h.b16 %v1034
        %v1069 = vunpack.c.l.b16 %v1035
        %v1070 = vunpack.c.h.b16 %v1035
        %v1071 = vunpack.c.l.b16 %v1036
        %v1072 = vunpack.c.h.b16 %v1036
        %v1073 = vpack.c.b16 %v1059, %v1057
        %v1074 = vpack.c.b16 %v1060, %v1058
        %v1075 = vpack.c.b16 %v1063, %v1061
        %v1076 = vpack.c.b16 %v1064, %v1062
        %v1077 = vpack.c.b16 %v1067, %v1065
        %v1078 = vpack.c.b16 %v1068, %v1066
        %v1079 = vpack.c.b16 %v1071, %v1069
        %v1080 = vpack.c.b16 %v1072, %v1070
        %v1090 = vsel %vm968, %v1027, 0
        %v1093 = vsel %vm968, %v1028, 0
        %1095 = vmatprep.subr.bf16.mxu0 %v1074
        %1096 = vmatpush1.bf16.msra.mxu0 %v1073
        %1097 = vmatprep.subr.bf16.mxu0 %v1076
        %1098 = vmatpush1.bf16.msra.mxu0 %v1075
        %1099 = vmatprep.subr.bf16.mxu0 %v1078
        %1100 = vmatpush1.bf16.msra.mxu0 %v1077
        %1101 = vmatprep.subr.bf16.mxu0 %v1080
        %1102 = vmatpush1.bf16.msra.mxu0 %v1079
        %1103 = vmatprep.subr.bf16.mxu0 0
        %1104 = vmatpush1.bf16.msra.mxu0 0
        %1105 = vmatprep.subr.bf16.mxu0 0
        %1106 = vmatpush1.bf16.msra.mxu0 0
        %1107 = vmatprep.subr.bf16.mxu0 0
        %1108 = vmatpush1.bf16.msra.mxu0 0
        %1109 = vmatprep.subr.bf16.mxu0 0
        %1110 = vmatpush1.bf16.msra.mxu0 0
        %1111 = vmatprep.subr.bf16.mxu0 0
        %1112 = vmatpush1.bf16.msra.mxu0 0
        %1113 = vmatprep.subr.bf16.mxu0 0
        %1114 = vmatpush1.bf16.msra.mxu0 0
        %1115 = vmatprep.subr.bf16.mxu0 0
        %1116 = vmatpush1.bf16.msra.mxu0 0
        %1117 = vmatprep.subr.bf16.mxu0 0
        %1118 = vmatpush1.bf16.msra.mxu0 0
        %1119 = vmatprep.subr.bf16.mxu0 0
        %1120 = vmatpush1.bf16.msra.mxu0 0
        %1121 = vmatprep.subr.bf16.mxu0 0
        %1122 = vmatpush1.bf16.msra.mxu0 0
        %1123 = vmatprep.subr.bf16.mxu0 0
        %1124 = vmatpush1.bf16.msra.mxu0 0
        %1125 = vmatprep.subr.bf16.mxu0 0
        %1126 = vmatpush1.bf16.msra.mxu0 0
        %1127 = vmatprep.mubr.bf16.mxu0 0
        %1128 = vmatmul.mubr.bf16.gmra.mrb[0].mxu0 %v1090
        %v1129 = vpop.f32.mrb[0].mxu0
        %v1130 = vadd.f32 %v1042, %v1129
        %v1131 = vpop.f32.mrb[0].mxu0
        %v1132 = vadd.f32 %v1046, %v1131
        %v1133 = vpop.f32.mrb[0].mxu0
        %v1134 = vadd.f32 %v1042, %v1133
        %v1135 = vpop.f32.mrb[0].mxu0
        %v1136 = vadd.f32 %v1046, %v1135
        %1137 = vmatprep.mubr.bf16.mxu0 0
        %1138 = vmatmul.mubr.bf16.gmra.mrb[0].mxu0 %v1093
        %v1139 = vpop.f32.mrb[0].mxu0
        %v1140 = vadd.f32 %v1042, %v1139
        %v1141 = vpop.f32.mrb[0].mxu0
        %v1142 = vadd.f32 %v1046, %v1141
        %v1143 = vpop.f32.mrb[0].mxu0
        %v1144 = vpop.f32.mrb[0].mxu0
        %1145 = vdwg.mxu0
        %v1146 = vld [vmem:[%s837] sm:$0xf]
        %v1147 = vld [vmem:[%s837 + $0x4] sm:$0xf]
        %v1148 = vld [vmem:[%s837 + $0x8] sm:$0xf]
        %v1149 = vld [vmem:[%s837 + $0xc] sm:$0xf]
        %v1150 = vld [vmem:[%s837 + $0x10] sm:$0xf]
        %v1151 = vld [vmem:[%s837 + $0x14] sm:$0xf]
        %v1152 = vld [vmem:[%s837 + $0x18] sm:$0xf]
        %v1153 = vld [vmem:[%s837 + $0x1c] sm:$0xf]
        %v1154 = vpack.c.bf16 %v1134, %v1130
        %v1155 = vpack.c.bf16 %v1140, %v1140
        %v1156 = vpack.c.bf16 %v1136, %v1132
        %v1157 = vpack.c.bf16 %v1142, %v1142
        %1160 = vrot.lane.b32.xlu0 %v1154, 64
        %v1161 = vpop.permute.xlu0 %1160
        %1162 = vrot.lane.b32.xlu0 %v1155, 64
        %v1163 = vpop.permute.xlu0 %1162
        %vm1164 = vcmask 130048
        %v1166 = vsel %vm1164, %v1154, 0
        %v1169 = vsel %vm1164, %v1155, 0
        %v1172 = vsel %vm1164, %v1161, 0
        %v1175 = vsel %vm1164, %v1163, 0
        %1177 = vmatprep.subr.bf16.mxu0 0
        %1178 = vmatpush1.bf16.xpose.msra.mxu0 %v1172
        %1179 = vmatprep.subr.bf16.mxu0 0
        %1180 = vmatpush1.bf16.xpose.msra.mxu0 %v1175
        %1181 = vmatprep.subr.bf16.mxu0 0
        %1182 = vmatpush1.bf16.xpose.msra.mxu0 0
        %1183 = vmatprep.subr.bf16.mxu0 0
        %1184 = vmatpush1.bf16.xpose.msra.mxu0 0
        %1185 = vmatprep.subr.bf16.mxu0 0
        %1186 = vmatpush1.bf16.xpose.msra.mxu0 0
        %1187 = vmatprep.subr.bf16.mxu0 0
        %1188 = vmatpush1.bf16.xpose.msra.mxu0 0
        %1189 = vmatprep.subr.bf16.mxu0 0
        %1190 = vmatpush1.bf16.xpose.msra.mxu0 0
        %1191 = vmatprep.subr.bf16.mxu0 0
        %1192 = vmatpush1.bf16.xpose.msra.mxu0 0
        %1193 = vmatprep.subr.bf16.mxu0 0
        %1194 = vmatpush1.bf16.xpose.msra.mxu0 0
        %1195 = vmatprep.subr.bf16.mxu0 0
        %1196 = vmatpush1.bf16.xpose.msra.mxu0 0
        %1197 = vmatprep.subr.bf16.mxu0 0
        %1198 = vmatpush1.bf16.xpose.msra.mxu0 0
        %1199 = vmatprep.subr.bf16.mxu0 0
        %1200 = vmatpush1.bf16.xpose.msra.mxu0 0
        %1201 = vmatprep.subr.bf16.mxu0 0
        %1202 = vmatpush1.bf16.xpose.msra.mxu0 0
        %1203 = vmatprep.subr.bf16.mxu0 0
        %1204 = vmatpush1.bf16.xpose.msra.mxu0 0
        %1205 = vmatprep.subr.bf16.mxu0 0
        %1206 = vmatpush1.bf16.xpose.msra.mxu0 0
        %1207 = vmatprep.subr.bf16.mxu0 0
        %1208 = vmatpush1.bf16.xpose.msra.mxu0 0
        %1209 = vmatprep.mubr.bf16.mxu0 0
        %1210 = vmatmul.mubr.bf16.gmra.mrb[0].mxu0 %v1166
        %v1211 = vpop.f32.mrb[0].mxu0
        %v1212 = vadd.f32 0.0, %v1211
        %v1213 = vpop.f32.mrb[0].mxu0
        %v1214 = vpop.f32.mrb[0].mxu0
        %v1215 = vadd.f32 0.0, %v1214
        %v1216 = vpop.f32.mrb[0].mxu0
        %1217 = vmatprep.mubr.bf16.mxu0 0
        %1218 = vmatmul.mubr.bf16.gmra.mrb[0].mxu0 %v1169
        %v1219 = vpop.f32.mrb[0].mxu0
        %v1220 = vadd.f32 0.0, %v1219
        %v1221 = vpop.f32.mrb[0].mxu0
        %v1222 = vpop.f32.mrb[0].mxu0
        %v1223 = vpop.f32.mrb[0].mxu0
        %1224 = vdwg.mxu0
        %v1225 = vmul.f32 %v1212, 0.25
        %v1226 = vmul.f32 %v1215, 0.25
        %v1227 = vmul.f32 %v1220, 0.25
        %vm1228 = vcmask 138240
        %v1229 = vsel %vm1228, %v1225, -inf
        %1230 = vmax.xlane.f32.xlu0 %v1229
        %v1231 = vpop.xlane.xlu0 %1230
        %v1232 = vsel %vm1228, %v1226, -inf
        %1233 = vmax.xlane.f32.xlu0 %v1232
        %v1234 = vpop.xlane.xlu0 %1233
        %v1235 = vsel %vm1228, %v1227, -inf
        %1236 = vmax.xlane.f32.xlu0 %v1235
        %v1237 = vpop.xlane.xlu0 %1236
        %v1238 = vsub.f32 %v1225, %v1231
        %v1239 = vsub.f32 %v1226, %v1234
        %v1240 = vsub.f32 %v1227, %v1237
        %v1241 = vmul.f32 %v1238, 1.442695
        %v1242 = vpow.pop %v1241
        %v1243 = vmul.f32 %v1239, 1.442695
        %v1244 = vpow.pop %v1243
        %v1245 = vmul.f32 %v1240, 1.442695
        %v1246 = vpow.pop %v1245
        %v1247 = vsel %vm1228, %v1242, 0.0
        %1248 = vadd.xlane.f32.xlu0 %v1247
        %v1249 = vpop.xlane.xlu0 %1248
        %v1250 = vsel %vm1228, %v1244, 0.0
        %1251 = vadd.xlane.f32.xlu0 %v1250
        %v1252 = vpop.xlane.xlu0 %1251
        %v1253 = vsel %vm1228, %v1246, 0.0
        %1254 = vadd.xlane.f32.xlu0 %v1253
        %v1255 = vpop.xlane.xlu0 %1254
        %v1256 = vrcp.pop %v1249
        %v1257 = vrcp.pop %v1252
        %v1258 = vrcp.pop %v1255
        %v1259 = vmul.f32 %v1242, %v1256
        %v1260 = vmul.f32 %v1244, %v1257
        %v1261 = vmul.f32 %v1246, %v1258
        %v1262 = vpack.c.bf16 %v1260, %v1259
        %v1263 = vpack.c.bf16 %v1261, %v1261
        %v1265 = vsel %vm1228, %v1262, 0
        %v1268 = vsel %vm1228, %v1263, 0
        %vm1270 = vcmask 1040384
        %v1271 = vsel 0, 4294967295, 65535
        %v1272 = vsel %vm1270, %v1271, 0
        %v1274 = vand.u32 %v1157, %v1272
        %1276 = vmatprep.subr.bf16.mxu0 0
        %1277 = vmatpush1.bf16.msra.mxu0 %v1156
        %1278 = vmatprep.subr.bf16.mxu0 0
        %1279 = vmatpush1.bf16.msra.mxu0 %v1274
        %1280 = vmatprep.subr.bf16.mxu0 0
        %1281 = vmatpush1.bf16.msra.mxu0 0
        %1282 = vmatprep.subr.bf16.mxu0 0
        %1283 = vmatpush1.bf16.msra.mxu0 0
        %1284 = vmatprep.subr.bf16.mxu0 0
        %1285 = vmatpush1.bf16.msra.mxu0 0
        %1286 = vmatprep.subr.bf16.mxu0 0
        %1287 = vmatpush1.bf16.msra.mxu0 0
        %1288 = vmatprep.subr.bf16.mxu0 0
        %1289 = vmatpush1.bf16.msra.mxu0 0
        %1290 = vmatprep.subr.bf16.mxu0 0
        %1291 = vmatpush1.bf16.msra.mxu0 0
        %1292 = vmatprep.subr.bf16.mxu0 0
        %1293 = vmatpush1.bf16.msra.mxu0 0
        %1294 = vmatprep.subr.bf16.mxu0 0
        %1295 = vmatpush1.bf16.msra.mxu0 0
        %1296 = vmatprep.subr.bf16.mxu0 0
        %1297 = vmatpush1.bf16.msra.mxu0 0
        %1298 = vmatprep.subr.bf16.mxu0 0
        %1299 = vmatpush1.bf16.msra.mxu0 0
        %1300 = vmatprep.subr.bf16.mxu0 0
        %1301 = vmatpush1.bf16.msra.mxu0 0
        %1302 = vmatprep.subr.bf16.mxu0 0
        %1303 = vmatpush1.bf16.msra.mxu0 0
        %1304 = vmatprep.subr.bf16.mxu0 0
        %1305 = vmatpush1.bf16.msra.mxu0 0
        %1306 = vmatprep.subr.bf16.mxu0 0
        %1307 = vmatpush1.bf16.msra.mxu0 0
        %1308 = vmatprep.mubr.bf16.mxu0 0
        %1309 = vmatmul.mubr.bf16.gmra.mrb[0].mxu0 %v1265
        %v1310 = vpop.f32.mrb[0].mxu0
        %v1311 = vadd.f32 0.0, %v1310
        %v1312 = vpop.f32.mrb[0].mxu0
        %v1313 = vpop.f32.mrb[0].mxu0
        %v1314 = vadd.f32 0.0, %v1313
        %v1315 = vpop.f32.mrb[0].mxu0
        %1316 = vmatprep.mubr.bf16.mxu0 0
        %1317 = vmatmul.mubr.bf16.gmra.mrb[0].mxu0 %v1268
        %v1318 = vpop.f32.mrb[0].mxu0
        %v1319 = vadd.f32 0.0, %v1318
        %v1320 = vpop.f32.mrb[0].mxu0
        %v1321 = vpop.f32.mrb[0].mxu0
        %v1322 = vpop.f32.mrb[0].mxu0
        %1323 = vdwg.mxu0
        %v1324 = vpack.c.bf16 %v1314, %v1311
        %v1325 = vpack.c.bf16 %v1319, %v1319
        %1326 = vrot.lane.b32.xlu0 %v1154, 112
        %v1327 = vpop.permute.xlu0 %1326
        %1328 = vrot.lane.b32.xlu0 %v1155, 112
        %v1329 = vpop.permute.xlu0 %1328
        %1330 = vrot.lane.b32.xlu0 %v1154, 48
        %v1331 = vpop.permute.xlu0 %1330
        %1332 = vrot.lane.b32.xlu0 %v1155, 48
        %v1333 = vpop.permute.xlu0 %1332
        %v1335 = vsel %vm1164, %v1327, 0
        %v1338 = vsel %vm1164, %v1329, 0
        %v1341 = vsel %vm1164, %v1331, 0
        %v1344 = vsel %vm1164, %v1333, 0
        %1346 = vmatprep.subr.bf16.mxu0 0
        %1347 = vmatpush1.bf16.xpose.msra.mxu0 %v1341
        %1348 = vmatprep.subr.bf16.mxu0 0
        %1349 = vmatpush1.bf16.xpose.msra.mxu0 %v1344
        %1350 = vmatprep.subr.bf16.mxu0 0
        %1351 = vmatpush1.bf16.xpose.msra.mxu0 0
        %1352 = vmatprep.subr.bf16.mxu0 0
        %1353 = vmatpush1.bf16.xpose.msra.mxu0 0
        %1354 = vmatprep.subr.bf16.mxu0 0
        %1355 = vmatpush1.bf16.xpose.msra.mxu0 0
        %1356 = vmatprep.subr.bf16.mxu0 0
        %1357 = vmatpush1.bf16.xpose.msra.mxu0 0
        %1358 = vmatprep.subr.bf16.mxu0 0
        %1359 = vmatpush1.bf16.xpose.msra.mxu0 0
        %1360 = vmatprep.subr.bf16.mxu0 0
        %1361 = vmatpush1.bf16.xpose.msra.mxu0 0
        %1362 = vmatprep.subr.bf16.mxu0 0
        %1363 = vmatpush1.bf16.xpose.msra.mxu0 0
        %1364 = vmatprep.subr.bf16.mxu0 0
        %1365 = vmatpush1.bf16.xpose.msra.mxu0 0
        %1366 = vmatprep.subr.bf16.mxu0 0
        %1367 = vmatpush1.bf16.xpose.msra.mxu0 0
        %1368 = vmatprep.subr.bf16.mxu0 0
        %1369 = vmatpush1.bf16.xpose.msra.mxu0 0
        %1370 = vmatprep.subr.bf16.mxu0 0
        %1371 = vmatpush1.bf16.xpose.msra.mxu0 0
        %1372 = vmatprep.subr.bf16.mxu0 0
        %1373 = vmatpush1.bf16.xpose.msra.mxu0 0
        %1374 = vmatprep.subr.bf16.mxu0 0
        %1375 = vmatpush1.bf16.xpose.msra.mxu0 0
        %1376 = vmatprep.subr.bf16.mxu0 0
        %1377 = vmatpush1.bf16.xpose.msra.mxu0 0
        %1378 = vmatprep.mubr.bf16.mxu0 0
        %1379 = vmatmul.mubr.bf16.gmra.mrb[0].mxu0 %v1335
        %v1380 = vpop.f32.mrb[0].mxu0
        %v1381 = vadd.f32 0.0, %v1380
        %v1382 = vpop.f32.mrb[0].mxu0
        %v1383 = vpop.f32.mrb[0].mxu0
        %v1384 = vadd.f32 0.0, %v1383
        %v1385 = vpop.f32.mrb[0].mxu0
        %1386 = vmatprep.mubr.bf16.mxu0 0
        %1387 = vmatmul.mubr.bf16.gmra.mrb[0].mxu0 %v1338
        %v1388 = vpop.f32.mrb[0].mxu0
        %v1389 = vadd.f32 0.0, %v1388
        %v1390 = vpop.f32.mrb[0].mxu0
        %v1391 = vpop.f32.mrb[0].mxu0
        %v1392 = vpop.f32.mrb[0].mxu0
        %1393 = vdwg.mxu0
        %v1394 = vmul.f32 %v1381, 0.25
        %v1395 = vmul.f32 %v1384, 0.25
        %v1396 = vmul.f32 %v1389, 0.25
        %v1397 = vsel %vm1228, %v1394, -inf
        %1398 = vmax.xlane.f32.xlu0 %v1397
        %v1399 = vpop.xlane.xlu0 %1398
        %v1400 = vsel %vm1228, %v1395, -inf
        %1401 = vmax.xlane.f32.xlu0 %v1400
        %v1402 = vpop.xlane.xlu0 %1401
        %v1403 = vsel %vm1228, %v1396, -inf
        %1404 = vmax.xlane.f32.xlu0 %v1403
        %v1405 = vpop.xlane.xlu0 %1404
        %v1406 = vsub.f32 %v1394, %v1399
        %v1407 = vsub.f32 %v1395, %v1402
        %v1408 = vsub.f32 %v1396, %v1405
        %v1409 = vmul.f32 %v1406, 1.442695
        %v1410 = vpow.pop %v1409
        %v1411 = vmul.f32 %v1407, 1.442695
        %v1412 = vpow.pop %v1411
        %v1413 = vmul.f32 %v1408, 1.442695
        %v1414 = vpow.pop %v1413
        %v1415 = vsel %vm1228, %v1410, 0.0
        %1416 = vadd.xlane.f32.xlu0 %v1415
        %v1417 = vpop.xlane.xlu0 %1416
        %v1418 = vsel %vm1228, %v1412, 0.0
        %1419 = vadd.xlane.f32.xlu0 %v1418
        %v1420 = vpop.xlane.xlu0 %1419
        %v1421 = vsel %vm1228, %v1414, 0.0
        %1422 = vadd.xlane.f32.xlu0 %v1421
        %v1423 = vpop.xlane.xlu0 %1422
        %v1424 = vrcp.pop %v1417
        %v1425 = vrcp.pop %v1420
        %v1426 = vrcp.pop %v1423
        %v1427 = vmul.f32 %v1410, %v1424
        %v1428 = vmul.f32 %v1412, %v1425
        %v1429 = vmul.f32 %v1414, %v1426
        %v1430 = vpack.c.bf16 %v1428, %v1427
        %v1431 = vpack.c.bf16 %v1429, %v1429
        %1434 = vrot.lane.b32.xlu0 %v1156, 112
        %v1435 = vpop.permute.xlu0 %1434
        %1436 = vrot.lane.b32.xlu0 %v1157, 112
        %v1437 = vpop.permute.xlu0 %1436
        %v1440 = vsel %vm1228, %v1430, 0
        %v1443 = vsel %vm1228, %v1431, 0
        %v1446 = vand.u32 %v1437, %v1272
        %1448 = vmatprep.subr.bf16.mxu0 0
        %1449 = vmatpush1.bf16.msra.mxu0 %v1435
        %1450 = vmatprep.subr.bf16.mxu0 0
        %1451 = vmatpush1.bf16.msra.mxu0 %v1446
        %1452 = vmatprep.subr.bf16.mxu0 0
        %1453 = vmatpush1.bf16.msra.mxu0 0
        %1454 = vmatprep.subr.bf16.mxu0 0
        %1455 = vmatpush1.bf16.msra.mxu0 0
        %1456 = vmatprep.subr.bf16.mxu0 0
        %1457 = vmatpush1.bf16.msra.mxu0 0
        %1458 = vmatprep.subr.bf16.mxu0 0
        %1459 = vmatpush1.bf16.msra.mxu0 0
        %1460 = vmatprep.subr.bf16.mxu0 0
        %1461 = vmatpush1.bf16.msra.mxu0 0
        %1462 = vmatprep.subr.bf16.mxu0 0
        %1463 = vmatpush1.bf16.msra.mxu0 0
        %1464 = vmatprep.subr.bf16.mxu0 0
        %1465 = vmatpush1.bf16.msra.mxu0 0
        %1466 = vmatprep.subr.bf16.mxu0 0
        %1467 = vmatpush1.bf16.msra.mxu0 0
        %1468 = vmatprep.subr.bf16.mxu0 0
        %1469 = vmatpush1.bf16.msra.mxu0 0
        %1470 = vmatprep.subr.bf16.mxu0 0
        %1471 = vmatpush1.bf16.msra.mxu0 0
        %1472 = vmatprep.subr.bf16.mxu0 0
        %1473 = vmatpush1.bf16.msra.mxu0 0
        %1474 = vmatprep.subr.bf16.mxu0 0
        %1475 = vmatpush1.bf16.msra.mxu0 0
        %1476 = vmatprep.subr.bf16.mxu0 0
        %1477 = vmatpush1.bf16.msra.mxu0 0
        %1478 = vmatprep.subr.bf16.mxu0 0
        %1479 = vmatpush1.bf16.msra.mxu0 0
        %1480 = vmatprep.mubr.bf16.mxu0 0
        %1481 = vmatmul.mubr.bf16.gmra.mrb[0].mxu0 %v1440
        %v1482 = vpop.f32.mrb[0].mxu0
        %v1483 = vadd.f32 0.0, %v1482
        %v1484 = vpop.f32.mrb[0].mxu0
        %v1485 = vpop.f32.mrb[0].mxu0
        %v1486 = vadd.f32 0.0, %v1485
        %v1487 = vpop.f32.mrb[0].mxu0
        %1488 = vmatprep.mubr.bf16.mxu0 0
        %1489 = vmatmul.mubr.bf16.gmra.mrb[0].mxu0 %v1443
        %v1490 = vpop.f32.mrb[0].mxu0
        %v1491 = vadd.f32 0.0, %v1490
        %v1492 = vpop.f32.mrb[0].mxu0
        %v1493 = vpop.f32.mrb[0].mxu0
        %v1494 = vpop.f32.mrb[0].mxu0
        %1495 = vdwg.mxu0
        %v1496 = vpack.c.bf16 %v1486, %v1483
        %v1497 = vpack.c.bf16 %v1491, %v1491
        %v1500 = vunpack.c.l.b16 %v1148
        %v1501 = vunpack.c.l.b16 %v1149
        %v1502 = vpack.c.b16 %v1501, %v1500
        %v1505 = vsel %vm1164, %v1496, 0
        %v1508 = vsel %vm1164, %v1497, 0
        %1510 = vmatprep.subr.bf16.mxu0 0
        %1511 = vmatpush1.bf16.msra.mxu0 %v1502
        %1512 = vmatprep.subr.bf16.mxu0 0
        %1513 = vmatpush1.bf16.msra.mxu0 0
        %1514 = vmatprep.subr.bf16.mxu0 0
        %1515 = vmatpush1.bf16.msra.mxu0 0
        %1516 = vmatprep.subr.bf16.mxu0 0
        %1517 = vmatpush1.bf16.msra.mxu0 0
        %1518 = vmatprep.subr.bf16.mxu0 0
        %1519 = vmatpush1.bf16.msra.mxu0 0
        %1520 = vmatprep.subr.bf16.mxu0 0
        %1521 = vmatpush1.bf16.msra.mxu0 0
        %1522 = vmatprep.subr.bf16.mxu0 0
        %1523 = vmatpush1.bf16.msra.mxu0 0
        %1524 = vmatprep.subr.bf16.mxu0 0
        %1525 = vmatpush1.bf16.msra.mxu0 0
        %1526 = vmatprep.subr.bf16.mxu0 0
        %1527 = vmatpush1.bf16.msra.mxu0 0
        %1528 = vmatprep.subr.bf16.mxu0 0
        %1529 = vmatpush1.bf16.msra.mxu0 0
        %1530 = vmatprep.subr.bf16.mxu0 0
        %1531 = vmatpush1.bf16.msra.mxu0 0
        %1532 = vmatprep.subr.bf16.mxu0 0
        %1533 = vmatpush1.bf16.msra.mxu0 0
        %1534 = vmatprep.subr.bf16.mxu0 0
        %1535 = vmatpush1.bf16.msra.mxu0 0
        %1536 = vmatprep.subr.bf16.mxu0 0
        %1537 = vmatpush1.bf16.msra.mxu0 0
        %1538 = vmatprep.subr.bf16.mxu0 0
        %1539 = vmatpush1.bf16.msra.mxu0 0
        %1540 = vmatprep.subr.bf16.mxu0 0
        %1541 = vmatpush1.bf16.msra.mxu0 0
        %1542 = vmatprep.mubr.bf16.mxu0 0
        %1543 = vmatmul.mubr.bf16.gmra.mrb[0].mxu0 %v1505
        %v1544 = vpop.f32.mrb[0].mxu0
        %v1545 = vadd.f32 0.0, %v1544
        %v1546 = vpop.f32.mrb[0].mxu0
        %v1547 = vpop.f32.mrb[0].mxu0
        %v1548 = vadd.f32 0.0, %v1547
        %v1549 = vpop.f32.mrb[0].mxu0
        %1550 = vmatprep.mubr.bf16.mxu0 0
        %1551 = vmatmul.mubr.bf16.gmra.mrb[0].mxu0 %v1508
        %v1552 = vpop.f32.mrb[0].mxu0
        %v1553 = vadd.f32 0.0, %v1552
        %v1554 = vpop.f32.mrb[0].mxu0
        %v1555 = vpop.f32.mrb[0].mxu0
        %v1556 = vpop.f32.mrb[0].mxu0
        %1557 = vdwg.mxu0
        %v1560 = vunpack.c.l.b16 %v1146
        %v1561 = vunpack.c.l.b16 %v1147
        %v1562 = vpack.c.b16 %v1561, %v1560
        %v1565 = vsel %vm1164, %v1324, 0
        %v1568 = vsel %vm1164, %v1325, 0
        %1570 = vmatprep.subr.bf16.mxu0 0
        %1571 = vmatpush1.bf16.msra.mxu0 %v1562
        %1572 = vmatprep.subr.bf16.mxu0 0
        %1573 = vmatpush1.bf16.msra.mxu0 0
        %1574 = vmatprep.subr.bf16.mxu0 0
        %1575 = vmatpush1.bf16.msra.mxu0 0
        %1576 = vmatprep.subr.bf16.mxu0 0
        %1577 = vmatpush1.bf16.msra.mxu0 0
        %1578 = vmatprep.subr.bf16.mxu0 0
        %1579 = vmatpush1.bf16.msra.mxu0 0
        %1580 = vmatprep.subr.bf16.mxu0 0
        %1581 = vmatpush1.bf16.msra.mxu0 0
        %1582 = vmatprep.subr.bf16.mxu0 0
        %1583 = vmatpush1.bf16.msra.mxu0 0
        %1584 = vmatprep.subr.bf16.mxu0 0
        %1585 = vmatpush1.bf16.msra.mxu0 0
        %1586 = vmatprep.subr.bf16.mxu0 0
        %1587 = vmatpush1.bf16.msra.mxu0 0
        %1588 = vmatprep.subr.bf16.mxu0 0
        %1589 = vmatpush1.bf16.msra.mxu0 0
        %1590 = vmatprep.subr.bf16.mxu0 0
        %1591 = vmatpush1.bf16.msra.mxu0 0
        %1592 = vmatprep.subr.bf16.mxu0 0
        %1593 = vmatpush1.bf16.msra.mxu0 0
        %1594 = vmatprep.subr.bf16.mxu0 0
        %1595 = vmatpush1.bf16.msra.mxu0 0
        %1596 = vmatprep.subr.bf16.mxu0 0
        %1597 = vmatpush1.bf16.msra.mxu0 0
        %1598 = vmatprep.subr.bf16.mxu0 0
        %1599 = vmatpush1.bf16.msra.mxu0 0
        %1600 = vmatprep.subr.bf16.mxu0 0
        %1601 = vmatpush1.bf16.msra.mxu0 0
        %1602 = vmatprep.mubr.bf16.mxu0 0
        %1603 = vmatmul.mubr.bf16.gmra.mrb[0].mxu0 %v1565
        %v1604 = vpop.f32.mrb[0].mxu0
        %v1605 = vadd.f32 %v1545, %v1604
        %v1606 = vpop.f32.mrb[0].mxu0
        %v1607 = vpop.f32.mrb[0].mxu0
        %v1608 = vadd.f32 %v1548, %v1607
        %v1609 = vpop.f32.mrb[0].mxu0
        %1610 = vmatprep.mubr.bf16.mxu0 0
        %1611 = vmatmul.mubr.bf16.gmra.mrb[0].mxu0 %v1568
        %v1612 = vpop.f32.mrb[0].mxu0
        %v1613 = vadd.f32 %v1553, %v1612
        %v1614 = vpop.f32.mrb[0].mxu0
        %v1615 = vpop.f32.mrb[0].mxu0
        %v1616 = vpop.f32.mrb[0].mxu0
        %1617 = vdwg.mxu0
        %1618 = vrot.lane.b32.xlu0 %v1154, 96
        %v1619 = vpop.permute.xlu0 %1618
        %1620 = vrot.lane.b32.xlu0 %v1155, 96
        %v1621 = vpop.permute.xlu0 %1620
        %1622 = vrot.lane.b32.xlu0 %v1154, 32
        %v1623 = vpop.permute.xlu0 %1622
        %1624 = vrot.lane.b32.xlu0 %v1155, 32
        %v1625 = vpop.permute.xlu0 %1624
        %v1627 = vsel %vm1164, %v1619, 0
        %v1630 = vsel %vm1164, %v1621, 0
        %v1633 = vsel %vm1164, %v1623, 0
        %v1636 = vsel %vm1164, %v1625, 0
        %1638 = vmatprep.subr.bf16.mxu0 0
        %1639 = vmatpush1.bf16.xpose.msra.mxu0 %v1633
        %1640 = vmatprep.subr.bf16.mxu0 0
        %1641 = vmatpush1.bf16.xpose.msra.mxu0 %v1636
        %1642 = vmatprep.subr.bf16.mxu0 0
        %1643 = vmatpush1.bf16.xpose.msra.mxu0 0
        %1644 = vmatprep.subr.bf16.mxu0 0
        %1645 = vmatpush1.bf16.xpose.msra.mxu0 0
        %1646 = vmatprep.subr.bf16.mxu0 0
        %1647 = vmatpush1.bf16.xpose.msra.mxu0 0
        %1648 = vmatprep.subr.bf16.mxu0 0
        %1649 = vmatpush1.bf16.xpose.msra.mxu0 0
        %1650 = vmatprep.subr.bf16.mxu0 0
        %1651 = vmatpush1.bf16.xpose.msra.mxu0 0
        %1652 = vmatprep.subr.bf16.mxu0 0
        %1653 = vmatpush1.bf16.xpose.msra.mxu0 0
        %1654 = vmatprep.subr.bf16.mxu0 0
        %1655 = vmatpush1.bf16.xpose.msra.mxu0 0
        %1656 = vmatprep.subr.bf16.mxu0 0
        %1657 = vmatpush1.bf16.xpose.msra.mxu0 0
        %1658 = vmatprep.subr.bf16.mxu0 0
        %1659 = vmatpush1.bf16.xpose.msra.mxu0 0
        %1660 = vmatprep.subr.bf16.mxu0 0
        %1661 = vmatpush1.bf16.xpose.msra.mxu0 0
        %1662 = vmatprep.subr.bf16.mxu0 0
        %1663 = vmatpush1.bf16.xpose.msra.mxu0 0
        %1664 = vmatprep.subr.bf16.mxu0 0
        %1665 = vmatpush1.bf16.xpose.msra.mxu0 0
        %1666 = vmatprep.subr.bf16.mxu0 0
        %1667 = vmatpush1.bf16.xpose.msra.mxu0 0
        %1668 = vmatprep.subr.bf16.mxu0 0
        %1669 = vmatpush1.bf16.xpose.msra.mxu0 0
        %1670 = vmatprep.mubr.bf16.mxu0 0
        %1671 = vmatmul.mubr.bf16.gmra.mrb[0].mxu0 %v1627
        %v1672 = vpop.f32.mrb[0].mxu0
        %v1673 = vadd.f32 0.0, %v1672
        %v1674 = vpop.f32.mrb[0].mxu0
        %v1675 = vpop.f32.mrb[0].mxu0
        %v1676 = vadd.f32 0.0, %v1675
        %v1677 = vpop.f32.mrb[0].mxu0
        %1678 = vmatprep.mubr.bf16.mxu0 0
        %1679 = vmatmul.mubr.bf16.gmra.mrb[0].mxu0 %v1630
        %v1680 = vpop.f32.mrb[0].mxu0
        %v1681 = vadd.f32 0.0, %v1680
        %v1682 = vpop.f32.mrb[0].mxu0
        %v1683 = vpop.f32.mrb[0].mxu0
        %v1684 = vpop.f32.mrb[0].mxu0
        %1685 = vdwg.mxu0
        %v1686 = vmul.f32 %v1673, 0.25
        %v1687 = vmul.f32 %v1676, 0.25
        %v1688 = vmul.f32 %v1681, 0.25
        %v1689 = vsel %vm1228, %v1686, -inf
        %1690 = vmax.xlane.f32.xlu0 %v1689
        %v1691 = vpop.xlane.xlu0 %1690
        %v1692 = vsel %vm1228, %v1687, -inf
        %1693 = vmax.xlane.f32.xlu0 %v1692
        %v1694 = vpop.xlane.xlu0 %1693
        %v1695 = vsel %vm1228, %v1688, -inf
        %1696 = vmax.xlane.f32.xlu0 %v1695
        %v1697 = vpop.xlane.xlu0 %1696
        %v1698 = vsub.f32 %v1686, %v1691
        %v1699 = vsub.f32 %v1687, %v1694
        %v1700 = vsub.f32 %v1688, %v1697
        %v1701 = vmul.f32 %v1698, 1.442695
        %v1702 = vpow.pop %v1701
        %v1703 = vmul.f32 %v1699, 1.442695
        %v1704 = vpow.pop %v1703
        %v1705 = vmul.f32 %v1700, 1.442695
        %v1706 = vpow.pop %v1705
        %v1707 = vsel %vm1228, %v1702, 0.0
        %1708 = vadd.xlane.f32.xlu0 %v1707
        %v1709 = vpop.xlane.xlu0 %1708
        %v1710 = vsel %vm1228, %v1704, 0.0
        %1711 = vadd.xlane.f32.xlu0 %v1710
        %v1712 = vpop.xlane.xlu0 %1711
        %v1713 = vsel %vm1228, %v1706, 0.0
        %1714 = vadd.xlane.f32.xlu0 %v1713
        %v1715 = vpop.xlane.xlu0 %1714
        %v1716 = vrcp.pop %v1709
        %v1717 = vrcp.pop %v1712
        %v1718 = vrcp.pop %v1715
        %v1719 = vmul.f32 %v1702, %v1716
        %v1720 = vmul.f32 %v1704, %v1717
        %v1721 = vmul.f32 %v1706, %v1718
        %v1722 = vpack.c.bf16 %v1720, %v1719
        %v1723 = vpack.c.bf16 %v1721, %v1721
        %1724 = vrot.lane.b32.xlu0 %v1156, 96
        %v1725 = vpop.permute.xlu0 %1724
        %1726 = vrot.lane.b32.xlu0 %v1157, 96
        %v1727 = vpop.permute.xlu0 %1726
        %v1730 = vsel %vm1228, %v1722, 0
        %v1733 = vsel %vm1228, %v1723, 0
        %v1736 = vand.u32 %v1727, %v1272
        %1738 = vmatprep.subr.bf16.mxu0 0
        %1739 = vmatpush1.bf16.msra.mxu0 %v1725
        %1740 = vmatprep.subr.bf16.mxu0 0
        %1741 = vmatpush1.bf16.msra.mxu0 %v1736
        %1742 = vmatprep.subr.bf16.mxu0 0
        %1743 = vmatpush1.bf16.msra.mxu0 0
        %1744 = vmatprep.subr.bf16.mxu0 0
        %1745 = vmatpush1.bf16.msra.mxu0 0
        %1746 = vmatprep.subr.bf16.mxu0 0
        %1747 = vmatpush1.bf16.msra.mxu0 0
        %1748 = vmatprep.subr.bf16.mxu0 0
        %1749 = vmatpush1.bf16.msra.mxu0 0
        %1750 = vmatprep.subr.bf16.mxu0 0
        %1751 = vmatpush1.bf16.msra.mxu0 0
        %1752 = vmatprep.subr.bf16.mxu0 0
        %1753 = vmatpush1.bf16.msra.mxu0 0
        %1754 = vmatprep.subr.bf16.mxu0 0
        %1755 = vmatpush1.bf16.msra.mxu0 0
        %1756 = vmatprep.subr.bf16.mxu0 0
        %1757 = vmatpush1.bf16.msra.mxu0 0
        %1758 = vmatprep.subr.bf16.mxu0 0
        %1759 = vmatpush1.bf16.msra.mxu0 0
        %1760 = vmatprep.subr.bf16.mxu0 0
        %1761 = vmatpush1.bf16.msra.mxu0 0
        %1762 = vmatprep.subr.bf16.mxu0 0
        %1763 = vmatpush1.bf16.msra.mxu0 0
        %1764 = vmatprep.subr.bf16.mxu0 0
        %1765 = vmatpush1.bf16.msra.mxu0 0
        %1766 = vmatprep.subr.bf16.mxu0 0
        %1767 = vmatpush1.bf16.msra.mxu0 0
        %1768 = vmatprep.subr.bf16.mxu0 0
        %1769 = vmatpush1.bf16.msra.mxu0 0
        %1770 = vmatprep.mubr.bf16.mxu0 0
        %1771 = vmatmul.mubr.bf16.gmra.mrb[0].mxu0 %v1730
        %v1772 = vpop.f32.mrb[0].mxu0
        %v1773 = vadd.f32 0.0, %v1772
        %v1774 = vpop.f32.mrb[0].mxu0
        %v1775 = vpop.f32.mrb[0].mxu0
        %v1776 = vadd.f32 0.0, %v1775
        %v1777 = vpop.f32.mrb[0].mxu0
        %1778 = vmatprep.mubr.bf16.mxu0 0
        %1779 = vmatmul.mubr.bf16.gmra.mrb[0].mxu0 %v1733
        %v1780 = vpop.f32.mrb[0].mxu0
        %v1781 = vadd.f32 0.0, %v1780
        %v1782 = vpop.f32.mrb[0].mxu0
        %v1783 = vpop.f32.mrb[0].mxu0
        %v1784 = vpop.f32.mrb[0].mxu0
        %1785 = vdwg.mxu0
        %v1786 = vpack.c.bf16 %v1776, %v1773
        %v1787 = vpack.c.bf16 %v1781, %v1781
        %v1790 = vunpack.c.l.b16 %v1150
        %v1791 = vunpack.c.l.b16 %v1151
        %v1792 = vpack.c.b16 %v1791, %v1790
        %v1795 = vsel %vm1164, %v1786, 0
        %v1798 = vsel %vm1164, %v1787, 0
        %1800 = vmatprep.subr.bf16.mxu0 0
        %1801 = vmatpush1.bf16.msra.mxu0 %v1792
        %1802 = vmatprep.subr.bf16.mxu0 0
        %1803 = vmatpush1.bf16.msra.mxu0 0
        %1804 = vmatprep.subr.bf16.mxu0 0
        %1805 = vmatpush1.bf16.msra.mxu0 0
        %1806 = vmatprep.subr.bf16.mxu0 0
        %1807 = vmatpush1.bf16.msra.mxu0 0
        %1808 = vmatprep.subr.bf16.mxu0 0
        %1809 = vmatpush1.bf16.msra.mxu0 0
        %1810 = vmatprep.subr.bf16.mxu0 0
        %1811 = vmatpush1.bf16.msra.mxu0 0
        %1812 = vmatprep.subr.bf16.mxu0 0
        %1813 = vmatpush1.bf16.msra.mxu0 0
        %1814 = vmatprep.subr.bf16.mxu0 0
        %1815 = vmatpush1.bf16.msra.mxu0 0
        %1816 = vmatprep.subr.bf16.mxu0 0
        %1817 = vmatpush1.bf16.msra.mxu0 0
        %1818 = vmatprep.subr.bf16.mxu0 0
        %1819 = vmatpush1.bf16.msra.mxu0 0
        %1820 = vmatprep.subr.bf16.mxu0 0
        %1821 = vmatpush1.bf16.msra.mxu0 0
        %1822 = vmatprep.subr.bf16.mxu0 0
        %1823 = vmatpush1.bf16.msra.mxu0 0
        %1824 = vmatprep.subr.bf16.mxu0 0
        %1825 = vmatpush1.bf16.msra.mxu0 0
        %1826 = vmatprep.subr.bf16.mxu0 0
        %1827 = vmatpush1.bf16.msra.mxu0 0
        %1828 = vmatprep.subr.bf16.mxu0 0
        %1829 = vmatpush1.bf16.msra.mxu0 0
        %1830 = vmatprep.subr.bf16.mxu0 0
        %1831 = vmatpush1.bf16.msra.mxu0 0
        %1832 = vmatprep.mubr.bf16.mxu0 0
        %1833 = vmatmul.mubr.bf16.gmra.mrb[0].mxu0 %v1795
        %v1834 = vpop.f32.mrb[0].mxu0
        %v1835 = vadd.f32 0.0, %v1834
        %v1836 = vpop.f32.mrb[0].mxu0
        %v1837 = vpop.f32.mrb[0].mxu0
        %v1838 = vadd.f32 0.0, %v1837
        %v1839 = vpop.f32.mrb[0].mxu0
        %1840 = vmatprep.mubr.bf16.mxu0 0
        %1841 = vmatmul.mubr.bf16.gmra.mrb[0].mxu0 %v1798
        %v1842 = vpop.f32.mrb[0].mxu0
        %v1843 = vadd.f32 0.0, %v1842
        %v1844 = vpop.f32.mrb[0].mxu0
        %v1845 = vpop.f32.mrb[0].mxu0
        %v1846 = vpop.f32.mrb[0].mxu0
        %1847 = vdwg.mxu0
        %v1848 = vadd.f32 %v1605, %v1835
        %v1849 = vadd.f32 %v1608, %v1838
        %v1850 = vadd.f32 %v1613, %v1843
        %1851 = vrot.lane.b32.xlu0 %v1154, 80
        %v1852 = vpop.permute.xlu0 %1851
        %1853 = vrot.lane.b32.xlu0 %v1155, 80
        %v1854 = vpop.permute.xlu0 %1853
        %1855 = vrot.lane.b32.xlu0 %v1154, 16
        %v1856 = vpop.permute.xlu0 %1855
        %1857 = vrot.lane.b32.xlu0 %v1155, 16
        %v1858 = vpop.permute.xlu0 %1857
        %v1860 = vsel %vm1164, %v1852, 0
        %v1863 = vsel %vm1164, %v1854, 0
        %v1866 = vsel %vm1164, %v1856, 0
        %v1869 = vsel %vm1164, %v1858, 0
        %1871 = vmatprep.subr.bf16.mxu0 0
        %1872 = vmatpush1.bf16.xpose.msra.mxu0 %v1866
        %1873 = vmatprep.subr.bf16.mxu0 0
        %1874 = vmatpush1.bf16.xpose.msra.mxu0 %v1869
        %1875 = vmatprep.subr.bf16.mxu0 0
        %1876 = vmatpush1.bf16.xpose.msra.mxu0 0
        %1877 = vmatprep.subr.bf16.mxu0 0
        %1878 = vmatpush1.bf16.xpose.msra.mxu0 0
        %1879 = vmatprep.subr.bf16.mxu0 0
        %1880 = vmatpush1.bf16.xpose.msra.mxu0 0
        %1881 = vmatprep.subr.bf16.mxu0 0
        %1882 = vmatpush1.bf16.xpose.msra.mxu0 0
        %1883 = vmatprep.subr.bf16.mxu0 0
        %1884 = vmatpush1.bf16.xpose.msra.mxu0 0
        %1885 = vmatprep.subr.bf16.mxu0 0
        %1886 = vmatpush1.bf16.xpose.msra.mxu0 0
        %1887 = vmatprep.subr.bf16.mxu0 0
        %1888 = vmatpush1.bf16.xpose.msra.mxu0 0
        %1889 = vmatprep.subr.bf16.mxu0 0
        %1890 = vmatpush1.bf16.xpose.msra.mxu0 0
        %1891 = vmatprep.subr.bf16.mxu0 0
        %1892 = vmatpush1.bf16.xpose.msra.mxu0 0
        %1893 = vmatprep.subr.bf16.mxu0 0
        %1894 = vmatpush1.bf16.xpose.msra.mxu0 0
        %1895 = vmatprep.subr.bf16.mxu0 0
        %1896 = vmatpush1.bf16.xpose.msra.mxu0 0
        %1897 = vmatprep.subr.bf16.mxu0 0
        %1898 = vmatpush1.bf16.xpose.msra.mxu0 0
        %1899 = vmatprep.subr.bf16.mxu0 0
        %1900 = vmatpush1.bf16.xpose.msra.mxu0 0
        %1901 = vmatprep.subr.bf16.mxu0 0
        %1902 = vmatpush1.bf16.xpose.msra.mxu0 0
        %1903 = vmatprep.mubr.bf16.mxu0 0
        %1904 = vmatmul.mubr.bf16.gmra.mrb[0].mxu0 %v1860
        %v1905 = vpop.f32.mrb[0].mxu0
        %v1906 = vadd.f32 0.0, %v1905
        %v1907 = vpop.f32.mrb[0].mxu0
        %v1908 = vpop.f32.mrb[0].mxu0
        %v1909 = vadd.f32 0.0, %v1908
        %v1910 = vpop.f32.mrb[0].mxu0
        %1911 = vmatprep.mubr.bf16.mxu0 0
        %1912 = vmatmul.mubr.bf16.gmra.mrb[0].mxu0 %v1863
        %v1913 = vpop.f32.mrb[0].mxu0
        %v1914 = vadd.f32 0.0, %v1913
        %v1915 = vpop.f32.mrb[0].mxu0
        %v1916 = vpop.f32.mrb[0].mxu0
        %v1917 = vpop.f32.mrb[0].mxu0
        %1918 = vdwg.mxu0
        %v1919 = vmul.f32 %v1906, 0.25
        %v1920 = vmul.f32 %v1909, 0.25
        %v1921 = vmul.f32 %v1914, 0.25
        %v1922 = vsel %vm1228, %v1919, -inf
        %1923 = vmax.xlane.f32.xlu0 %v1922
        %v1924 = vpop.xlane.xlu0 %1923
        %v1925 = vsel %vm1228, %v1920, -inf
        %1926 = vmax.xlane.f32.xlu0 %v1925
        %v1927 = vpop.xlane.xlu0 %1926
        %v1928 = vsel %vm1228, %v1921, -inf
        %1929 = vmax.xlane.f32.xlu0 %v1928
        %v1930 = vpop.xlane.xlu0 %1929
        %v1931 = vsub.f32 %v1919, %v1924
        %v1932 = vsub.f32 %v1920, %v1927
        %v1933 = vsub.f32 %v1921, %v1930
        %v1934 = vmul.f32 %v1931, 1.442695
        %v1935 = vpow.pop %v1934
        %v1936 = vmul.f32 %v1932, 1.442695
        %v1937 = vpow.pop %v1936
        %v1938 = vmul.f32 %v1933, 1.442695
        %v1939 = vpow.pop %v1938
        %v1940 = vsel %vm1228, %v1935, 0.0
        %1941 = vadd.xlane.f32.xlu0 %v1940
        %v1942 = vpop.xlane.xlu0 %1941
        %v1943 = vsel %vm1228, %v1937, 0.0
        %1944 = vadd.xlane.f32.xlu0 %v1943
        %v1945 = vpop.xlane.xlu0 %1944
        %v1946 = vsel %vm1228, %v1939, 0.0
        %1947 = vadd.xlane.f32.xlu0 %v1946
        %v1948 = vpop.xlane.xlu0 %1947
        %v1949 = vrcp.pop %v1942
        %v1950 = vrcp.pop %v1945
        %v1951 = vrcp.pop %v1948
        %v1952 = vmul.f32 %v1935, %v1949
        %v1953 = vmul.f32 %v1937, %v1950
        %v1954 = vmul.f32 %v1939, %v1951
        %v1955 = vpack.c.bf16 %v1953, %v1952
        %v1956 = vpack.c.bf16 %v1954, %v1954
        %1957 = vrot.lane.b32.xlu0 %v1156, 80
        %v1958 = vpop.permute.xlu0 %1957
        %1959 = vrot.lane.b32.xlu0 %v1157, 80
        %v1960 = vpop.permute.xlu0 %1959
        %v1963 = vsel %vm1228, %v1955, 0
        %v1966 = vsel %vm1228, %v1956, 0
        %v1969 = vand.u32 %v1960, %v1272
        %1971 = vmatprep.subr.bf16.mxu0 0
        %1972 = vmatpush1.bf16.msra.mxu0 %v1958
        %1973 = vmatprep.subr.bf16.mxu0 0
        %1974 = vmatpush1.bf16.msra.mxu0 %v1969
        %1975 = vmatprep.subr.bf16.mxu0 0
        %1976 = vmatpush1.bf16.msra.mxu0 0
        %1977 = vmatprep.subr.bf16.mxu0 0
        %1978 = vmatpush1.bf16.msra.mxu0 0
        %1979 = vmatprep.subr.bf16.mxu0 0
        %1980 = vmatpush1.bf16.msra.mxu0 0
        %1981 = vmatprep.subr.bf16.mxu0 0
        %1982 = vmatpush1.bf16.msra.mxu0 0
        %1983 = vmatprep.subr.bf16.mxu0 0
        %1984 = vmatpush1.bf16.msra.mxu0 0
        %1985 = vmatprep.subr.bf16.mxu0 0
        %1986 = vmatpush1.bf16.msra.mxu0 0
        %1987 = vmatprep.subr.bf16.mxu0 0
        %1988 = vmatpush1.bf16.msra.mxu0 0
        %1989 = vmatprep.subr.bf16.mxu0 0
        %1990 = vmatpush1.bf16.msra.mxu0 0
        %1991 = vmatprep.subr.bf16.mxu0 0
        %1992 = vmatpush1.bf16.msra.mxu0 0
        %1993 = vmatprep.subr.bf16.mxu0 0
        %1994 = vmatpush1.bf16.msra.mxu0 0
        %1995 = vmatprep.subr.bf16.mxu0 0
        %1996 = vmatpush1.bf16.msra.mxu0 0
        %1997 = vmatprep.subr.bf16.mxu0 0
        %1998 = vmatpush1.bf16.msra.mxu0 0
        %1999 = vmatprep.subr.bf16.mxu0 0
        %2000 = vmatpush1.bf16.msra.mxu0 0
        %2001 = vmatprep.subr.bf16.mxu0 0
        %2002 = vmatpush1.bf16.msra.mxu0 0
        %2003 = vmatprep.mubr.bf16.mxu0 0
        %2004 = vmatmul.mubr.bf16.gmra.mrb[0].mxu0 %v1963
        %v2005 = vpop.f32.mrb[0].mxu0
        %v2006 = vadd.f32 0.0, %v2005
        %v2007 = vpop.f32.mrb[0].mxu0
        %v2008 = vpop.f32.mrb[0].mxu0
        %v2009 = vadd.f32 0.0, %v2008
        %v2010 = vpop.f32.mrb[0].mxu0
        %2011 = vmatprep.mubr.bf16.mxu0 0
        %2012 = vmatmul.mubr.bf16.gmra.mrb[0].mxu0 %v1966
        %v2013 = vpop.f32.mrb[0].mxu0
        %v2014 = vadd.f32 0.0, %v2013
        %v2015 = vpop.f32.mrb[0].mxu0
        %v2016 = vpop.f32.mrb[0].mxu0
        %v2017 = vpop.f32.mrb[0].mxu0
        %2018 = vdwg.mxu0
        %v2019 = vpack.c.bf16 %v2009, %v2006
        %v2020 = vpack.c.bf16 %v2014, %v2014
        %v2023 = vunpack.c.l.b16 %v1152
        %v2024 = vunpack.c.l.b16 %v1153
        %v2025 = vpack.c.b16 %v2024, %v2023
        %v2028 = vsel %vm1164, %v2019, 0
        %v2031 = vsel %vm1164, %v2020, 0
        %2033 = vmatprep.subr.bf16.mxu0 0
        %2034 = vmatpush1.bf16.msra.mxu0 %v2025
        %2035 = vmatprep.subr.bf16.mxu0 0
        %2036 = vmatpush1.bf16.msra.mxu0 0
        %2037 = vmatprep.subr.bf16.mxu0 0
        %2038 = vmatpush1.bf16.msra.mxu0 0
        %2039 = vmatprep.subr.bf16.mxu0 0
        %2040 = vmatpush1.bf16.msra.mxu0 0
        %2041 = vmatprep.subr.bf16.mxu0 0
        %2042 = vmatpush1.bf16.msra.mxu0 0
        %2043 = vmatprep.subr.bf16.mxu0 0
        %2044 = vmatpush1.bf16.msra.mxu0 0
        %2045 = vmatprep.subr.bf16.mxu0 0
        %2046 = vmatpush1.bf16.msra.mxu0 0
        %2047 = vmatprep.subr.bf16.mxu0 0
        %2048 = vmatpush1.bf16.msra.mxu0 0
        %2049 = vmatprep.subr.bf16.mxu0 0
        %2050 = vmatpush1.bf16.msra.mxu0 0
        %2051 = vmatprep.subr.bf16.mxu0 0
        %2052 = vmatpush1.bf16.msra.mxu0 0
        %2053 = vmatprep.subr.bf16.mxu0 0
        %2054 = vmatpush1.bf16.msra.mxu0 0
        %2055 = vmatprep.subr.bf16.mxu0 0
        %2056 = vmatpush1.bf16.msra.mxu0 0
        %2057 = vmatprep.subr.bf16.mxu0 0
        %2058 = vmatpush1.bf16.msra.mxu0 0
        %2059 = vmatprep.subr.bf16.mxu0 0
        %2060 = vmatpush1.bf16.msra.mxu0 0
        %2061 = vmatprep.subr.bf16.mxu0 0
        %2062 = vmatpush1.bf16.msra.mxu0 0
        %2063 = vmatprep.subr.bf16.mxu0 0
        %2064 = vmatpush1.bf16.msra.mxu0 0
        %2065 = vmatprep.mubr.bf16.mxu0 0
        %2066 = vmatmul.mubr.bf16.gmra.mrb[0].mxu0 %v2028
        %v2067 = vpop.f32.mrb[0].mxu0
        %v2068 = vadd.f32 0.0, %v2067
        %v2069 = vpop.f32.mrb[0].mxu0
        %v2070 = vpop.f32.mrb[0].mxu0
        %v2071 = vadd.f32 0.0, %v2070
        %v2072 = vpop.f32.mrb[0].mxu0
        %2073 = vmatprep.mubr.bf16.mxu0 0
        %2074 = vmatmul.mubr.bf16.gmra.mrb[0].mxu0 %v2031
        %v2075 = vpop.f32.mrb[0].mxu0
        %v2076 = vadd.f32 0.0, %v2075
        %v2077 = vpop.f32.mrb[0].mxu0
        %v2078 = vpop.f32.mrb[0].mxu0
        %v2079 = vpop.f32.mrb[0].mxu0
        %2080 = vdwg.mxu0
        %v2081 = vadd.f32 %v1848, %v2068
        %v2082 = vadd.f32 %v1849, %v2071
        %v2083 = vadd.f32 %v1850, %v2076
        %v2084 = vadd.f32 %v963, %v2081
        %v2085 = vadd.f32 %v964, %v2082
        %v2086 = vadd.f32 %v965, %v2083
        %v2087 = vld [vmem:[%s840] sm:$0x1]
        %v2089 = vlaneseq
        %v2090 = vshrl.u32 %v2089, 7
        %v2091 = vsub.s32 0, %v2090
        %v2092 = vrot.slane %v2087, %v2091
        %v2094 = vadd.f32 %v2084, %v2092
        %v2095 = vadd.f32 %v2085, %v2092
        %v2096 = vadd.f32 %v2086, %v2092
        %v2097 = vld [vmem:[%s843] sm:$0x1]
        %v2098 = vld [vmem:[%s846] sm:$0x1]
        %v2099 = vsel %vm968, %v2094, 0.0
        %2100 = vadd.xlane.f32.xlu0 %v2099
        %v2101 = vpop.xlane.xlu0 %2100
        %v2102 = vsel %vm968, %v2095, 0.0
        %2103 = vadd.xlane.f32.xlu0 %v2102
        %v2104 = vpop.xlane.xlu0 %2103
        %v2105 = vsel %vm968, %v2096, 0.0
        %2106 = vadd.xlane.f32.xlu0 %v2105
        %v2107 = vpop.xlane.xlu0 %2106
        %v2108 = vmul.f32 %v2101, %v978
        %v2109 = vmul.f32 %v2104, %v978
        %v2110 = vmul.f32 %v2107, %v978
        %v2111 = vsub.f32 %v2094, %v2108
        %v2112 = vsub.f32 %v2095, %v2109
        %v2113 = vsub.f32 %v2096, %v2110
        %v2114 = vmul.f32 %v2111, %v2111
        %v2115 = vmul.f32 %v2112, %v2112
        %v2116 = vmul.f32 %v2113, %v2113
        %v2117 = vsel %vm968, %v2114, 0.0
        %2118 = vadd.xlane.f32.xlu0 %v2117
        %v2119 = vpop.xlane.xlu0 %2118
        %v2120 = vsel %vm968, %v2115, 0.0
        %2121 = vadd.xlane.f32.xlu0 %v2120
        %v2122 = vpop.xlane.xlu0 %2121
        %v2123 = vsel %vm968, %v2116, 0.0
        %2124 = vadd.xlane.f32.xlu0 %v2123
        %v2125 = vpop.xlane.xlu0 %2124
        %v2126 = vmul.f32 %v2119, %v978
        %v2127 = vmul.f32 %v2122, %v978
        %v2128 = vmul.f32 %v2125, %v978
        %v2129 = vadd.f32 %v2126, 1e-05
        %v2130 = vadd.f32 %v2127, 1e-05
        %v2131 = vadd.f32 %v2128, 1e-05
        %v2132 = vrsqrt.pop %v2129
        %v2133 = vrsqrt.pop %v2130
        %v2134 = vrsqrt.pop %v2131
        %v2135 = vmul.f32 %v2111, %v2132
        %v2136 = vmul.f32 %v2112, %v2133
        %v2137 = vmul.f32 %v2113, %v2134
        %v2139 = vlaneseq
        %v2140 = vshrl.u32 %v2139, 7
        %v2141 = vsub.s32 0, %v2140
        %v2142 = vrot.slane %v2097, %v2141
        %v2144 = vmul.f32 %v2135, %v2142
        %v2145 = vmul.f32 %v2136, %v2142
        %v2146 = vmul.f32 %v2137, %v2142
        %v2148 = vlaneseq
        %v2149 = vshrl.u32 %v2148, 7
        %v2150 = vsub.s32 0, %v2149
        %v2151 = vrot.slane %v2098, %v2150
        %v2153 = vadd.f32 %v2144, %v2151
        %v2154 = vadd.f32 %v2145, %v2151
        %v2155 = vadd.f32 %v2146, %v2151
        %v2156 = vpack.c.bf16 %v2154, %v2153
        %v2157 = vpack.c.bf16 %v2155, %v2155
        %v2158 = vld [vmem:[%s851] sm:$0xff]
        %v2159 = vld [vmem:[%s851 + $0x8] sm:$0xff]
        %v2160 = vld [vmem:[%s851 + $0x10] sm:$0xff]
        %v2161 = vld [vmem:[%s851 + $0x18] sm:$0xff]
        %v2162 = vld [vmem:[%s851 + $0x20] sm:$0xff]
        %v2163 = vld [vmem:[%s851 + $0x28] sm:$0xff]
        %v2164 = vld [vmem:[%s851 + $0x30] sm:$0xff]
        %v2165 = vld [vmem:[%s851 + $0x38] sm:$0xff]
        %v2166 = vld [vmem:[%s855] sm:$0x3]
        %v2168 = vlaneseq
        %v2169 = vshrl.u32 %v2168, 7
        %v2170 = vsub.s32 0, %v2169
        %v2171 = vrot.slane %v2166, %v2170
        %v2172 = vlaneseq
        %v2173 = vshrl.u32 %v2172, 7
        %v2174 = vsub.s32 1, %v2173
        %v2175 = vrot.slane %v2166, %v2174
        %v2186 = vunpack.c.l.b16 %v2158
        %v2187 = vunpack.c.h.b16 %v2158
        %v2188 = vunpack.c.l.b16 %v2159
        %v2189 = vunpack.c.h.b16 %v2159
        %v2190 = vunpack.c.l.b16 %v2160
        %v2191 = vunpack.c.h.b16 %v2160
        %v2192 = vunpack.c.l.b16 %v2161
        %v2193 = vunpack.c.h.b16 %v2161
        %v2194 = vunpack.c.l.b16 %v2162
        %v2195 = vunpack.c.h.b16 %v2162
        %v2196 = vunpack.c.l.b16 %v2163
        %v2197 = vunpack.c.h.b16 %v2163
        %v2198 = vunpack.c.l.b16 %v2164
        %v2199 = vunpack.c.h.b16 %v2164
        %v2200 = vunpack.c.l.b16 %v2165
        %v2201 = vunpack.c.h.b16 %v2165
        %v2202 = vpack.c.b16 %v2188, %v2186
        %v2203 = vpack.c.b16 %v2189, %v2187
        %v2204 = vpack.c.b16 %v2192, %v2190
        %v2205 = vpack.c.b16 %v2193, %v2191
        %v2206 = vpack.c.b16 %v2196, %v2194
        %v2207 = vpack.c.b16 %v2197, %v2195
        %v2208 = vpack.c.b16 %v2200, %v2198
        %v2209 = vpack.c.b16 %v2201, %v2199
        %v2219 = vsel %vm968, %v2156, 0
        %v2222 = vsel %vm968, %v2157, 0
        %2224 = vmatprep.subr.bf16.mxu0 %v2203
        %2225 = vmatpush1.bf16.msra.mxu0 %v2202
        %2226 = vmatprep.subr.bf16.mxu0 %v2205
        %2227 = vmatpush1.bf16.msra.mxu0 %v2204
        %2228 = vmatprep.subr.bf16.mxu0 %v2207
        %2229 = vmatpush1.bf16.msra.mxu0 %v2206
        %2230 = vmatprep.subr.bf16.mxu0 %v2209
        %2231 = vmatpush1.bf16.msra.mxu0 %v2208
        %2232 = vmatprep.subr.bf16.mxu0 0
        %2233 = vmatpush1.bf16.msra.mxu0 0
        %2234 = vmatprep.subr.bf16.mxu0 0
        %2235 = vmatpush1.bf16.msra.mxu0 0
        %2236 = vmatprep.subr.bf16.mxu0 0
        %2237 = vmatpush1.bf16.msra.mxu0 0
        %2238 = vmatprep.subr.bf16.mxu0 0
        %2239 = vmatpush1.bf16.msra.mxu0 0
        %2240 = vmatprep.subr.bf16.mxu0 0
        %2241 = vmatpush1.bf16.msra.mxu0 0
        %2242 = vmatprep.subr.bf16.mxu0 0
        %2243 = vmatpush1.bf16.msra.mxu0 0
        %2244 = vmatprep.subr.bf16.mxu0 0
        %2245 = vmatpush1.bf16.msra.mxu0 0
        %2246 = vmatprep.subr.bf16.mxu0 0
        %2247 = vmatpush1.bf16.msra.mxu0 0
        %2248 = vmatprep.subr.bf16.mxu0 0
        %2249 = vmatpush1.bf16.msra.mxu0 0
        %2250 = vmatprep.subr.bf16.mxu0 0
        %2251 = vmatpush1.bf16.msra.mxu0 0
        %2252 = vmatprep.subr.bf16.mxu0 0
        %2253 = vmatpush1.bf16.msra.mxu0 0
        %2254 = vmatprep.subr.bf16.mxu0 0
        %2255 = vmatpush1.bf16.msra.mxu0 0
        %2256 = vmatprep.mubr.bf16.mxu0 0
        %2257 = vmatmul.mubr.bf16.gmra.mrb[0].mxu0 %v2219
        %v2258 = vpop.f32.mrb[0].mxu0
        %v2259 = vadd.f32 %v2171, %v2258
        %v2260 = vpop.f32.mrb[0].mxu0
        %v2261 = vadd.f32 %v2175, %v2260
        %v2262 = vpop.f32.mrb[0].mxu0
        %v2263 = vadd.f32 %v2171, %v2262
        %v2264 = vpop.f32.mrb[0].mxu0
        %v2265 = vadd.f32 %v2175, %v2264
        %2266 = vmatprep.mubr.bf16.mxu0 0
        %2267 = vmatmul.mubr.bf16.gmra.mrb[0].mxu0 %v2222
        %v2268 = vpop.f32.mrb[0].mxu0
        %v2269 = vadd.f32 %v2171, %v2268
        %v2270 = vpop.f32.mrb[0].mxu0
        %v2271 = vadd.f32 %v2175, %v2270
        %v2272 = vpop.f32.mrb[0].mxu0
        %v2273 = vpop.f32.mrb[0].mxu0
        %2274 = vdwg.mxu0
        %v2275 = vmul.f32 %v2259, %v2259
        %v2276 = vmul.f32 %v2261, %v2261
        %v2277 = vmul.f32 %v2263, %v2263
        %v2278 = vmul.f32 %v2265, %v2265
        %v2279 = vmul.f32 %v2269, %v2269
        %v2280 = vmul.f32 %v2271, %v2271
        %v2281 = vmul.f32 %v2259, %v2275
        %v2282 = vmul.f32 %v2261, %v2276
        %v2283 = vmul.f32 %v2263, %v2277
        %v2284 = vmul.f32 %v2265, %v2278
        %v2285 = vmul.f32 %v2269, %v2279
        %v2286 = vmul.f32 %v2271, %v2280
        %v2287 = vmul.f32 %v2281, 0.044715
        %v2288 = vmul.f32 %v2282, 0.044715
        %v2289 = vmul.f32 %v2283, 0.044715
        %v2290 = vmul.f32 %v2284, 0.044715
        %v2291 = vmul.f32 %v2285, 0.044715
        %v2292 = vmul.f32 %v2286, 0.044715
        %v2293 = vadd.f32 %v2259, %v2287
        %v2294 = vadd.f32 %v2261, %v2288
        %v2295 = vadd.f32 %v2263, %v2289
        %v2296 = vadd.f32 %v2265, %v2290
        %v2297 = vadd.f32 %v2269, %v2291
        %v2298 = vadd.f32 %v2271, %v2292
        %v2299 = vmul.f32 %v2293, 0.7978846
        %v2300 = vmul.f32 %v2294, 0.7978846
        %v2301 = vmul.f32 %v2295, 0.7978846
        %v2302 = vmul.f32 %v2296, 0.7978846
        %v2303 = vmul.f32 %v2297, 0.7978846
        %v2304 = vmul.f32 %v2298, 0.7978846
        %v2305 = vtanh.pop %v2299
        %v2306 = vtanh.pop %v2300
        %v2307 = vtanh.pop %v2301
        %v2308 = vtanh.pop %v2302
        %v2309 = vtanh.pop %v2303
        %v2310 = vtanh.pop %v2304
        %v2311 = vadd.f32 %v2305, 1.0
        %v2312 = vadd.f32 %v2306, 1.0
        %v2313 = vadd.f32 %v2307, 1.0
        %v2314 = vadd.f32 %v2308, 1.0
        %v2315 = vadd.f32 %v2309, 1.0
        %v2316 = vadd.f32 %v2310, 1.0
        %v2317 = vmul.f32 %v2311, 0.5
        %v2318 = vmul.f32 %v2312, 0.5
        %v2319 = vmul.f32 %v2313, 0.5
        %v2320 = vmul.f32 %v2314, 0.5
        %v2321 = vmul.f32 %v2315, 0.5
        %v2322 = vmul.f32 %v2316, 0.5
        %v2323 = vmul.f32 %v2259, %v2317
        %v2324 = vmul.f32 %v2261, %v2318
        %v2325 = vmul.f32 %v2263, %v2319
        %v2326 = vmul.f32 %v2265, %v2320
        %v2327 = vmul.f32 %v2269, %v2321
        %v2328 = vmul.f32 %v2271, %v2322
        %v2329 = vpack.c.bf16 %v2325, %v2323
        %v2330 = vpack.c.bf16 %v2326, %v2324
        %v2331 = vpack.c.bf16 %v2327, %v2327
        %v2332 = vpack.c.bf16 %v2328, %v2328
        %v2333 = vld [vmem:[%s860] sm:$0xf]
        %v2334 = vld [vmem:[%s860 + $0x4] sm:$0xf]
        %v2335 = vld [vmem:[%s860 + $0x8] sm:$0xf]
        %v2336 = vld [vmem:[%s860 + $0xc] sm:$0xf]
        %v2337 = vld [vmem:[%s860 + $0x10] sm:$0xf]
        %v2338 = vld [vmem:[%s860 + $0x14] sm:$0xf]
        %v2339 = vld [vmem:[%s860 + $0x18] sm:$0xf]
        %v2340 = vld [vmem:[%s860 + $0x1c] sm:$0xf]
        %v2341 = vld [vmem:[%s860 + $0x20] sm:$0xf]
        %v2342 = vld [vmem:[%s860 + $0x24] sm:$0xf]
        %v2343 = vld [vmem:[%s860 + $0x28] sm:$0xf]
        %v2344 = vld [vmem:[%s860 + $0x2c] sm:$0xf]
        %v2345 = vld [vmem:[%s860 + $0x30] sm:$0xf]
        %v2346 = vld [vmem:[%s860 + $0x34] sm:$0xf]
        %v2347 = vld [vmem:[%s860 + $0x38] sm:$0xf]
        %v2348 = vld [vmem:[%s860 + $0x3c] sm:$0xf]
        %v2349 = vld [vmem:[%s860 + $0x40] sm:$0xf]
        %v2350 = vld [vmem:[%s860 + $0x44] sm:$0xf]
        %v2351 = vld [vmem:[%s860 + $0x48] sm:$0xf]
        %v2352 = vld [vmem:[%s860 + $0x4c] sm:$0xf]
        %v2353 = vld [vmem:[%s860 + $0x50] sm:$0xf]
        %v2354 = vld [vmem:[%s860 + $0x54] sm:$0xf]
        %v2355 = vld [vmem:[%s860 + $0x58] sm:$0xf]
        %v2356 = vld [vmem:[%s860 + $0x5c] sm:$0xf]
        %v2357 = vld [vmem:[%s860 + $0x60] sm:$0xf]
        %v2358 = vld [vmem:[%s860 + $0x64] sm:$0xf]
        %v2359 = vld [vmem:[%s860 + $0x68] sm:$0xf]
        %v2360 = vld [vmem:[%s860 + $0x6c] sm:$0xf]
        %v2361 = vld [vmem:[%s860 + $0x70] sm:$0xf]
        %v2362 = vld [vmem:[%s860 + $0x74] sm:$0xf]
        %v2363 = vld [vmem:[%s860 + $0x78] sm:$0xf]
        %v2364 = vld [vmem:[%s860 + $0x7c] sm:$0xf]
        %v2365 = vld [vmem:[%s863] sm:$0x1]
        %v2367 = vlaneseq
        %v2368 = vshrl.u32 %v2367, 7
        %v2369 = vsub.s32 0, %v2368
        %v2370 = vrot.slane %v2365, %v2369
        %v2404 = vunpack.c.l.b16 %v2333
        %v2405 = vunpack.c.l.b16 %v2334
        %v2406 = vunpack.c.l.b16 %v2335
        %v2407 = vunpack.c.l.b16 %v2336
        %v2408 = vunpack.c.l.b16 %v2337
        %v2409 = vunpack.c.l.b16 %v2338
        %v2410 = vunpack.c.l.b16 %v2339
        %v2411 = vunpack.c.l.b16 %v2340
        %v2412 = vunpack.c.l.b16 %v2341
        %v2413 = vunpack.c.l.b16 %v2342
        %v2414 = vunpack.c.l.b16 %v2343
        %v2415 = vunpack.c.l.b16 %v2344
        %v2416 = vunpack.c.l.b16 %v2345
        %v2417 = vunpack.c.l.b16 %v2346
        %v2418 = vunpack.c.l.b16 %v2347
        %v2419 = vunpack.c.l.b16 %v2348
        %v2420 = vunpack.c.l.b16 %v2349
        %v2421 = vunpack.c.l.b16 %v2350
        %v2422 = vunpack.c.l.b16 %v2351
        %v2423 = vunpack.c.l.b16 %v2352
        %v2424 = vunpack.c.l.b16 %v2353
        %v2425 = vunpack.c.l.b16 %v2354
        %v2426 = vunpack.c.l.b16 %v2355
        %v2427 = vunpack.c.l.b16 %v2356
        %v2428 = vunpack.c.l.b16 %v2357
        %v2429 = vunpack.c.l.b16 %v2358
        %v2430 = vunpack.c.l.b16 %v2359
        %v2431 = vunpack.c.l.b16 %v2360
        %v2432 = vunpack.c.l.b16 %v2361
        %v2433 = vunpack.c.l.b16 %v2362
        %v2434 = vunpack.c.l.b16 %v2363
        %v2435 = vunpack.c.l.b16 %v2364
        %v2436 = vpack.c.b16 %v2405, %v2404
        %v2437 = vpack.c.b16 %v2407, %v2406
        %v2438 = vpack.c.b16 %v2409, %v2408
        %v2439 = vpack.c.b16 %v2411, %v2410
        %v2440 = vpack.c.b16 %v2413, %v2412
        %v2441 = vpack.c.b16 %v2415, %v2414
        %v2442 = vpack.c.b16 %v2417, %v2416
        %v2443 = vpack.c.b16 %v2419, %v2418
        %v2444 = vpack.c.b16 %v2421, %v2420
        %v2445 = vpack.c.b16 %v2423, %v2422
        %v2446 = vpack.c.b16 %v2425, %v2424
        %v2447 = vpack.c.b16 %v2427, %v2426
        %v2448 = vpack.c.b16 %v2429, %v2428
        %v2449 = vpack.c.b16 %v2431, %v2430
        %v2450 = vpack.c.b16 %v2433, %v2432
        %v2451 = vpack.c.b16 %v2435, %v2434
        %2468 = vmatprep.subr.bf16.mxu0 0
        %2469 = vmatpush1.bf16.msra.mxu0 %v2436
        %2470 = vmatprep.subr.bf16.mxu0 0
        %2471 = vmatpush1.bf16.msra.mxu0 %v2437
        %2472 = vmatprep.subr.bf16.mxu0 0
        %2473 = vmatpush1.bf16.msra.mxu0 %v2438
        %2474 = vmatprep.subr.bf16.mxu0 0
        %2475 = vmatpush1.bf16.msra.mxu0 %v2439
        %2476 = vmatprep.subr.bf16.mxu0 0
        %2477 = vmatpush1.bf16.msra.mxu0 %v2440
        %2478 = vmatprep.subr.bf16.mxu0 0
        %2479 = vmatpush1.bf16.msra.mxu0 %v2441
        %2480 = vmatprep.subr.bf16.mxu0 0
        %2481 = vmatpush1.bf16.msra.mxu0 %v2442
        %2482 = vmatprep.subr.bf16.mxu0 0
        %2483 = vmatpush1.bf16.msra.mxu0 %v2443
        %2484 = vmatprep.subr.bf16.mxu0 0
        %2485 = vmatpush1.bf16.msra.mxu0 %v2444
        %2486 = vmatprep.subr.bf16.mxu0 0
        %2487 = vmatpush1.bf16.msra.mxu0 %v2445
        %2488 = vmatprep.subr.bf16.mxu0 0
        %2489 = vmatpush1.bf16.msra.mxu0 %v2446
        %2490 = vmatprep.subr.bf16.mxu0 0
        %2491 = vmatpush1.bf16.msra.mxu0 %v2447
        %2492 = vmatprep.subr.bf16.mxu0 0
        %2493 = vmatpush1.bf16.msra.mxu0 %v2448
        %2494 = vmatprep.subr.bf16.mxu0 0
        %2495 = vmatpush1.bf16.msra.mxu0 %v2449
        %2496 = vmatprep.subr.bf16.mxu0 0
        %2497 = vmatpush1.bf16.msra.mxu0 %v2450
        %2498 = vmatprep.subr.bf16.mxu0 0
        %2499 = vmatpush1.bf16.msra.mxu0 %v2451
        %2500 = vmatprep.mubr.bf16.mxu0 %v2330
        %2501 = vmatmul.mubr.bf16.gmra.mrb[0].mxu0 %v2329
        %v2502 = vpop.f32.mrb[0].mxu0
        %v2503 = vadd.f32 %v2370, %v2502
        %v2504 = vpop.f32.mrb[0].mxu0
        %v2505 = vpop.f32.mrb[0].mxu0
        %v2506 = vadd.f32 %v2370, %v2505
        %v2507 = vpop.f32.mrb[0].mxu0
        %2508 = vmatprep.mubr.bf16.mxu0 %v2332
        %2509 = vmatmul.mubr.bf16.gmra.mrb[0].mxu0 %v2331
        %v2510 = vpop.f32.mrb[0].mxu0
        %v2511 = vadd.f32 %v2370, %v2510
        %v2512 = vpop.f32.mrb[0].mxu0
        %v2513 = vpop.f32.mrb[0].mxu0
        %v2514 = vpop.f32.mrb[0].mxu0
        %2515 = vdwg.mxu0
        %v2516 = vadd.f32 %v2094, %v2503
        %v2517 = vadd.f32 %v2095, %v2506
        %v2518 = vadd.f32 %v2096, %v2511
        %2519 = vst.msk [vmem:[#allocation2] sm:$0xff] %vm968, %v2516
        %2520 = vst.msk [vmem:[#allocation2 + $0x8] sm:$0xff] %vm968, %v2517
        %2521 = vst.msk [vmem:[#allocation2 + $0x10] sm:$0xff] %vm968, %v2518
        %p2522 = scmp.eq.s32.totalorder %s40, 1
        // Predicated region
        $region109: #{forward.1} parent=103 // pred_check
          %p2523 = pneg %p2522
        $region110: #{forward.1} parent=103 // pred_check_branch
          %2525 = sbr.rel (%p2523) target = $region112
        $region111: #{forward.1} parent=103 // pred_region
          %v2526 = vld [vmem:[%s15] sm:$0x1]
          %v2527 = vld [vmem:[%s16] sm:$0x1]
          %v2528 = vsel %vm968, %v2516, 0.0
          %2529 = vadd.xlane.f32.xlu0 %v2528
          %v2530 = vpop.xlane.xlu0 %2529
          %v2531 = vsel %vm968, %v2517, 0.0
          %2532 = vadd.xlane.f32.xlu0 %v2531
          %v2533 = vpop.xlane.xlu0 %2532
          %v2534 = vsel %vm968, %v2518, 0.0
          %2535 = vadd.xlane.f32.xlu0 %v2534
          %v2536 = vpop.xlane.xlu0 %2535
          %v2537 = vmul.f32 %v2530, %v978
          %v2538 = vmul.f32 %v2533, %v978
          %v2539 = vmul.f32 %v2536, %v978
          %v2540 = vsub.f32 %v2516, %v2537
          %v2541 = vsub.f32 %v2517, %v2538
          %v2542 = vsub.f32 %v2518, %v2539
          %v2543 = vmul.f32 %v2540, %v2540
          %v2544 = vmul.f32 %v2541, %v2541
          %v2545 = vmul.f32 %v2542, %v2542
          %v2546 = vsel %vm968, %v2543, 0.0
          %2547 = vadd.xlane.f32.xlu0 %v2546
          %v2548 = vpop.xlane.xlu0 %2547
          %v2549 = vsel %vm968, %v2544, 0.0
          %2550 = vadd.xlane.f32.xlu0 %v2549
          %v2551 = vpop.xlane.xlu0 %2550
          %v2552 = vsel %vm968, %v2545, 0.0
          %2553 = vadd.xlane.f32.xlu0 %v2552
          %v2554 = vpop.xlane.xlu0 %2553
          %v2555 = vmul.f32 %v2548, %v978
          %v2556 = vmul.f32 %v2551, %v978
          %v2557 = vmul.f32 %v2554, %v978
          %v2558 = vadd.f32 %v2555, 1e-05
          %v2559 = vadd.f32 %v2556, 1e-05
          %v2560 = vadd.f32 %v2557, 1e-05
          %v2561 = vrsqrt.pop %v2558
          %v2562 = vrsqrt.pop %v2559
          %v2563 = vrsqrt.pop %v2560
          %v2564 = vmul.f32 %v2540, %v2561
          %v2565 = vmul.f32 %v2541, %v2562
          %v2566 = vmul.f32 %v2542, %v2563
          %v2568 = vlaneseq
          %v2569 = vshrl.u32 %v2568, 7
          %v2570 = vsub.s32 0, %v2569
          %v2571 = vrot.slane %v2526, %v2570
          %v2573 = vmul.f32 %v2564, %v2571
          %v2574 = vmul.f32 %v2565, %v2571
          %v2575 = vmul.f32 %v2566, %v2571
          %v2577 = vlaneseq
          %v2578 = vshrl.u32 %v2577, 7
          %v2579 = vsub.s32 0, %v2578
          %v2580 = vrot.slane %v2527, %v2579
          %v2582 = vadd.f32 %v2573, %v2580
          %v2583 = vadd.f32 %v2574, %v2580
          %v2584 = vadd.f32 %v2575, %v2580
          %v2585 = vsel %vm968, %v2582, 0.0
          %v2586 = vsel %vm968, %v2583, 0.0
          %v2587 = vadd.f32 %v2585, %v2586
          %vm2588 = vcmask 516096
          %v2589 = vsel %vm2588, %v2584, 0.0
          %v2590 = vadd.f32 %v2587, %v2589
          %v2591 = vrot.slane %v2590, 4
          %v2592 = vadd.f32 %v2590, %v2591
          %v2593 = vrot.slane %v2592, 2
          %v2594 = vadd.f32 %v2592, %v2593
          %v2595 = vrot.slane %v2594, 1
          %v2596 = vadd.f32 %v2594, %v2595
          %v2597 = vrcp.pop 17.0
          %v2598 = vmul.f32 %v2596, %v2597
          %v2599 = vld [vmem:[%s17] sm:$0x1]
          %v2600 = vld [vmem:[%s18] sm:$0x1]
          %v2601 = vsel %vm968, %v2598, 0.0
          %2602 = vadd.xlane.f32.xlu0 %v2601
          %v2603 = vpop.xlane.xlu0 %2602
          %v2604 = vmul.f32 %v2603, %v978
          %v2605 = vsub.f32 %v2598, %v2604
          %v2606 = vmul.f32 %v2605, %v2605
          %v2607 = vsel %vm968, %v2606, 0.0
          %2608 = vadd.xlane.f32.xlu0 %v2607
          %v2609 = vpop.xlane.xlu0 %2608
          %v2610 = vmul.f32 %v2609, %v978
          %v2611 = vadd.f32 %v2610, 1e-05
          %v2612 = vrsqrt.pop %v2611
          %v2613 = vmul.f32 %v2605, %v2612
          %v2614 = vmul.f32 %v2613, %v2599
          %v2615 = vadd.f32 %v2614, %v2600
          %v2616 = vpack.c.bf16 %v2615, %v2615
          %v2617 = vld [vmem:[%s19] sm:$0xf]
          %v2618 = vld [vmem:[%s19 + $0x4] sm:$0xf]
          %v2619 = vld [vmem:[%s19 + $0x8] sm:$0xf]
          %v2620 = vld [vmem:[%s19 + $0xc] sm:$0xf]
          %v2621 = vld [vmem:[%s19 + $0x10] sm:$0xf]
          %v2622 = vld [vmem:[%s19 + $0x14] sm:$0xf]
          %v2623 = vld [vmem:[%s19 + $0x18] sm:$0xf]
          %v2624 = vld [vmem:[%s19 + $0x1c] sm:$0xf]
          %v2625 = vld [vmem:[%s20] sm:$0x1]
          %v2634 = vunpack.c.l.b16 %v2617
          %v2635 = vunpack.c.l.b16 %v2618
          %v2636 = vunpack.c.l.b16 %v2619
          %v2637 = vunpack.c.l.b16 %v2620
          %v2638 = vunpack.c.l.b16 %v2621
          %v2639 = vunpack.c.l.b16 %v2622
          %v2640 = vunpack.c.l.b16 %v2623
          %v2641 = vunpack.c.l.b16 %v2624
          %v2642 = vpack.c.b16 %v2635, %v2634
          %v2643 = vpack.c.b16 %v2637, %v2636
          %v2644 = vpack.c.b16 %v2639, %v2638
          %v2645 = vpack.c.b16 %v2641, %v2640
          %v2651 = vsel %vm968, %v2616, 0
          %2653 = vmatprep.subr.bf16.mxu0 0
          %2654 = vmatpush1.bf16.msra.mxu0 %v2642
          %2655 = vmatprep.subr.bf16.mxu0 0
          %2656 = vmatpush1.bf16.msra.mxu0 %v2643
          %2657 = vmatprep.subr.bf16.mxu0 0
          %2658 = vmatpush1.bf16.msra.mxu0 %v2644
          %2659 = vmatprep.subr.bf16.mxu0 0
          %2660 = vmatpush1.bf16.msra.mxu0 %v2645
          %2661 = vmatprep.subr.bf16.mxu0 0
          %2662 = vmatpush1.bf16.msra.mxu0 0
          %2663 = vmatprep.subr.bf16.mxu0 0
          %2664 = vmatpush1.bf16.msra.mxu0 0
          %2665 = vmatprep.subr.bf16.mxu0 0
          %2666 = vmatpush1.bf16.msra.mxu0 0
          %2667 = vmatprep.subr.bf16.mxu0 0
          %2668 = vmatpush1.bf16.msra.mxu0 0
          %2669 = vmatprep.subr.bf16.mxu0 0
          %2670 = vmatpush1.bf16.msra.mxu0 0
          %2671 = vmatprep.subr.bf16.mxu0 0
          %2672 = vmatpush1.bf16.msra.mxu0 0
          %2673 = vmatprep.subr.bf16.mxu0 0
          %2674 = vmatpush1.bf16.msra.mxu0 0
          %2675 = vmatprep.subr.bf16.mxu0 0
          %2676 = vmatpush1.bf16.msra.mxu0 0
          %2677 = vmatprep.subr.bf16.mxu0 0
          %2678 = vmatpush1.bf16.msra.mxu0 0
          %2679 = vmatprep.subr.bf16.mxu0 0
          %2680 = vmatpush1.bf16.msra.mxu0 0
          %2681 = vmatprep.subr.bf16.mxu0 0
          %2682 = vmatpush1.bf16.msra.mxu0 0
          %2683 = vmatprep.subr.bf16.mxu0 0
          %2684 = vmatpush1.bf16.msra.mxu0 0
          %2685 = vmatprep.mubr.bf16.mxu0 0
          %2686 = vmatmul.mubr.bf16.gmra.mrb[0].mxu0 %v2651
          %v2687 = vpop.f32.mrb[0].mxu0
          %v2688 = vadd.f32 %v2625, %v2687
          %v2689 = vpop.f32.mrb[0].mxu0
          %v2690 = vpop.f32.mrb[0].mxu0
          %v2691 = vpop.f32.mrb[0].mxu0
          %2692 = vdwg.mxu0
          %vm2693 = vcmask 8192
          %2694 = vst.msk [vmem:[%s812] sm:$0x1] %vm2693, %v2688
        $region112: #{forward.1} parent=103 // pred_fallthru
          _
        %s2695 = sand.u32 %s561, 1
        %s2696 = scalar_lea.sflag [#allocation4], %s2695
        %s2697 = sand.u32 %s561, 1
        %s2698 = scalar_lea.vmem [#allocation3], %s2697
        // Predicated region
        $region113: #{forward.1} parent=103 // pred_check
          %p2699 = pneg %p571
        $region114: #{forward.1} parent=103 // pred_check_branch
          %2701 = sbr.rel (%p2699) target = $region116
        $region115: #{forward.1} parent=103 // pred_region
          %s2703 = ssub.s32 16, 16
          %2704 = vsyncadd %s2696, %s2703
          %s2705 = smul.addr %s39, 16
          %s2706 = scalar_lea.hbm %s21, %s2705
          %s2708 = sshll.u32 %s2698, 4
          %s2709 = int_to_ptr.vmem [resolvable:$true] %s2708
          %2711 = dma.vmem_to_hbm [thread:$0]  %s2709, 16, %s2706, %s2696
        $region116: #{forward.1} parent=103 // pred_fallthru
          _
      $region104: #{forward.1} parent=5 // pred_fallthru
        _
      %p2712 = scmp.le.s32.totalorder 2, %s30
      // Predicated region
      $region117: #{forward.1} parent=5 // pred_check
        %p2713 = pneg %p2712
      $region118: #{forward.1} parent=5 // pred_check_branch
        %2715 = sbr.rel (%p2713) target = $region120
      $region119: #{forward.1} parent=5 // pred_region
        %s2716 = ssub.s32 %s30, 2
        // Predicated region
        $region121: #{forward.1} parent=119 // pred_check
          %p2717 = pneg %p577
        $region122: #{forward.1} parent=119 // pred_check_branch
          %2719 = sbr.rel (%p2717) target = $region124
        $region123: #{forward.1} parent=119 // pred_region
          %s2720 = sand.u32 %s562, 1
          %s2721 = scalar_lea.sflag [#allocation4], %s2720
          %s2722 = sand.u32 %s562, 1
          %s2723 = scalar_lea.vmem [#allocation3], %s2722
          %2724 = dma.done %s2721, 16
        $region124: #{forward.1} parent=119 // pred_fallthru
          _
      $region120: #{forward.1} parent=5 // pred_fallthru
        _
    $region6: #{forward.1} parent=1 // loop_footer
      %s34 = sadd.s32 1, %s30
    $region7: #{forward.1} parent=1 // loop_footer_branch
      %29 = sbr.rel target = $region3
    $region8: #{forward.1} parent=1 // loop_exit
      _
    %2725 = vsyncpa [#allocation4], 1
    %s2726 = scalar_lea.sflag [#allocation4], 1
    %2727 = vsyncpa %s2726, 1

</llo_original>
